<compile_context>
chip_gen: v7x
topology: tpu7x:2x2x1
jax: 0.10.0
libtpu: 0.0.40
codegen_flags: <defaults>
</compile_context>

<pallas_src>
import jax
import jax.numpy as jnp
from jax.experimental import pallas as pl
from jax.experimental.pallas import tpu as pltpu

_BN_EPS = 1e-5


def _bn_relu_rows(y, g, beta, ones_r):
    """Training-mode BatchNorm + ReLU over R = B*N rows (conv blocks), y f32 (R, C).

    Column sums are offloaded to the MXU via ones(1,R) matvecs so the BN epilogue
    does not saturate the VALU slot on v6e/v7x (on v5e the MXU is the ceiling and
    this is free filler either way).  One-pass variance is clamped at 0.
    """
    inv_r = 1.0 / y.shape[0]
    s = jnp.dot(ones_r, y, preferred_element_type=jnp.float32)          # (1, C)
    ss = jnp.dot(ones_r, y * y, preferred_element_type=jnp.float32)     # (1, C)
    mu = s * inv_r
    var = jnp.maximum(ss * inv_r - mu * mu, 0.0)                        # biased, clamped
    a = g * jax.lax.rsqrt(var + _BN_EPS)
    c = beta - mu * a
    return jnp.maximum(y * a + c, 0.0).astype(jnp.bfloat16)


def _bn_relu_small(y, g, beta):
    """Training-mode BatchNorm + ReLU over R = B rows (FC blocks): exact centered
    two-pass (trivial cost at tiny R, avoids one-pass cancellation)."""
    mu = jnp.mean(y, axis=0, keepdims=True)
    d = y - mu
    var = jnp.mean(d * d, axis=0, keepdims=True)
    a = g * jax.lax.rsqrt(var + _BN_EPS)
    return jnp.maximum(d * a + beta, 0.0).astype(jnp.bfloat16)


def _tnet_kernel(x_ref, xt_ref,
                 w1, b1, g1, be1,
                 w2, b2, g2, be2,
                 w3, b3, g3, be3,
                 w4, b4, g4, be4,
                 w5, b5, g5, be5,
                 w6, b6,
                 out_ref, t_ref):
    B, N, C = x_ref.shape
    OUT = out_ref.shape[1]
    R = B * N

    x2d = x_ref[...].reshape(R, C)                      # (B*N, C) f32; N % 8 == 0 -> trivial
    ones_r = jnp.ones((1, R), jnp.float32)              # lhs for MXU column-sum matvecs

    # --- ConvBlock(C, 64): contraction dim is tiny (C=4) -> unrolled VPU FMAs in f32 ---
    w1v = w1[...]
    y = x2d[:, 0:1] * w1v[0:1, :]
    for j in range(1, C):
        y = y + x2d[:, j:j + 1] * w1v[j:j + 1, :]
    y = y + b1[...]
    h = _bn_relu_rows(y, g1[...], be1[...], ones_r)     # (R, 64) bf16

    # --- ConvBlock(64, 128) -> ConvBlock(128, 1024): bf16 MXU matmuls, f32 accumulate ---
    y = jnp.dot(h, w2[...], preferred_element_type=jnp.float32) + b2[...]
    h = _bn_relu_rows(y, g2[...], be2[...], ones_r)     # (R, 128)
    y = jnp.dot(h, w3[...], preferred_element_type=jnp.float32) + b3[...]
    h = _bn_relu_rows(y, g3[...], be3[...], ones_r)     # (R, 1024)

    # --- MaxPool1d(N) + Flatten: per-batch max over the point axis (single reduce) ---
    pooled = jnp.max(h.reshape(B, N, h.shape[-1]), axis=1)   # (B, 1024) bf16

    # --- FCBlock(1024, 512) -> FCBlock(512, 256) ---
    y = jnp.dot(pooled, w4[...], preferred_element_type=jnp.float32) + b4[...]
    f = _bn_relu_small(y, g4[...], be4[...])            # (B, 512)
    y = jnp.dot(f, w5[...], preferred_element_type=jnp.float32) + b5[...]
    f = _bn_relu_small(y, g5[...], be5[...])            # (B, 256)

    # --- Linear(256, OUT*OUT); identity already folded into b6.  Single unmasked store,
    #     T stays in vregs for the product below (no t_ref readback). ---
    t_flat = jnp.dot(f, w6[...], preferred_element_type=jnp.float32) + b6[...]   # (B, OUT*OUT)
    t_ref[...] = t_flat

    # --- output[b, i, n] = sum_j T[b, i, j] * x[b, n, j]  (x^T supplied as (B, OUT, N)).
    #     Contraction dim OUT=4 is tiny & static -> OUT^2 unrolled VPU FMAs over (B, N)
    #     slabs; every store is lane-dense in N. ---
    xt = xt_ref[...]                                     # (B, OUT, N) f32
    for i in range(OUT):
        acc = t_flat[:, i * OUT:i * OUT + 1] * xt[:, 0, :]
        for j in range(1, OUT):
            acc = acc + t_flat[:, i * OUT + j:i * OUT + j + 1] * xt[:, j, :]
        out_ref[:, i, :] = acc


def init_params(key, in_features, out_features):
    """Deterministic synthetic parameters in a kernel-friendly (in, out) layout."""
    p = {}
    dims = [(in_features, 64), (64, 128), (128, 1024), (1024, 512), (512, 256)]
    keys = jax.random.split(key, len(dims) + 1)
    for idx, (cin, cout) in enumerate(dims):
        kw, kb, kg, kbe = jax.random.split(keys[idx], 4)
        p[f'w{idx + 1}'] = jax.random.normal(kw, (cin, cout), jnp.float32) / jnp.sqrt(jnp.float32(cin))
        p[f'b{idx + 1}'] = 0.01 * jax.random.normal(kb, (1, cout), jnp.float32)
        p[f'g{idx + 1}'] = 1.0 + 0.1 * jax.random.normal(kg, (1, cout), jnp.float32)
        p[f'be{idx + 1}'] = 0.1 * jax.random.normal(kbe, (1, cout), jnp.float32)
    kw6, kb6 = jax.random.split(keys[-1], 2)
    p['w6'] = jax.random.normal(kw6, (256, out_features * out_features), jnp.float32) / jnp.sqrt(256.0)
    p['b6'] = 0.01 * jax.random.normal(kb6, (1, out_features * out_features), jnp.float32)
    return p


def transformation_network(x, params, out_features):
    """Returns (output_tensor (B, OUT, N), t_net_out (B, OUT, OUT)), like the PyTorch module."""
    B, N, C = x.shape
    assert C == out_features, "torch.matmul in forward() requires in_features == out_features"
    assert N != C, "layout (B, N, C) with N != in_features/out_features assumed"
    assert N % 8 == 0, "N must be a multiple of 8 for the layout-trivial in-kernel reshape"

    # Fold the "+ identity" of the forward pass into the final bias (constant, exact).
    eye_flat = jnp.eye(out_features, dtype=jnp.float32).reshape(1, out_features * out_features)

    flat = [params['w1'],                                    # conv1 stays f32 (VPU path)
            params['b1'], params['g1'], params['be1']]
    for i in range(2, 6):
        flat += [params[f'w{i}'].astype(jnp.bfloat16), params[f'b{i}'],
                 params[f'g{i}'], params[f'be{i}']]
    flat += [params['w6'].astype(jnp.bfloat16), params['b6'] + eye_flat]

    # x^T (B, C, N) computed once by XLA in the wrapper: avoids an in-kernel XLU
    # transpose of x's minor dims for the final product.  x itself is tiny, so the
    # duplicate layout costs ~nothing compared to the weights.
    x_t = jnp.transpose(x, (0, 2, 1))

    vmem = pl.BlockSpec(memory_space=pltpu.MemorySpace.VMEM)
    out_shape = (jax.ShapeDtypeStruct((B, out_features, N), jnp.float32),
                 jax.ShapeDtypeStruct((B, out_features * out_features), jnp.float32))

    # Advisory cost estimate for XLA scheduling around the custom call.
    R = B * N
    flops = (2 * R * (C * 64 + 64 * 128 + 128 * 1024)        # conv stack
             + 2 * R * 2 * (64 + 128 + 1024)                 # BN stat matvecs
             + 2 * B * (1024 * 512 + 512 * 256 + 256 * out_features * out_features)
             + 2 * B * out_features * out_features * N)
    weight_bytes = sum(int(a.size) * a.dtype.itemsize for a in flat)
    io_bytes = (2 * int(x.size) * x.dtype.itemsize
                + B * out_features * N * 4 + B * out_features * out_features * 4)
    cost = pl.CostEstimate(flops=int(flops),
                           transcendentals=64 + 128 + 1024 + 512 + 256,   # per-channel rsqrt
                           bytes_accessed=int(weight_bytes + io_bytes))

    # VMEM limit sized to actual buffers with headroom, generation-aware:
    # ~96 MiB ceiling on v5e/v6e (128 MiB physical), ~48 MiB on v7x (64 MiB physical).
    act_bytes = R * (C + 64 + 128 + 1024) * 6                # bf16 activations + f32 accumulators
    try:
        vmem_cap = int(pltpu.get_tpu_info().vmem_capacity_bytes)
    except Exception:                                        # pragma: no cover - conservative fallback
        vmem_cap = 64 * 2 ** 20
    vmem_limit = int(min(int(0.75 * vmem_cap),
                         max(16 * 2 ** 20, 2 * (weight_bytes + act_bytes + io_bytes))))

    fn = pl.pallas_call(
        _tnet_kernel,
        out_shape=out_shape,
        in_specs=[vmem] * (2 + len(flat)),
        out_specs=(vmem, vmem),
        compiler_params=pltpu.CompilerParams(vmem_limit_bytes=vmem_limit),
        cost_estimate=cost,
    )
    out, t_flat = fn(x, x_t, *flat)
    # (B, OUT*OUT) -> (B, OUT, OUT) is a free row-major reshape outside the kernel.
    return out, t_flat.reshape(B, out_features, out_features)


if __name__ == "__main__":
    B, N, C = 2, 16, 4          # batch=2, 16 points, in_features=4
    OUT = 4                     # out_features=4  (TransformationNetwork((N,), C, OUT))
    key = jax.random.PRNGKey(0)
    kx, kp = jax.random.split(key)
    x = jax.random.normal(kx, (B, N, C), jnp.float32)
    params = init_params(kp, C, OUT)

    out, t_mat = transformation_network(x, params, OUT)
    jax.block_until_ready((out, t_mat))
    assert out.shape == (B, OUT, N)
    assert t_mat.shape == (B, OUT, OUT)
    print("KERNEL_OK")
</pallas_src>

<mosaic_0001>
module attributes {stable_mosaic.version = 11 : i64} {
  func.func @_tnet_kernel(%arg0: memref<2x16x4xf32, #tpu.memory_space<vmem>>, %arg1: memref<2x4x16xf32, #tpu.memory_space<vmem>>, %arg2: memref<4x64xf32, #tpu.memory_space<vmem>>, %arg3: memref<1x64xf32, #tpu.memory_space<vmem>>, %arg4: memref<1x64xf32, #tpu.memory_space<vmem>>, %arg5: memref<1x64xf32, #tpu.memory_space<vmem>>, %arg6: memref<64x128xbf16, #tpu.memory_space<vmem>>, %arg7: memref<1x128xf32, #tpu.memory_space<vmem>>, %arg8: memref<1x128xf32, #tpu.memory_space<vmem>>, %arg9: memref<1x128xf32, #tpu.memory_space<vmem>>, %arg10: memref<128x1024xbf16, #tpu.memory_space<vmem>>, %arg11: memref<1x1024xf32, #tpu.memory_space<vmem>>, %arg12: memref<1x1024xf32, #tpu.memory_space<vmem>>, %arg13: memref<1x1024xf32, #tpu.memory_space<vmem>>, %arg14: memref<1024x512xbf16, #tpu.memory_space<vmem>>, %arg15: memref<1x512xf32, #tpu.memory_space<vmem>>, %arg16: memref<1x512xf32, #tpu.memory_space<vmem>>, %arg17: memref<1x512xf32, #tpu.memory_space<vmem>>, %arg18: memref<512x256xbf16, #tpu.memory_space<vmem>>, %arg19: memref<1x256xf32, #tpu.memory_space<vmem>>, %arg20: memref<1x256xf32, #tpu.memory_space<vmem>>, %arg21: memref<1x256xf32, #tpu.memory_space<vmem>>, %arg22: memref<256x16xbf16, #tpu.memory_space<vmem>>, %arg23: memref<1x16xf32, #tpu.memory_space<vmem>>, %arg24: memref<2x4x16xf32, #tpu.memory_space<vmem>>, %arg25: memref<2x16xf32, #tpu.memory_space<vmem>>) attributes {dimension_semantics = [], scalar_prefetch = 0 : i64, scratch_operands = 0 : i64, tpu.core_type = #tpu.core_type<tc>} {
    %c0 = arith.constant 0 : index
    %c0_0 = arith.constant 0 : index
    %c0_1 = arith.constant 0 : index
    %0 = vector.load %arg0[%c0, %c0_0, %c0_1] : memref<2x16x4xf32, #tpu.memory_space<vmem>>, vector<2x16x4xf32>
    %1 = vector.shape_cast %0 : vector<2x16x4xf32> to vector<32x4xf32>
    %cst = arith.constant 1.000000e+00 : f32
    %2 = vector.broadcast %cst : f32 to vector<1x32xf32>
    %c0_2 = arith.constant 0 : index
    %c0_3 = arith.constant 0 : index
    %3 = vector.load %arg2[%c0_2, %c0_3] : memref<4x64xf32, #tpu.memory_space<vmem>>, vector<4x64xf32>
    %4 = vector.extract_strided_slice %1 {offsets = [0, 0], sizes = [32, 1], strides = [1, 1]} : vector<32x4xf32> to vector<32x1xf32>
    %5 = vector.extract_strided_slice %3 {offsets = [0, 0], sizes = [1, 64], strides = [1, 1]} : vector<4x64xf32> to vector<1x64xf32>
    %6 = vector.broadcast %4 : vector<32x1xf32> to vector<32x64xf32>
    %7 = vector.broadcast %5 : vector<1x64xf32> to vector<32x64xf32>
    %8 = arith.mulf %6, %7 : vector<32x64xf32>
    %9 = vector.extract_strided_slice %1 {offsets = [0, 1], sizes = [32, 1], strides = [1, 1]} : vector<32x4xf32> to vector<32x1xf32>
    %10 = vector.extract_strided_slice %3 {offsets = [1, 0], sizes = [1, 64], strides = [1, 1]} : vector<4x64xf32> to vector<1x64xf32>
    %11 = vector.broadcast %9 : vector<32x1xf32> to vector<32x64xf32>
    %12 = vector.broadcast %10 : vector<1x64xf32> to vector<32x64xf32>
    %13 = arith.mulf %11, %12 : vector<32x64xf32>
    %14 = arith.addf %8, %13 : vector<32x64xf32>
    %15 = vector.extract_strided_slice %1 {offsets = [0, 2], sizes = [32, 1], strides = [1, 1]} : vector<32x4xf32> to vector<32x1xf32>
    %16 = vector.extract_strided_slice %3 {offsets = [2, 0], sizes = [1, 64], strides = [1, 1]} : vector<4x64xf32> to vector<1x64xf32>
    %17 = vector.broadcast %15 : vector<32x1xf32> to vector<32x64xf32>
    %18 = vector.broadcast %16 : vector<1x64xf32> to vector<32x64xf32>
    %19 = arith.mulf %17, %18 : vector<32x64xf32>
    %20 = arith.addf %14, %19 : vector<32x64xf32>
    %21 = vector.extract_strided_slice %1 {offsets = [0, 3], sizes = [32, 1], strides = [1, 1]} : vector<32x4xf32> to vector<32x1xf32>
    %22 = vector.extract_strided_slice %3 {offsets = [3, 0], sizes = [1, 64], strides = [1, 1]} : vector<4x64xf32> to vector<1x64xf32>
    %23 = vector.broadcast %21 : vector<32x1xf32> to vector<32x64xf32>
    %24 = vector.broadcast %22 : vector<1x64xf32> to vector<32x64xf32>
    %25 = arith.mulf %23, %24 : vector<32x64xf32>
    %26 = arith.addf %20, %25 : vector<32x64xf32>
    %c0_4 = arith.constant 0 : index
    %c0_5 = arith.constant 0 : index
    %27 = vector.load %arg3[%c0_4, %c0_5] : memref<1x64xf32, #tpu.memory_space<vmem>>, vector<1x64xf32>
    %28 = vector.broadcast %27 : vector<1x64xf32> to vector<32x64xf32>
    %29 = arith.addf %26, %28 : vector<32x64xf32>
    %c0_6 = arith.constant 0 : index
    %c0_7 = arith.constant 0 : index
    %30 = vector.load %arg4[%c0_6, %c0_7] : memref<1x64xf32, #tpu.memory_space<vmem>>, vector<1x64xf32>
    %c0_8 = arith.constant 0 : index
    %c0_9 = arith.constant 0 : index
    %31 = vector.load %arg5[%c0_8, %c0_9] : memref<1x64xf32, #tpu.memory_space<vmem>>, vector<1x64xf32>
    %cst_10 = arith.constant dense<0.000000e+00> : vector<1x64xf32>
    %32 = tpu.matmul %2, %29, %cst_10 {dimension_numbers = #tpu.dot_dimension_numbers<[1], [0], [0], [1], [0, 0, 1, 1], [], []>} : vector<1x32xf32>, vector<32x64xf32>, vector<1x64xf32> -> vector<1x64xf32>
    %33 = arith.mulf %29, %29 : vector<32x64xf32>
    %cst_11 = arith.constant dense<0.000000e+00> : vector<1x64xf32>
    %34 = tpu.matmul %2, %33, %cst_11 {dimension_numbers = #tpu.dot_dimension_numbers<[1], [0], [0], [1], [0, 0, 1, 1], [], []>} : vector<1x32xf32>, vector<32x64xf32>, vector<1x64xf32> -> vector<1x64xf32>
    %cst_12 = arith.constant 3.125000e-02 : f32
    %35 = vector.broadcast %cst_12 : f32 to vector<1x64xf32>
    %36 = arith.mulf %32, %35 : vector<1x64xf32>
    %cst_13 = arith.constant 3.125000e-02 : f32
    %37 = vector.broadcast %cst_13 : f32 to vector<1x64xf32>
    %38 = arith.mulf %34, %37 : vector<1x64xf32>
    %39 = arith.mulf %36, %36 : vector<1x64xf32>
    %40 = arith.subf %38, %39 : vector<1x64xf32>
    %cst_14 = arith.constant 0.000000e+00 : f32
    %41 = vector.broadcast %cst_14 : f32 to vector<1x64xf32>
    %42 = arith.maximumf %40, %41 : vector<1x64xf32>
    %cst_15 = arith.constant 9.99999974E-6 : f32
    %43 = vector.broadcast %cst_15 : f32 to vector<1x64xf32>
    %44 = arith.addf %42, %43 : vector<1x64xf32>
    %45 = math.rsqrt %44 : vector<1x64xf32>
    %46 = arith.mulf %30, %45 : vector<1x64xf32>
    %47 = arith.mulf %36, %46 : vector<1x64xf32>
    %48 = arith.subf %31, %47 : vector<1x64xf32>
    %49 = vector.broadcast %46 : vector<1x64xf32> to vector<32x64xf32>
    %50 = arith.mulf %29, %49 : vector<32x64xf32>
    %51 = vector.broadcast %48 : vector<1x64xf32> to vector<32x64xf32>
    %52 = arith.addf %50, %51 : vector<32x64xf32>
    %cst_16 = arith.constant 0.000000e+00 : f32
    %53 = vector.broadcast %cst_16 : f32 to vector<32x64xf32>
    %54 = arith.maximumf %52, %53 : vector<32x64xf32>
    %55 = arith.truncf %54 : vector<32x64xf32> to vector<32x64xbf16>
    %c0_17 = arith.constant 0 : index
    %c0_18 = arith.constant 0 : index
    %56 = vector.load %arg6[%c0_17, %c0_18] : memref<64x128xbf16, #tpu.memory_space<vmem>>, vector<64x128xbf16>
    %cst_19 = arith.constant dense<0.000000e+00> : vector<32x128xf32>
    %57 = tpu.matmul %55, %56, %cst_19 {dimension_numbers = #tpu.dot_dimension_numbers<[1], [0], [0], [1], [0, 0, 1, 1], [], []>} : vector<32x64xbf16>, vector<64x128xbf16>, vector<32x128xf32> -> vector<32x128xf32>
    %c0_20 = arith.constant 0 : index
    %c0_21 = arith.constant 0 : index
    %58 = vector.load %arg7[%c0_20, %c0_21] : memref<1x128xf32, #tpu.memory_space<vmem>>, vector<1x128xf32>
    %59 = vector.broadcast %58 : vector<1x128xf32> to vector<32x128xf32>
    %60 = arith.addf %57, %59 : vector<32x128xf32>
    %c0_22 = arith.constant 0 : index
    %c0_23 = arith.constant 0 : index
    %61 = vector.load %arg8[%c0_22, %c0_23] : memref<1x128xf32, #tpu.memory_space<vmem>>, vector<1x128xf32>
    %c0_24 = arith.constant 0 : index
    %c0_25 = arith.constant 0 : index
    %62 = vector.load %arg9[%c0_24, %c0_25] : memref<1x128xf32, #tpu.memory_space<vmem>>, vector<1x128xf32>
    %cst_26 = arith.constant dense<0.000000e+00> : vector<1x128xf32>
    %63 = tpu.matmul %2, %60, %cst_26 {dimension_numbers = #tpu.dot_dimension_numbers<[1], [0], [0], [1], [0, 0, 1, 1], [], []>} : vector<1x32xf32>, vector<32x128xf32>, vector<1x128xf32> -> vector<1x128xf32>
    %64 = arith.mulf %60, %60 : vector<32x128xf32>
    %cst_27 = arith.constant dense<0.000000e+00> : vector<1x128xf32>
    %65 = tpu.matmul %2, %64, %cst_27 {dimension_numbers = #tpu.dot_dimension_numbers<[1], [0], [0], [1], [0, 0, 1, 1], [], []>} : vector<1x32xf32>, vector<32x128xf32>, vector<1x128xf32> -> vector<1x128xf32>
    %cst_28 = arith.constant 3.125000e-02 : f32
    %66 = vector.broadcast %cst_28 : f32 to vector<1x128xf32>
    %67 = arith.mulf %63, %66 : vector<1x128xf32>
    %cst_29 = arith.constant 3.125000e-02 : f32
    %68 = vector.broadcast %cst_29 : f32 to vector<1x128xf32>
    %69 = arith.mulf %65, %68 : vector<1x128xf32>
    %70 = arith.mulf %67, %67 : vector<1x128xf32>
    %71 = arith.subf %69, %70 : vector<1x128xf32>
    %cst_30 = arith.constant 0.000000e+00 : f32
    %72 = vector.broadcast %cst_30 : f32 to vector<1x128xf32>
    %73 = arith.maximumf %71, %72 : vector<1x128xf32>
    %cst_31 = arith.constant 9.99999974E-6 : f32
    %74 = vector.broadcast %cst_31 : f32 to vector<1x128xf32>
    %75 = arith.addf %73, %74 : vector<1x128xf32>
    %76 = math.rsqrt %75 : vector<1x128xf32>
    %77 = arith.mulf %61, %76 : vector<1x128xf32>
    %78 = arith.mulf %67, %77 : vector<1x128xf32>
    %79 = arith.subf %62, %78 : vector<1x128xf32>
    %80 = vector.broadcast %77 : vector<1x128xf32> to vector<32x128xf32>
    %81 = arith.mulf %60, %80 : vector<32x128xf32>
    %82 = vector.broadcast %79 : vector<1x128xf32> to vector<32x128xf32>
    %83 = arith.addf %81, %82 : vector<32x128xf32>
    %cst_32 = arith.constant 0.000000e+00 : f32
    %84 = vector.broadcast %cst_32 : f32 to vector<32x128xf32>
    %85 = arith.maximumf %83, %84 : vector<32x128xf32>
    %86 = arith.truncf %85 : vector<32x128xf32> to vector<32x128xbf16>
    %c0_33 = arith.constant 0 : index
    %c0_34 = arith.constant 0 : index
    %87 = vector.load %arg10[%c0_33, %c0_34] : memref<128x1024xbf16, #tpu.memory_space<vmem>>, vector<128x1024xbf16>
    %cst_35 = arith.constant dense<0.000000e+00> : vector<32x1024xf32>
    %88 = tpu.matmul %86, %87, %cst_35 {dimension_numbers = #tpu.dot_dimension_numbers<[1], [0], [0], [1], [0, 0, 1, 1], [], []>} : vector<32x128xbf16>, vector<128x1024xbf16>, vector<32x1024xf32> -> vector<32x1024xf32>
    %c0_36 = arith.constant 0 : index
    %c0_37 = arith.constant 0 : index
    %89 = vector.load %arg11[%c0_36, %c0_37] : memref<1x1024xf32, #tpu.memory_space<vmem>>, vector<1x1024xf32>
    %90 = vector.broadcast %89 : vector<1x1024xf32> to vector<32x1024xf32>
    %91 = arith.addf %88, %90 : vector<32x1024xf32>
    %c0_38 = arith.constant 0 : index
    %c0_39 = arith.constant 0 : index
    %92 = vector.load %arg12[%c0_38, %c0_39] : memref<1x1024xf32, #tpu.memory_space<vmem>>, vector<1x1024xf32>
    %c0_40 = arith.constant 0 : index
    %c0_41 = arith.constant 0 : index
    %93 = vector.load %arg13[%c0_40, %c0_41] : memref<1x1024xf32, #tpu.memory_space<vmem>>, vector<1x1024xf32>
    %cst_42 = arith.constant dense<0.000000e+00> : vector<1x1024xf32>
    %94 = tpu.matmul %2, %91, %cst_42 {dimension_numbers = #tpu.dot_dimension_numbers<[1], [0], [0], [1], [0, 0, 1, 1], [], []>} : vector<1x32xf32>, vector<32x1024xf32>, vector<1x1024xf32> -> vector<1x1024xf32>
    %95 = arith.mulf %91, %91 : vector<32x1024xf32>
    %cst_43 = arith.constant dense<0.000000e+00> : vector<1x1024xf32>
    %96 = tpu.matmul %2, %95, %cst_43 {dimension_numbers = #tpu.dot_dimension_numbers<[1], [0], [0], [1], [0, 0, 1, 1], [], []>} : vector<1x32xf32>, vector<32x1024xf32>, vector<1x1024xf32> -> vector<1x1024xf32>
    %cst_44 = arith.constant 3.125000e-02 : f32
    %97 = vector.broadcast %cst_44 : f32 to vector<1x1024xf32>
    %98 = arith.mulf %94, %97 : vector<1x1024xf32>
    %cst_45 = arith.constant 3.125000e-02 : f32
    %99 = vector.broadcast %cst_45 : f32 to vector<1x1024xf32>
    %100 = arith.mulf %96, %99 : vector<1x1024xf32>
    %101 = arith.mulf %98, %98 : vector<1x1024xf32>
    %102 = arith.subf %100, %101 : vector<1x1024xf32>
    %cst_46 = arith.constant 0.000000e+00 : f32
    %103 = vector.broadcast %cst_46 : f32 to vector<1x1024xf32>
    %104 = arith.maximumf %102, %103 : vector<1x1024xf32>
    %cst_47 = arith.constant 9.99999974E-6 : f32
    %105 = vector.broadcast %cst_47 : f32 to vector<1x1024xf32>
    %106 = arith.addf %104, %105 : vector<1x1024xf32>
    %107 = math.rsqrt %106 : vector<1x1024xf32>
    %108 = arith.mulf %92, %107 : vector<1x1024xf32>
    %109 = arith.mulf %98, %108 : vector<1x1024xf32>
    %110 = arith.subf %93, %109 : vector<1x1024xf32>
    %111 = vector.broadcast %108 : vector<1x1024xf32> to vector<32x1024xf32>
    %112 = arith.mulf %91, %111 : vector<32x1024xf32>
    %113 = vector.broadcast %110 : vector<1x1024xf32> to vector<32x1024xf32>
    %114 = arith.addf %112, %113 : vector<32x1024xf32>
    %cst_48 = arith.constant 0.000000e+00 : f32
    %115 = vector.broadcast %cst_48 : f32 to vector<32x1024xf32>
    %116 = arith.maximumf %114, %115 : vector<32x1024xf32>
    %117 = arith.truncf %116 : vector<32x1024xf32> to vector<32x1024xbf16>
    %118 = vector.shape_cast %117 : vector<32x1024xbf16> to vector<2x16x1024xbf16>
    %cst_49 = arith.constant dense<0xFF80> : vector<2x1024xbf16>
    %119 = vector.multi_reduction <maximumf>, %118, %cst_49 [1] : vector<2x16x1024xbf16> to vector<2x1024xbf16>
    %c0_50 = arith.constant 0 : index
    %c0_51 = arith.constant 0 : index
    %120 = vector.load %arg14[%c0_50, %c0_51] : memref<1024x512xbf16, #tpu.memory_space<vmem>>, vector<1024x512xbf16>
    %cst_52 = arith.constant dense<0.000000e+00> : vector<2x512xf32>
    %121 = tpu.matmul %119, %120, %cst_52 {dimension_numbers = #tpu.dot_dimension_numbers<[1], [0], [0], [1], [0, 0, 1, 1], [], []>} : vector<2x1024xbf16>, vector<1024x512xbf16>, vector<2x512xf32> -> vector<2x512xf32>
    %c0_53 = arith.constant 0 : index
    %c0_54 = arith.constant 0 : index
    %122 = vector.load %arg15[%c0_53, %c0_54] : memref<1x512xf32, #tpu.memory_space<vmem>>, vector<1x512xf32>
    %123 = vector.broadcast %122 : vector<1x512xf32> to vector<2x512xf32>
    %124 = arith.addf %121, %123 : vector<2x512xf32>
    %c0_55 = arith.constant 0 : index
    %c0_56 = arith.constant 0 : index
    %125 = vector.load %arg16[%c0_55, %c0_56] : memref<1x512xf32, #tpu.memory_space<vmem>>, vector<1x512xf32>
    %c0_57 = arith.constant 0 : index
    %c0_58 = arith.constant 0 : index
    %126 = vector.load %arg17[%c0_57, %c0_58] : memref<1x512xf32, #tpu.memory_space<vmem>>, vector<1x512xf32>
    %cst_59 = arith.constant dense<0.000000e+00> : vector<512xf32>
    %127 = vector.multi_reduction <add>, %124, %cst_59 [0] : vector<2x512xf32> to vector<512xf32>
    %128 = vector.shape_cast %127 : vector<512xf32> to vector<1x512xf32>
    %cst_60 = arith.constant 2.000000e+00 : f32
    %129 = vector.broadcast %cst_60 : f32 to vector<1x512xf32>
    %130 = arith.divf %128, %129 : vector<1x512xf32>
    %131 = vector.broadcast %130 : vector<1x512xf32> to vector<2x512xf32>
    %132 = arith.subf %124, %131 : vector<2x512xf32>
    %133 = arith.mulf %132, %132 : vector<2x512xf32>
    %cst_61 = arith.constant dense<0.000000e+00> : vector<512xf32>
    %134 = vector.multi_reduction <add>, %133, %cst_61 [0] : vector<2x512xf32> to vector<512xf32>
    %135 = vector.shape_cast %134 : vector<512xf32> to vector<1x512xf32>
    %cst_62 = arith.constant 2.000000e+00 : f32
    %136 = vector.broadcast %cst_62 : f32 to vector<1x512xf32>
    %137 = arith.divf %135, %136 : vector<1x512xf32>
    %cst_63 = arith.constant 9.99999974E-6 : f32
    %138 = vector.broadcast %cst_63 : f32 to vector<1x512xf32>
    %139 = arith.addf %137, %138 : vector<1x512xf32>
    %140 = math.rsqrt %139 : vector<1x512xf32>
    %141 = arith.mulf %125, %140 : vector<1x512xf32>
    %142 = vector.broadcast %141 : vector<1x512xf32> to vector<2x512xf32>
    %143 = arith.mulf %132, %142 : vector<2x512xf32>
    %144 = vector.broadcast %126 : vector<1x512xf32> to vector<2x512xf32>
    %145 = arith.addf %143, %144 : vector<2x512xf32>
    %cst_64 = arith.constant 0.000000e+00 : f32
    %146 = vector.broadcast %cst_64 : f32 to vector<2x512xf32>
    %147 = arith.maximumf %145, %146 : vector<2x512xf32>
    %148 = arith.truncf %147 : vector<2x512xf32> to vector<2x512xbf16>
    %c0_65 = arith.constant 0 : index
    %c0_66 = arith.constant 0 : index
    %149 = vector.load %arg18[%c0_65, %c0_66] : memref<512x256xbf16, #tpu.memory_space<vmem>>, vector<512x256xbf16>
    %cst_67 = arith.constant dense<0.000000e+00> : vector<2x256xf32>
    %150 = tpu.matmul %148, %149, %cst_67 {dimension_numbers = #tpu.dot_dimension_numbers<[1], [0], [0], [1], [0, 0, 1, 1], [], []>} : vector<2x512xbf16>, vector<512x256xbf16>, vector<2x256xf32> -> vector<2x256xf32>
    %c0_68 = arith.constant 0 : index
    %c0_69 = arith.constant 0 : index
    %151 = vector.load %arg19[%c0_68, %c0_69] : memref<1x256xf32, #tpu.memory_space<vmem>>, vector<1x256xf32>
    %152 = vector.broadcast %151 : vector<1x256xf32> to vector<2x256xf32>
    %153 = arith.addf %150, %152 : vector<2x256xf32>
    %c0_70 = arith.constant 0 : index
    %c0_71 = arith.constant 0 : index
    %154 = vector.load %arg20[%c0_70, %c0_71] : memref<1x256xf32, #tpu.memory_space<vmem>>, vector<1x256xf32>
    %c0_72 = arith.constant 0 : index
    %c0_73 = arith.constant 0 : index
    %155 = vector.load %arg21[%c0_72, %c0_73] : memref<1x256xf32, #tpu.memory_space<vmem>>, vector<1x256xf32>
    %cst_74 = arith.constant dense<0.000000e+00> : vector<256xf32>
    %156 = vector.multi_reduction <add>, %153, %cst_74 [0] : vector<2x256xf32> to vector<256xf32>
    %157 = vector.shape_cast %156 : vector<256xf32> to vector<1x256xf32>
    %cst_75 = arith.constant 2.000000e+00 : f32
    %158 = vector.broadcast %cst_75 : f32 to vector<1x256xf32>
    %159 = arith.divf %157, %158 : vector<1x256xf32>
    %160 = vector.broadcast %159 : vector<1x256xf32> to vector<2x256xf32>
    %161 = arith.subf %153, %160 : vector<2x256xf32>
    %162 = arith.mulf %161, %161 : vector<2x256xf32>
    %cst_76 = arith.constant dense<0.000000e+00> : vector<256xf32>
    %163 = vector.multi_reduction <add>, %162, %cst_76 [0] : vector<2x256xf32> to vector<256xf32>
    %164 = vector.shape_cast %163 : vector<256xf32> to vector<1x256xf32>
    %cst_77 = arith.constant 2.000000e+00 : f32
    %165 = vector.broadcast %cst_77 : f32 to vector<1x256xf32>
    %166 = arith.divf %164, %165 : vector<1x256xf32>
    %cst_78 = arith.constant 9.99999974E-6 : f32
    %167 = vector.broadcast %cst_78 : f32 to vector<1x256xf32>
    %168 = arith.addf %166, %167 : vector<1x256xf32>
    %169 = math.rsqrt %168 : vector<1x256xf32>
    %170 = arith.mulf %154, %169 : vector<1x256xf32>
    %171 = vector.broadcast %170 : vector<1x256xf32> to vector<2x256xf32>
    %172 = arith.mulf %161, %171 : vector<2x256xf32>
    %173 = vector.broadcast %155 : vector<1x256xf32> to vector<2x256xf32>
    %174 = arith.addf %172, %173 : vector<2x256xf32>
    %cst_79 = arith.constant 0.000000e+00 : f32
    %175 = vector.broadcast %cst_79 : f32 to vector<2x256xf32>
    %176 = arith.maximumf %174, %175 : vector<2x256xf32>
    %177 = arith.truncf %176 : vector<2x256xf32> to vector<2x256xbf16>
    %c0_80 = arith.constant 0 : index
    %c0_81 = arith.constant 0 : index
    %178 = vector.load %arg22[%c0_80, %c0_81] : memref<256x16xbf16, #tpu.memory_space<vmem>>, vector<256x16xbf16>
    %cst_82 = arith.constant dense<0.000000e+00> : vector<2x16xf32>
    %179 = tpu.matmul %177, %178, %cst_82 {dimension_numbers = #tpu.dot_dimension_numbers<[1], [0], [0], [1], [0, 0, 1, 1], [], []>} : vector<2x256xbf16>, vector<256x16xbf16>, vector<2x16xf32> -> vector<2x16xf32>
    %c0_83 = arith.constant 0 : index
    %c0_84 = arith.constant 0 : index
    %180 = vector.load %arg23[%c0_83, %c0_84] : memref<1x16xf32, #tpu.memory_space<vmem>>, vector<1x16xf32>
    %181 = vector.broadcast %180 : vector<1x16xf32> to vector<2x16xf32>
    %182 = arith.addf %179, %181 : vector<2x16xf32>
    %c0_85 = arith.constant 0 : index
    %c0_86 = arith.constant 0 : index
    %183 = vector.load %arg25[%c0_85, %c0_86] : memref<2x16xf32, #tpu.memory_space<vmem>>, vector<2x16xf32>
    tpu.vector_store %arg25[%c0_85, %c0_86], %182 {strides = array<i32>} : memref<2x16xf32, #tpu.memory_space<vmem>>, vector<2x16xf32>,
    %c0_87 = arith.constant 0 : index
    %c0_88 = arith.constant 0 : index
    %c0_89 = arith.constant 0 : index
    %184 = vector.load %arg1[%c0_87, %c0_88, %c0_89] : memref<2x4x16xf32, #tpu.memory_space<vmem>>, vector<2x4x16xf32>
    %185 = vector.extract_strided_slice %182 {offsets = [0, 0], sizes = [2, 1], strides = [1, 1]} : vector<2x16xf32> to vector<2x1xf32>
    %186 = vector.extract_strided_slice %184 {offsets = [0, 0, 0], sizes = [2, 1, 16], strides = [1, 1, 1]} : vector<2x4x16xf32> to vector<2x1x16xf32>
    %187 = vector.shape_cast %186 : vector<2x1x16xf32> to vector<2x16xf32>
    %188 = vector.broadcast %185 : vector<2x1xf32> to vector<2x16xf32>
    %189 = arith.mulf %188, %187 : vector<2x16xf32>
    %190 = vector.extract_strided_slice %182 {offsets = [0, 1], sizes = [2, 1], strides = [1, 1]} : vector<2x16xf32> to vector<2x1xf32>
    %191 = vector.extract_strided_slice %184 {offsets = [0, 1, 0], sizes = [2, 1, 16], strides = [1, 1, 1]} : vector<2x4x16xf32> to vector<2x1x16xf32>
    %192 = vector.shape_cast %191 : vector<2x1x16xf32> to vector<2x16xf32>
    %193 = vector.broadcast %190 : vector<2x1xf32> to vector<2x16xf32>
    %194 = arith.mulf %193, %192 : vector<2x16xf32>
    %195 = arith.addf %189, %194 : vector<2x16xf32>
    %196 = vector.extract_strided_slice %182 {offsets = [0, 2], sizes = [2, 1], strides = [1, 1]} : vector<2x16xf32> to vector<2x1xf32>
    %197 = vector.extract_strided_slice %184 {offsets = [0, 2, 0], sizes = [2, 1, 16], strides = [1, 1, 1]} : vector<2x4x16xf32> to vector<2x1x16xf32>
    %198 = vector.shape_cast %197 : vector<2x1x16xf32> to vector<2x16xf32>
    %199 = vector.broadcast %196 : vector<2x1xf32> to vector<2x16xf32>
    %200 = arith.mulf %199, %198 : vector<2x16xf32>
    %201 = arith.addf %195, %200 : vector<2x16xf32>
    %202 = vector.extract_strided_slice %182 {offsets = [0, 3], sizes = [2, 1], strides = [1, 1]} : vector<2x16xf32> to vector<2x1xf32>
    %203 = vector.extract_strided_slice %184 {offsets = [0, 3, 0], sizes = [2, 1, 16], strides = [1, 1, 1]} : vector<2x4x16xf32> to vector<2x1x16xf32>
    %204 = vector.shape_cast %203 : vector<2x1x16xf32> to vector<2x16xf32>
    %205 = vector.broadcast %202 : vector<2x1xf32> to vector<2x16xf32>
    %206 = arith.mulf %205, %204 : vector<2x16xf32>
    %207 = arith.addf %201, %206 : vector<2x16xf32>
    %c0_90 = arith.constant 0 : index
    %c0_91 = arith.constant 0 : index
    %c0_92 = arith.constant 0 : index
    %208 = vector.load %arg24[%c0_90, %c0_91, %c0_92] : memref<2x4x16xf32, #tpu.memory_space<vmem>>, vector<2x1x16xf32>
    %209 = vector.shape_cast %208 : vector<2x1x16xf32> to vector<2x16xf32>
    %210 = vector.shape_cast %207 : vector<2x16xf32> to vector<2x1x16xf32>
    tpu.vector_store %arg24[%c0_90, %c0_91, %c0_92], %210 {strides = array<i32>} : memref<2x4x16xf32, #tpu.memory_space<vmem>>, vector<2x1x16xf32>,
    %211 = vector.extract_strided_slice %182 {offsets = [0, 4], sizes = [2, 1], strides = [1, 1]} : vector<2x16xf32> to vector<2x1xf32>
    %212 = vector.extract_strided_slice %184 {offsets = [0, 0, 0], sizes = [2, 1, 16], strides = [1, 1, 1]} : vector<2x4x16xf32> to vector<2x1x16xf32>
    %213 = vector.shape_cast %212 : vector<2x1x16xf32> to vector<2x16xf32>
    %214 = vector.broadcast %211 : vector<2x1xf32> to vector<2x16xf32>
    %215 = arith.mulf %214, %213 : vector<2x16xf32>
    %216 = vector.extract_strided_slice %182 {offsets = [0, 5], sizes = [2, 1], strides = [1, 1]} : vector<2x16xf32> to vector<2x1xf32>
    %217 = vector.extract_strided_slice %184 {offsets = [0, 1, 0], sizes = [2, 1, 16], strides = [1, 1, 1]} : vector<2x4x16xf32> to vector<2x1x16xf32>
    %218 = vector.shape_cast %217 : vector<2x1x16xf32> to vector<2x16xf32>
    %219 = vector.broadcast %216 : vector<2x1xf32> to vector<2x16xf32>
    %220 = arith.mulf %219, %218 : vector<2x16xf32>
    %221 = arith.addf %215, %220 : vector<2x16xf32>
    %222 = vector.extract_strided_slice %182 {offsets = [0, 6], sizes = [2, 1], strides = [1, 1]} : vector<2x16xf32> to vector<2x1xf32>
    %223 = vector.extract_strided_slice %184 {offsets = [0, 2, 0], sizes = [2, 1, 16], strides = [1, 1, 1]} : vector<2x4x16xf32> to vector<2x1x16xf32>
    %224 = vector.shape_cast %223 : vector<2x1x16xf32> to vector<2x16xf32>
    %225 = vector.broadcast %222 : vector<2x1xf32> to vector<2x16xf32>
    %226 = arith.mulf %225, %224 : vector<2x16xf32>
    %227 = arith.addf %221, %226 : vector<2x16xf32>
    %228 = vector.extract_strided_slice %182 {offsets = [0, 7], sizes = [2, 1], strides = [1, 1]} : vector<2x16xf32> to vector<2x1xf32>
    %229 = vector.extract_strided_slice %184 {offsets = [0, 3, 0], sizes = [2, 1, 16], strides = [1, 1, 1]} : vector<2x4x16xf32> to vector<2x1x16xf32>
    %230 = vector.shape_cast %229 : vector<2x1x16xf32> to vector<2x16xf32>
    %231 = vector.broadcast %228 : vector<2x1xf32> to vector<2x16xf32>
    %232 = arith.mulf %231, %230 : vector<2x16xf32>
    %233 = arith.addf %227, %232 : vector<2x16xf32>
    %c0_93 = arith.constant 0 : index
    %c1 = arith.constant 1 : index
    %c0_94 = arith.constant 0 : index
    %234 = vector.load %arg24[%c0_93, %c1, %c0_94] : memref<2x4x16xf32, #tpu.memory_space<vmem>>, vector<2x1x16xf32>
    %235 = vector.shape_cast %234 : vector<2x1x16xf32> to vector<2x16xf32>
    %236 = vector.shape_cast %233 : vector<2x16xf32> to vector<2x1x16xf32>
    tpu.vector_store %arg24[%c0_93, %c1, %c0_94], %236 {strides = array<i32>} : memref<2x4x16xf32, #tpu.memory_space<vmem>>, vector<2x1x16xf32>,
    %237 = vector.extract_strided_slice %182 {offsets = [0, 8], sizes = [2, 1], strides = [1, 1]} : vector<2x16xf32> to vector<2x1xf32>
    %238 = vector.extract_strided_slice %184 {offsets = [0, 0, 0], sizes = [2, 1, 16], strides = [1, 1, 1]} : vector<2x4x16xf32> to vector<2x1x16xf32>
    %239 = vector.shape_cast %238 : vector<2x1x16xf32> to vector<2x16xf32>
    %240 = vector.broadcast %237 : vector<2x1xf32> to vector<2x16xf32>
    %241 = arith.mulf %240, %239 : vector<2x16xf32>
    %242 = vector.extract_strided_slice %182 {offsets = [0, 9], sizes = [2, 1], strides = [1, 1]} : vector<2x16xf32> to vector<2x1xf32>
    %243 = vector.extract_strided_slice %184 {offsets = [0, 1, 0], sizes = [2, 1, 16], strides = [1, 1, 1]} : vector<2x4x16xf32> to vector<2x1x16xf32>
    %244 = vector.shape_cast %243 : vector<2x1x16xf32> to vector<2x16xf32>
    %245 = vector.broadcast %242 : vector<2x1xf32> to vector<2x16xf32>
    %246 = arith.mulf %245, %244 : vector<2x16xf32>
    %247 = arith.addf %241, %246 : vector<2x16xf32>
    %248 = vector.extract_strided_slice %182 {offsets = [0, 10], sizes = [2, 1], strides = [1, 1]} : vector<2x16xf32> to vector<2x1xf32>
    %249 = vector.extract_strided_slice %184 {offsets = [0, 2, 0], sizes = [2, 1, 16], strides = [1, 1, 1]} : vector<2x4x16xf32> to vector<2x1x16xf32>
    %250 = vector.shape_cast %249 : vector<2x1x16xf32> to vector<2x16xf32>
    %251 = vector.broadcast %248 : vector<2x1xf32> to vector<2x16xf32>
    %252 = arith.mulf %251, %250 : vector<2x16xf32>
    %253 = arith.addf %247, %252 : vector<2x16xf32>
    %254 = vector.extract_strided_slice %182 {offsets = [0, 11], sizes = [2, 1], strides = [1, 1]} : vector<2x16xf32> to vector<2x1xf32>
    %255 = vector.extract_strided_slice %184 {offsets = [0, 3, 0], sizes = [2, 1, 16], strides = [1, 1, 1]} : vector<2x4x16xf32> to vector<2x1x16xf32>
    %256 = vector.shape_cast %255 : vector<2x1x16xf32> to vector<2x16xf32>
    %257 = vector.broadcast %254 : vector<2x1xf32> to vector<2x16xf32>
    %258 = arith.mulf %257, %256 : vector<2x16xf32>
    %259 = arith.addf %253, %258 : vector<2x16xf32>
    %c0_95 = arith.constant 0 : index
    %c2 = arith.constant 2 : index
    %c0_96 = arith.constant 0 : index
    %260 = vector.load %arg24[%c0_95, %c2, %c0_96] : memref<2x4x16xf32, #tpu.memory_space<vmem>>, vector<2x1x16xf32>
    %261 = vector.shape_cast %260 : vector<2x1x16xf32> to vector<2x16xf32>
    %262 = vector.shape_cast %259 : vector<2x16xf32> to vector<2x1x16xf32>
    tpu.vector_store %arg24[%c0_95, %c2, %c0_96], %262 {strides = array<i32>} : memref<2x4x16xf32, #tpu.memory_space<vmem>>, vector<2x1x16xf32>,
    %263 = vector.extract_strided_slice %182 {offsets = [0, 12], sizes = [2, 1], strides = [1, 1]} : vector<2x16xf32> to vector<2x1xf32>
    %264 = vector.extract_strided_slice %184 {offsets = [0, 0, 0], sizes = [2, 1, 16], strides = [1, 1, 1]} : vector<2x4x16xf32> to vector<2x1x16xf32>
    %265 = vector.shape_cast %264 : vector<2x1x16xf32> to vector<2x16xf32>
    %266 = vector.broadcast %263 : vector<2x1xf32> to vector<2x16xf32>
    %267 = arith.mulf %266, %265 : vector<2x16xf32>
    %268 = vector.extract_strided_slice %182 {offsets = [0, 13], sizes = [2, 1], strides = [1, 1]} : vector<2x16xf32> to vector<2x1xf32>
    %269 = vector.extract_strided_slice %184 {offsets = [0, 1, 0], sizes = [2, 1, 16], strides = [1, 1, 1]} : vector<2x4x16xf32> to vector<2x1x16xf32>
    %270 = vector.shape_cast %269 : vector<2x1x16xf32> to vector<2x16xf32>
    %271 = vector.broadcast %268 : vector<2x1xf32> to vector<2x16xf32>
    %272 = arith.mulf %271, %270 : vector<2x16xf32>
    %273 = arith.addf %267, %272 : vector<2x16xf32>
    %274 = vector.extract_strided_slice %182 {offsets = [0, 14], sizes = [2, 1], strides = [1, 1]} : vector<2x16xf32> to vector<2x1xf32>
    %275 = vector.extract_strided_slice %184 {offsets = [0, 2, 0], sizes = [2, 1, 16], strides = [1, 1, 1]} : vector<2x4x16xf32> to vector<2x1x16xf32>
    %276 = vector.shape_cast %275 : vector<2x1x16xf32> to vector<2x16xf32>
    %277 = vector.broadcast %274 : vector<2x1xf32> to vector<2x16xf32>
    %278 = arith.mulf %277, %276 : vector<2x16xf32>
    %279 = arith.addf %273, %278 : vector<2x16xf32>
    %280 = vector.extract_strided_slice %182 {offsets = [0, 15], sizes = [2, 1], strides = [1, 1]} : vector<2x16xf32> to vector<2x1xf32>
    %281 = vector.extract_strided_slice %184 {offsets = [0, 3, 0], sizes = [2, 1, 16], strides = [1, 1, 1]} : vector<2x4x16xf32> to vector<2x1x16xf32>
    %282 = vector.shape_cast %281 : vector<2x1x16xf32> to vector<2x16xf32>
    %283 = vector.broadcast %280 : vector<2x1xf32> to vector<2x16xf32>
    %284 = arith.mulf %283, %282 : vector<2x16xf32>
    %285 = arith.addf %279, %284 : vector<2x16xf32>
    %c0_97 = arith.constant 0 : index
    %c3 = arith.constant 3 : index
    %c0_98 = arith.constant 0 : index
    %286 = vector.load %arg24[%c0_97, %c3, %c0_98] : memref<2x4x16xf32, #tpu.memory_space<vmem>>, vector<2x1x16xf32>
    %287 = vector.shape_cast %286 : vector<2x1x16xf32> to vector<2x16xf32>
    %288 = vector.shape_cast %285 : vector<2x16xf32> to vector<2x1x16xf32>
    tpu.vector_store %arg24[%c0_97, %c3, %c0_98], %288 {strides = array<i32>} : memref<2x4x16xf32, #tpu.memory_space<vmem>>, vector<2x1x16xf32>,
    return
  }
}

</mosaic_0001>

<llo_original>
// kernel: tpu_custom_call.1
$region0: #{tpu_custom_call.1}
  #allocation0 [shape = 'u32[]', space=smem, size = 0x4, offset = 0x4, fixed_abs, tag = 'smem constant byte address 0x4 - core index']
  #allocation1 [shape = 'u32[144,128]{1,0:T(1,128)}', space=vmem, size = 0x12000, scoped, tag = 'internal scratch']
  %s0 = inlined_call_operand.vmem [shape: f32[2,16,4], index: 0, kind: input, shape index: {}]
  %s1 = inlined_call_operand.vmem [shape: f32[2,4,16], index: 1, kind: input, shape index: {}]
  %s2 = inlined_call_operand.vmem [shape: f32[4,64], index: 2, kind: input, shape index: {}]
  %s3 = inlined_call_operand.vmem [shape: f32[1,64], index: 3, kind: input, shape index: {}]
  %s4 = inlined_call_operand.vmem [shape: f32[1,64], index: 4, kind: input, shape index: {}]
  %s5 = inlined_call_operand.vmem [shape: f32[1,64], index: 5, kind: input, shape index: {}]
  %s6 = inlined_call_operand.vmem [shape: bf16[64,128], index: 6, kind: input, shape index: {}]
  %s7 = inlined_call_operand.vmem [shape: f32[1,128], index: 7, kind: input, shape index: {}]
  %s8 = inlined_call_operand.vmem [shape: f32[1,128], index: 8, kind: input, shape index: {}]
  %s9 = inlined_call_operand.vmem [shape: f32[1,128], index: 9, kind: input, shape index: {}]
  %s10 = inlined_call_operand.hbm [shape: bf16[128,1024], index: 10, kind: input, shape index: {}]
  %s11 = inlined_call_operand.vmem [shape: f32[1,1024], index: 11, kind: input, shape index: {}]
  %s12 = inlined_call_operand.vmem [shape: f32[1,1024], index: 12, kind: input, shape index: {}]
  %s13 = inlined_call_operand.vmem [shape: f32[1,1024], index: 13, kind: input, shape index: {}]
  %s14 = inlined_call_operand.hbm [shape: bf16[1024,512], index: 14, kind: input, shape index: {}]
  %s15 = inlined_call_operand.vmem [shape: f32[1,512], index: 15, kind: input, shape index: {}]
  %s16 = inlined_call_operand.vmem [shape: f32[1,512], index: 16, kind: input, shape index: {}]
  %s17 = inlined_call_operand.vmem [shape: f32[1,512], index: 17, kind: input, shape index: {}]
  %s18 = inlined_call_operand.hbm [shape: bf16[512,256], index: 18, kind: input, shape index: {}]
  %s19 = inlined_call_operand.vmem [shape: f32[1,256], index: 19, kind: input, shape index: {}]
  %s20 = inlined_call_operand.vmem [shape: f32[1,256], index: 20, kind: input, shape index: {}]
  %s21 = inlined_call_operand.vmem [shape: f32[1,256], index: 21, kind: input, shape index: {}]
  %s22 = inlined_call_operand.vmem [shape: bf16[256,16], index: 22, kind: input, shape index: {}]
  %s23 = inlined_call_operand.vmem [shape: f32[1,16], index: 23, kind: input, shape index: {}]
  %s24 = inlined_call_operand.hbm [shape: f32[2,4,16], index: 24, kind: output, shape index: {0}]
  %s25 = inlined_call_operand.hbm [shape: f32[2,16], index: 25, kind: output, shape index: {1}]
  %26 = xla_tuple %s24, %s25
  %s27 = sld [smem:[#allocation0]]
  $region126: #{tpu_custom_call.1} parent=0
    _
  %s29 = ssub.s32 1, %s27
  %s30 = scalar_select 0, %s29, %s27
  $region1: #{tpu_custom_call.1} parent=0
    #allocation2 [shape = 'u8[262144]{0}', space=vmem, size = 0x40000, scoped, tag = 'input window, operand 10, single buffered']
    #allocation3 [shape = 's32[1]{0}', space=sflag, size = 0x4, scoped, tag = 'scoped memory for tpu_custom_call.1']
    #allocation4 [shape = 's32[1]{0}', space=sflag, size = 0x4, scoped, tag = 'scoped memory for tpu_custom_call.1']
    #allocation5 [shape = 'u8[1048576]{0}', space=vmem, size = 0x100000, scoped, tag = 'input window, operand 14, single buffered']
    #allocation6 [shape = 's32[1]{0}', space=sflag, size = 0x4, scoped, tag = 'scoped memory for tpu_custom_call.1']
    #allocation7 [shape = 'u8[262144]{0}', space=vmem, size = 0x40000, scoped, tag = 'input window, operand 18, single buffered']
    #allocation8 [shape = 'u8[4096]{0}', space=vmem, size = 0x1000, scoped, tag = 'output window, operand 0, single buffered']
    #allocation9 [shape = 'u8[1024]{0}', space=vmem, size = 0x400, scoped, tag = 'output window, operand 1, single buffered']
    #allocation10 [shape = 's32[1]{0}', space=sflag, size = 0x4, scoped, tag = 'scoped memory for tpu_custom_call.1']
    %31 = vsyncpa [#allocation3], 0
    %32 = vsyncpa [#allocation6], 0
    %33 = vsyncpa [#allocation4], 0
    %34 = vsyncpa [#allocation10], 0
    // Predicated region
    $region2: #{tpu_custom_call.1} parent=1 // pred_check
      _
    $region3: #{tpu_custom_call.1} parent=1 // pred_check_branch
      %36 = sbr.rel (0) target = $region5
    $region4: #{tpu_custom_call.1} parent=1 // pred_region
      _
    $region5: #{tpu_custom_call.1} parent=1 // pred_fallthru
      _
    // Predicated region
    $region6: #{tpu_custom_call.1} parent=1 // pred_check
      _
    $region7: #{tpu_custom_call.1} parent=1 // pred_check_branch
      %38 = sbr.rel (0) target = $region9
    $region8: #{tpu_custom_call.1} parent=1 // pred_region
      _
    $region9: #{tpu_custom_call.1} parent=1 // pred_fallthru
      _
    // Predicated region
    $region10: #{tpu_custom_call.1} parent=1 // pred_check
      _
    $region11: #{tpu_custom_call.1} parent=1 // pred_check_branch
      %40 = sbr.rel (0) target = $region13
    $region12: #{tpu_custom_call.1} parent=1 // pred_region
      _
    $region13: #{tpu_custom_call.1} parent=1 // pred_fallthru
      _
    // Predicated region
    $region14: #{tpu_custom_call.1} parent=1 // pred_check
      _
    $region15: #{tpu_custom_call.1} parent=1 // pred_check_branch
      %42 = sbr.rel (0) target = $region17
    $region16: #{tpu_custom_call.1} parent=1 // pred_region
      _
    $region17: #{tpu_custom_call.1} parent=1 // pred_fallthru
      _
    // Predicated region
    $region18: #{tpu_custom_call.1} parent=1 // pred_check
      _
    $region19: #{tpu_custom_call.1} parent=1 // pred_check_branch
      %44 = sbr.rel (0) target = $region21
    $region20: #{tpu_custom_call.1} parent=1 // pred_region
      _
    $region21: #{tpu_custom_call.1} parent=1 // pred_fallthru
      _
    // Predicated region
    $region22: #{tpu_custom_call.1} parent=1 // pred_check
      _
    $region23: #{tpu_custom_call.1} parent=1 // pred_check_branch
      %46 = sbr.rel (0) target = $region25
    $region24: #{tpu_custom_call.1} parent=1 // pred_region
      _
    $region25: #{tpu_custom_call.1} parent=1 // pred_fallthru
      _
    // Predicated region
    $region26: #{tpu_custom_call.1} parent=1 // pred_check
      _
    $region27: #{tpu_custom_call.1} parent=1 // pred_check_branch
      %48 = sbr.rel (0) target = $region29
    $region28: #{tpu_custom_call.1} parent=1 // pred_region
      _
    $region29: #{tpu_custom_call.1} parent=1 // pred_fallthru
      _
    // Predicated region
    $region30: #{tpu_custom_call.1} parent=1 // pred_check
      _
    $region31: #{tpu_custom_call.1} parent=1 // pred_check_branch
      %50 = sbr.rel (0) target = $region33
    $region32: #{tpu_custom_call.1} parent=1 // pred_region
      _
    $region33: #{tpu_custom_call.1} parent=1 // pred_fallthru
      _
    // Predicated region
    $region34: #{tpu_custom_call.1} parent=1 // pred_check
      _
    $region35: #{tpu_custom_call.1} parent=1 // pred_check_branch
      %52 = sbr.rel (0) target = $region37
    $region36: #{tpu_custom_call.1} parent=1 // pred_region
      _
    $region37: #{tpu_custom_call.1} parent=1 // pred_fallthru
      _
    // Predicated region
    $region38: #{tpu_custom_call.1} parent=1 // pred_check
      _
    $region39: #{tpu_custom_call.1} parent=1 // pred_check_branch
      %54 = sbr.rel (0) target = $region41
    $region40: #{tpu_custom_call.1} parent=1 // pred_region
      _
    $region41: #{tpu_custom_call.1} parent=1 // pred_fallthru
      _
    // Predicated region
    $region42: #{tpu_custom_call.1} parent=1 // pred_check
      _
    $region43: #{tpu_custom_call.1} parent=1 // pred_check_branch
      %56 = sbr.rel (0) target = $region45
    $region44: #{tpu_custom_call.1} parent=1 // pred_region
      %s58 = ssub.s32 8192, 8192
      %59 = vsyncadd [#allocation3], %s58
      %s60 = sshll.u32 [#allocation2], 4
      %s61 = int_to_ptr.vmem [resolvable:$true] %s60
      %66 = dma.hbm_to_vmem [thread:$0]  %s10, 8192, %s61, [#allocation3], 512, 512, 32
    $region45: #{tpu_custom_call.1} parent=1 // pred_fallthru
      _
    // Predicated region
    $region46: #{tpu_custom_call.1} parent=1 // pred_check
      _
    $region47: #{tpu_custom_call.1} parent=1 // pred_check_branch
      %68 = sbr.rel (0) target = $region49
    $region48: #{tpu_custom_call.1} parent=1 // pred_region
      _
    $region49: #{tpu_custom_call.1} parent=1 // pred_fallthru
      _
    // Predicated region
    $region50: #{tpu_custom_call.1} parent=1 // pred_check
      _
    $region51: #{tpu_custom_call.1} parent=1 // pred_check_branch
      %70 = sbr.rel (0) target = $region53
    $region52: #{tpu_custom_call.1} parent=1 // pred_region
      _
    $region53: #{tpu_custom_call.1} parent=1 // pred_fallthru
      _
    // Predicated region
    $region54: #{tpu_custom_call.1} parent=1 // pred_check
      _
    $region55: #{tpu_custom_call.1} parent=1 // pred_check_branch
      %72 = sbr.rel (0) target = $region57
    $region56: #{tpu_custom_call.1} parent=1 // pred_region
      _
    $region57: #{tpu_custom_call.1} parent=1 // pred_fallthru
      _
    // Predicated region
    $region58: #{tpu_custom_call.1} parent=1 // pred_check
      _
    $region59: #{tpu_custom_call.1} parent=1 // pred_check_branch
      %74 = sbr.rel (0) target = $region61
    $region60: #{tpu_custom_call.1} parent=1 // pred_region
      %s76 = ssub.s32 32768, 32768
      %77 = vsyncadd [#allocation6], %s76
      %s78 = sshll.u32 [#allocation5], 4
      %s79 = int_to_ptr.vmem [resolvable:$true] %s78
      %84 = dma.hbm_to_vmem [thread:$0]  %s14, 32768, %s79, [#allocation6], 256, 256, 16
    $region61: #{tpu_custom_call.1} parent=1 // pred_fallthru
      _
    // Predicated region
    $region62: #{tpu_custom_call.1} parent=1 // pred_check
      _
    $region63: #{tpu_custom_call.1} parent=1 // pred_check_branch
      %86 = sbr.rel (0) target = $region65
    $region64: #{tpu_custom_call.1} parent=1 // pred_region
      _
    $region65: #{tpu_custom_call.1} parent=1 // pred_fallthru
      _
    // Predicated region
    $region66: #{tpu_custom_call.1} parent=1 // pred_check
      _
    $region67: #{tpu_custom_call.1} parent=1 // pred_check_branch
      %88 = sbr.rel (0) target = $region69
    $region68: #{tpu_custom_call.1} parent=1 // pred_region
      _
    $region69: #{tpu_custom_call.1} parent=1 // pred_fallthru
      _
    // Predicated region
    $region70: #{tpu_custom_call.1} parent=1 // pred_check
      _
    $region71: #{tpu_custom_call.1} parent=1 // pred_check_branch
      %90 = sbr.rel (0) target = $region73
    $region72: #{tpu_custom_call.1} parent=1 // pred_region
      _
    $region73: #{tpu_custom_call.1} parent=1 // pred_fallthru
      _
    // Predicated region
    $region74: #{tpu_custom_call.1} parent=1 // pred_check
      _
    $region75: #{tpu_custom_call.1} parent=1 // pred_check_branch
      %92 = sbr.rel (0) target = $region77
    $region76: #{tpu_custom_call.1} parent=1 // pred_region
      %s94 = ssub.s32 8192, 8192
      %95 = vsyncadd [#allocation6], %s94
      %s96 = sshll.u32 [#allocation7], 4
      %s97 = int_to_ptr.vmem [resolvable:$true] %s96
      %102 = dma.hbm_to_vmem [thread:$0]  %s18, 8192, %s97, [#allocation6], 128, 128, 8
    $region77: #{tpu_custom_call.1} parent=1 // pred_fallthru
      _
    // Predicated region
    $region78: #{tpu_custom_call.1} parent=1 // pred_check
      _
    $region79: #{tpu_custom_call.1} parent=1 // pred_check_branch
      %104 = sbr.rel (0) target = $region81
    $region80: #{tpu_custom_call.1} parent=1 // pred_region
      _
    $region81: #{tpu_custom_call.1} parent=1 // pred_fallthru
      _
    // Predicated region
    $region82: #{tpu_custom_call.1} parent=1 // pred_check
      _
    $region83: #{tpu_custom_call.1} parent=1 // pred_check_branch
      %106 = sbr.rel (0) target = $region85
    $region84: #{tpu_custom_call.1} parent=1 // pred_region
      _
    $region85: #{tpu_custom_call.1} parent=1 // pred_fallthru
      _
    // Predicated region
    $region86: #{tpu_custom_call.1} parent=1 // pred_check
      _
    $region87: #{tpu_custom_call.1} parent=1 // pred_check_branch
      %108 = sbr.rel (0) target = $region89
    $region88: #{tpu_custom_call.1} parent=1 // pred_region
      _
    $region89: #{tpu_custom_call.1} parent=1 // pred_fallthru
      _
    // Predicated region
    $region90: #{tpu_custom_call.1} parent=1 // pred_check
      _
    $region91: #{tpu_custom_call.1} parent=1 // pred_check_branch
      %110 = sbr.rel (0) target = $region93
    $region92: #{tpu_custom_call.1} parent=1 // pred_region
      _
    $region93: #{tpu_custom_call.1} parent=1 // pred_fallthru
      _
    // Predicated region
    $region94: #{tpu_custom_call.1} parent=1 // pred_check
      _
    $region95: #{tpu_custom_call.1} parent=1 // pred_check_branch
      %112 = sbr.rel (0) target = $region97
    $region96: #{tpu_custom_call.1} parent=1 // pred_region
      _
    $region97: #{tpu_custom_call.1} parent=1 // pred_fallthru
      _
    // Predicated region
    $region98: #{tpu_custom_call.1} parent=1 // pred_check
      _
    $region99: #{tpu_custom_call.1} parent=1 // pred_check_branch
      %114 = sbr.rel (0) target = $region101
    $region100: #{tpu_custom_call.1} parent=1 // pred_region
      %115 = dma.done [#allocation3], 8192
    $region101: #{tpu_custom_call.1} parent=1 // pred_fallthru
      _
    // Predicated region
    $region102: #{tpu_custom_call.1} parent=1 // pred_check
      _
    $region103: #{tpu_custom_call.1} parent=1 // pred_check_branch
      %117 = sbr.rel (0) target = $region105
    $region104: #{tpu_custom_call.1} parent=1 // pred_region
      %118 = dma.done [#allocation6], 32768
    $region105: #{tpu_custom_call.1} parent=1 // pred_fallthru
      _
    // Predicated region
    $region106: #{tpu_custom_call.1} parent=1 // pred_check
      _
    $region107: #{tpu_custom_call.1} parent=1 // pred_check_branch
      %120 = sbr.rel (0) target = $region109
    $region108: #{tpu_custom_call.1} parent=1 // pred_region
      %121 = dma.done [#allocation6], 8192
    $region109: #{tpu_custom_call.1} parent=1 // pred_fallthru
      _
    %v123 = vld [vmem:[%s0] sm:$0xff]
    %v124 = vld [vmem:[%s0 + $0x8] sm:$0xff]
    %v125 = vld [vmem:[%s0 + $0x10] sm:$0xff]
    %v126 = vld [vmem:[%s0 + $0x18] sm:$0xff]
    %v127 = vld [vmem:[%s2] sm:$0xf]
    %129 = vset.pattern.permute.xlu0 0
    %130 = vperm.xlu0 %129, %v123
    %v131 = vpop.permute.xlu0 %130
    %134 = vset.pattern.permute.xlu0 0
    %135 = vperm.xlu0 %134, %v124
    %v136 = vpop.permute.xlu0 %135
    %139 = vset.pattern.permute.xlu0 0
    %140 = vperm.xlu0 %139, %v125
    %v141 = vpop.permute.xlu0 %140
    %144 = vset.pattern.permute.xlu0 0
    %145 = vperm.xlu0 %144, %v126
    %v146 = vpop.permute.xlu0 %145
    %v148 = vlaneseq
    %v149 = vshrl.u32 %v148, 7
    %v150 = vsub.s32 0, %v149
    %v151 = vrot.slane %v127, %v150
    %v152 = vmul.f32 %v131, %v151
    %v153 = vmul.f32 %v136, %v151
    %v154 = vmul.f32 %v141, %v151
    %v155 = vmul.f32 %v146, %v151
    %156 = vset.pattern.permute.xlu0 1
    %157 = vperm.xlu0 %156, %v123
    %v158 = vpop.permute.xlu0 %157
    %160 = vset.pattern.permute.xlu0 1
    %161 = vperm.xlu0 %160, %v124
    %v162 = vpop.permute.xlu0 %161
    %164 = vset.pattern.permute.xlu0 1
    %165 = vperm.xlu0 %164, %v125
    %v166 = vpop.permute.xlu0 %165
    %168 = vset.pattern.permute.xlu0 1
    %169 = vperm.xlu0 %168, %v126
    %v170 = vpop.permute.xlu0 %169
    %v172 = vlaneseq
    %v173 = vshrl.u32 %v172, 7
    %v174 = vsub.s32 1, %v173
    %v175 = vrot.slane %v127, %v174
    %v176 = vmul.f32 %v158, %v175
    %v177 = vmul.f32 %v162, %v175
    %v178 = vmul.f32 %v166, %v175
    %v179 = vmul.f32 %v170, %v175
    %v180 = vadd.f32 %v152, %v176
    %v181 = vadd.f32 %v153, %v177
    %v182 = vadd.f32 %v154, %v178
    %v183 = vadd.f32 %v155, %v179
    %184 = vset.pattern.permute.xlu0 2
    %185 = vperm.xlu0 %184, %v123
    %v186 = vpop.permute.xlu0 %185
    %188 = vset.pattern.permute.xlu0 2
    %189 = vperm.xlu0 %188, %v124
    %v190 = vpop.permute.xlu0 %189
    %192 = vset.pattern.permute.xlu0 2
    %193 = vperm.xlu0 %192, %v125
    %v194 = vpop.permute.xlu0 %193
    %196 = vset.pattern.permute.xlu0 2
    %197 = vperm.xlu0 %196, %v126
    %v198 = vpop.permute.xlu0 %197
    %v200 = vlaneseq
    %v201 = vshrl.u32 %v200, 7
    %v202 = vsub.s32 2, %v201
    %v203 = vrot.slane %v127, %v202
    %v204 = vmul.f32 %v186, %v203
    %v205 = vmul.f32 %v190, %v203
    %v206 = vmul.f32 %v194, %v203
    %v207 = vmul.f32 %v198, %v203
    %v208 = vadd.f32 %v180, %v204
    %v209 = vadd.f32 %v181, %v205
    %v210 = vadd.f32 %v182, %v206
    %v211 = vadd.f32 %v183, %v207
    %212 = vset.pattern.permute.xlu0 3
    %213 = vperm.xlu0 %212, %v123
    %v214 = vpop.permute.xlu0 %213
    %216 = vset.pattern.permute.xlu0 3
    %217 = vperm.xlu0 %216, %v124
    %v218 = vpop.permute.xlu0 %217
    %220 = vset.pattern.permute.xlu0 3
    %221 = vperm.xlu0 %220, %v125
    %v222 = vpop.permute.xlu0 %221
    %224 = vset.pattern.permute.xlu0 3
    %225 = vperm.xlu0 %224, %v126
    %v226 = vpop.permute.xlu0 %225
    %v228 = vlaneseq
    %v229 = vshrl.u32 %v228, 7
    %v230 = vsub.s32 3, %v229
    %v231 = vrot.slane %v127, %v230
    %v232 = vmul.f32 %v214, %v231
    %v233 = vmul.f32 %v218, %v231
    %v234 = vmul.f32 %v222, %v231
    %v235 = vmul.f32 %v226, %v231
    %v236 = vadd.f32 %v208, %v232
    %v237 = vadd.f32 %v209, %v233
    %v238 = vadd.f32 %v210, %v234
    %v239 = vadd.f32 %v211, %v235
    %v240 = vld [vmem:[%s3] sm:$0x1]
    %v242 = vlaneseq
    %v243 = vshrl.u32 %v242, 7
    %v244 = vsub.s32 0, %v243
    %v245 = vrot.slane %v240, %v244
    %v247 = vadd.f32 %v236, %v245
    %v248 = vadd.f32 %v237, %v245
    %v249 = vadd.f32 %v238, %v245
    %v250 = vadd.f32 %v239, %v245
    %v251 = vld [vmem:[%s4] sm:$0x1]
    %v252 = vld [vmem:[%s5] sm:$0x1]
    %vm253 = vcmask 261120
    %v255 = vsel %vm253, 1.0, 0
    %257 = vmatprep.subr.mxu0 0.0
    %258 = vmatpush1.msra.mxu0 %v247
    %259 = vmatprep.subr.mxu0 0.0
    %260 = vmatpush1.msra.mxu0 %v248
    %261 = vmatprep.subr.mxu0 0.0
    %262 = vmatpush1.msra.mxu0 %v249
    %263 = vmatprep.subr.mxu0 0.0
    %264 = vmatpush1.msra.mxu0 %v250
    %265 = vmatprep.subr.mxu0 0.0
    %266 = vmatpush1.msra.mxu0 0.0
    %267 = vmatprep.subr.mxu0 0.0
    %268 = vmatpush1.msra.mxu0 0.0
    %269 = vmatprep.subr.mxu0 0.0
    %270 = vmatpush1.msra.mxu0 0.0
    %271 = vmatprep.subr.mxu0 0.0
    %272 = vmatpush1.msra.mxu0 0.0
    %273 = vmatprep.subr.mxu0 0.0
    %274 = vmatpush1.msra.mxu0 0.0
    %275 = vmatprep.subr.mxu0 0.0
    %276 = vmatpush1.msra.mxu0 0.0
    %277 = vmatprep.subr.mxu0 0.0
    %278 = vmatpush1.msra.mxu0 0.0
    %279 = vmatprep.subr.mxu0 0.0
    %280 = vmatpush1.msra.mxu0 0.0
    %281 = vmatprep.subr.mxu0 0.0
    %282 = vmatpush1.msra.mxu0 0.0
    %283 = vmatprep.subr.mxu0 0.0
    %284 = vmatpush1.msra.mxu0 0.0
    %285 = vmatprep.subr.mxu0 0.0
    %286 = vmatpush1.msra.mxu0 0.0
    %287 = vmatprep.subr.mxu0 0.0
    %288 = vmatpush1.msra.mxu0 0.0
    %289 = vmatprep.subr.mxu0 0.0
    %290 = vmatpush1.msra.mxu0 0.0
    %291 = vmatprep.subr.mxu0 0.0
    %292 = vmatpush1.msra.mxu0 0.0
    %293 = vmatprep.subr.mxu0 0.0
    %294 = vmatpush1.msra.mxu0 0.0
    %295 = vmatprep.subr.mxu0 0.0
    %296 = vmatpush1.msra.mxu0 0.0
    %297 = vmatprep.subr.mxu0 0.0
    %298 = vmatpush1.msra.mxu0 0.0
    %299 = vmatprep.subr.mxu0 0.0
    %300 = vmatpush1.msra.mxu0 0.0
    %301 = vmatprep.subr.mxu0 0.0
    %302 = vmatpush1.msra.mxu0 0.0
    %303 = vmatprep.subr.mxu0 0.0
    %304 = vmatpush1.msra.mxu0 0.0
    %305 = vmatprep.subr.mxu0 0.0
    %306 = vmatpush1.msra.mxu0 0.0
    %307 = vmatprep.subr.mxu0 0.0
    %308 = vmatpush1.msra.mxu0 0.0
    %309 = vmatprep.subr.mxu0 0.0
    %310 = vmatpush1.msra.mxu0 0.0
    %311 = vmatprep.subr.mxu0 0.0
    %312 = vmatpush1.msra.mxu0 0.0
    %313 = vmatprep.subr.mxu0 0.0
    %314 = vmatpush1.msra.mxu0 0.0
    %315 = vmatprep.subr.mxu0 0.0
    %316 = vmatpush1.msra.mxu0 0.0
    %317 = vmatprep.subr.mxu0 0.0
    %318 = vmatpush1.msra.mxu0 0.0
    %319 = vmatprep.subr.mxu0 0.0
    %320 = vmatpush1.msra.mxu0 0.0
    %321 = vmatprep.mubr.f32.mxu0 0.0
    %322 = vmatmul.mubr.f32.gmra.mrb[0].mxu0 %v255
    %v323 = vpop.f32.mrb[0].mxu0
    %v324 = vadd.f32 0.0, %v323
    %v325 = vpop.f32.mrb[0].mxu0
    %326 = vdwg.mxu0
    %v327 = vmul.f32 %v247, %v247
    %v328 = vmul.f32 %v248, %v248
    %v329 = vmul.f32 %v249, %v249
    %v330 = vmul.f32 %v250, %v250
    %331 = vmatprep.subr.mxu0 0.0
    %332 = vmatpush1.msra.mxu0 %v327
    %333 = vmatprep.subr.mxu0 0.0
    %334 = vmatpush1.msra.mxu0 %v328
    %335 = vmatprep.subr.mxu0 0.0
    %336 = vmatpush1.msra.mxu0 %v329
    %337 = vmatprep.subr.mxu0 0.0
    %338 = vmatpush1.msra.mxu0 %v330
    %339 = vmatprep.subr.mxu0 0.0
    %340 = vmatpush1.msra.mxu0 0.0
    %341 = vmatprep.subr.mxu0 0.0
    %342 = vmatpush1.msra.mxu0 0.0
    %343 = vmatprep.subr.mxu0 0.0
    %344 = vmatpush1.msra.mxu0 0.0
    %345 = vmatprep.subr.mxu0 0.0
    %346 = vmatpush1.msra.mxu0 0.0
    %347 = vmatprep.subr.mxu0 0.0
    %348 = vmatpush1.msra.mxu0 0.0
    %349 = vmatprep.subr.mxu0 0.0
    %350 = vmatpush1.msra.mxu0 0.0
    %351 = vmatprep.subr.mxu0 0.0
    %352 = vmatpush1.msra.mxu0 0.0
    %353 = vmatprep.subr.mxu0 0.0
    %354 = vmatpush1.msra.mxu0 0.0
    %355 = vmatprep.subr.mxu0 0.0
    %356 = vmatpush1.msra.mxu0 0.0
    %357 = vmatprep.subr.mxu0 0.0
    %358 = vmatpush1.msra.mxu0 0.0
    %359 = vmatprep.subr.mxu0 0.0
    %360 = vmatpush1.msra.mxu0 0.0
    %361 = vmatprep.subr.mxu0 0.0
    %362 = vmatpush1.msra.mxu0 0.0
    %363 = vmatprep.subr.mxu0 0.0
    %364 = vmatpush1.msra.mxu0 0.0
    %365 = vmatprep.subr.mxu0 0.0
    %366 = vmatpush1.msra.mxu0 0.0
    %367 = vmatprep.subr.mxu0 0.0
    %368 = vmatpush1.msra.mxu0 0.0
    %369 = vmatprep.subr.mxu0 0.0
    %370 = vmatpush1.msra.mxu0 0.0
    %371 = vmatprep.subr.mxu0 0.0
    %372 = vmatpush1.msra.mxu0 0.0
    %373 = vmatprep.subr.mxu0 0.0
    %374 = vmatpush1.msra.mxu0 0.0
    %375 = vmatprep.subr.mxu0 0.0
    %376 = vmatpush1.msra.mxu0 0.0
    %377 = vmatprep.subr.mxu0 0.0
    %378 = vmatpush1.msra.mxu0 0.0
    %379 = vmatprep.subr.mxu0 0.0
    %380 = vmatpush1.msra.mxu0 0.0
    %381 = vmatprep.subr.mxu0 0.0
    %382 = vmatpush1.msra.mxu0 0.0
    %383 = vmatprep.subr.mxu0 0.0
    %384 = vmatpush1.msra.mxu0 0.0
    %385 = vmatprep.subr.mxu0 0.0
    %386 = vmatpush1.msra.mxu0 0.0
    %387 = vmatprep.subr.mxu0 0.0
    %388 = vmatpush1.msra.mxu0 0.0
    %389 = vmatprep.subr.mxu0 0.0
    %390 = vmatpush1.msra.mxu0 0.0
    %391 = vmatprep.subr.mxu0 0.0
    %392 = vmatpush1.msra.mxu0 0.0
    %393 = vmatprep.subr.mxu0 0.0
    %394 = vmatpush1.msra.mxu0 0.0
    %395 = vmatprep.mubr.f32.mxu0 0.0
    %396 = vmatmul.mubr.f32.gmra.mrb[0].mxu0 %v255
    %v397 = vpop.f32.mrb[0].mxu0
    %v398 = vadd.f32 0.0, %v397
    %v399 = vpop.f32.mrb[0].mxu0
    %400 = vdwg.mxu0
    %v401 = vmul.f32 %v324, 0.03125
    %v402 = vmul.f32 %v398, 0.03125
    %v403 = vmul.f32 %v401, %v401
    %v404 = vsub.f32 %v402, %v403
    %v405 = vmax.f32 %v404, 0.0
    %v406 = vadd.f32 %v405, 1e-05
    %v407 = vrsqrt.pop %v406
    %v408 = vmul.f32 %v251, %v407
    %v409 = vmul.f32 %v401, %v408
    %v410 = vsub.f32 %v252, %v409
    %v412 = vlaneseq
    %v413 = vshrl.u32 %v412, 7
    %v414 = vsub.s32 0, %v413
    %v415 = vrot.slane %v408, %v414
    %v417 = vmul.f32 %v247, %v415
    %v418 = vmul.f32 %v248, %v415
    %v419 = vmul.f32 %v249, %v415
    %v420 = vmul.f32 %v250, %v415
    %v422 = vlaneseq
    %v423 = vshrl.u32 %v422, 7
    %v424 = vsub.s32 0, %v423
    %v425 = vrot.slane %v410, %v424
    %v427 = vadd.f32 %v417, %v425
    %v428 = vadd.f32 %v418, %v425
    %v429 = vadd.f32 %v419, %v425
    %v430 = vadd.f32 %v420, %v425
    %v431 = vmax.f32 %v427, 0.0
    %v432 = vmax.f32 %v428, 0.0
    %v433 = vmax.f32 %v429, 0.0
    %v434 = vmax.f32 %v430, 0.0
    %v435 = vpack.c.bf16 %v432, %v431
    %v436 = vpack.c.bf16 %v434, %v433
    %v437 = vld [vmem:[%s6] sm:$0xf]
    %v438 = vld [vmem:[%s6 + $0x4] sm:$0xf]
    %v439 = vld [vmem:[%s6 + $0x8] sm:$0xf]
    %v440 = vld [vmem:[%s6 + $0xc] sm:$0xf]
    %v441 = vld [vmem:[%s6 + $0x10] sm:$0xf]
    %v442 = vld [vmem:[%s6 + $0x14] sm:$0xf]
    %v443 = vld [vmem:[%s6 + $0x18] sm:$0xf]
    %v444 = vld [vmem:[%s6 + $0x1c] sm:$0xf]
    %v445 = vld [vmem:[%s7] sm:$0x1]
    %v447 = vlaneseq
    %v448 = vshrl.u32 %v447, 7
    %v449 = vsub.s32 0, %v448
    %v450 = vrot.slane %v445, %v449
    %v460 = vunpack.c.l.b16 %v437
    %v461 = vunpack.c.l.b16 %v438
    %v462 = vunpack.c.l.b16 %v439
    %v463 = vunpack.c.l.b16 %v440
    %v464 = vunpack.c.l.b16 %v441
    %v465 = vunpack.c.l.b16 %v442
    %v466 = vunpack.c.l.b16 %v443
    %v467 = vunpack.c.l.b16 %v444
    %v468 = vpack.c.b16 %v461, %v460
    %v469 = vpack.c.b16 %v463, %v462
    %v470 = vpack.c.b16 %v465, %v464
    %v471 = vpack.c.b16 %v467, %v466
    %vm476 = vcmask 523264
    %v478 = vsel %vm476, %v435, 0
    %v481 = vsel %vm476, %v436, 0
    %483 = vmatprep.subr.bf16.mxu0 0
    %484 = vmatpush1.bf16.msra.mxu0 %v468
    %485 = vmatprep.subr.bf16.mxu0 0
    %486 = vmatpush1.bf16.msra.mxu0 %v469
    %487 = vmatprep.subr.bf16.mxu0 0
    %488 = vmatpush1.bf16.msra.mxu0 %v470
    %489 = vmatprep.subr.bf16.mxu0 0
    %490 = vmatpush1.bf16.msra.mxu0 %v471
    %491 = vmatprep.subr.bf16.mxu0 0
    %492 = vmatpush1.bf16.msra.mxu0 0
    %493 = vmatprep.subr.bf16.mxu0 0
    %494 = vmatpush1.bf16.msra.mxu0 0
    %495 = vmatprep.subr.bf16.mxu0 0
    %496 = vmatpush1.bf16.msra.mxu0 0
    %497 = vmatprep.subr.bf16.mxu0 0
    %498 = vmatpush1.bf16.msra.mxu0 0
    %499 = vmatprep.subr.bf16.mxu0 0
    %500 = vmatpush1.bf16.msra.mxu0 0
    %501 = vmatprep.subr.bf16.mxu0 0
    %502 = vmatpush1.bf16.msra.mxu0 0
    %503 = vmatprep.subr.bf16.mxu0 0
    %504 = vmatpush1.bf16.msra.mxu0 0
    %505 = vmatprep.subr.bf16.mxu0 0
    %506 = vmatpush1.bf16.msra.mxu0 0
    %507 = vmatprep.subr.bf16.mxu0 0
    %508 = vmatpush1.bf16.msra.mxu0 0
    %509 = vmatprep.subr.bf16.mxu0 0
    %510 = vmatpush1.bf16.msra.mxu0 0
    %511 = vmatprep.subr.bf16.mxu0 0
    %512 = vmatpush1.bf16.msra.mxu0 0
    %513 = vmatprep.subr.bf16.mxu0 0
    %514 = vmatpush1.bf16.msra.mxu0 0
    %515 = vmatprep.mubr.bf16.mxu0 0
    %516 = vmatmul.mubr.bf16.gmra.mrb[0].mxu0 %v478
    %v517 = vpop.f32.mrb[0].mxu0
    %v518 = vadd.f32 %v450, %v517
    %v519 = vpop.f32.mrb[0].mxu0
    %v520 = vpop.f32.mrb[0].mxu0
    %v521 = vadd.f32 %v450, %v520
    %v522 = vpop.f32.mrb[0].mxu0
    %523 = vmatprep.mubr.bf16.mxu0 0
    %524 = vmatmul.mubr.bf16.gmra.mrb[0].mxu0 %v481
    %v525 = vpop.f32.mrb[0].mxu0
    %v526 = vadd.f32 %v450, %v525
    %v527 = vpop.f32.mrb[0].mxu0
    %v528 = vpop.f32.mrb[0].mxu0
    %v529 = vadd.f32 %v450, %v528
    %v530 = vpop.f32.mrb[0].mxu0
    %531 = vdwg.mxu0
    %v532 = vld [vmem:[%s8] sm:$0x1]
    %v533 = vld [vmem:[%s9] sm:$0x1]
    %534 = vmatprep.subr.mxu0 0.0
    %535 = vmatpush1.msra.mxu0 %v518
    %536 = vmatprep.subr.mxu0 0.0
    %537 = vmatpush1.msra.mxu0 %v521
    %538 = vmatprep.subr.mxu0 0.0
    %539 = vmatpush1.msra.mxu0 %v526
    %540 = vmatprep.subr.mxu0 0.0
    %541 = vmatpush1.msra.mxu0 %v529
    %542 = vmatprep.subr.mxu0 0.0
    %543 = vmatpush1.msra.mxu0 0.0
    %544 = vmatprep.subr.mxu0 0.0
    %545 = vmatpush1.msra.mxu0 0.0
    %546 = vmatprep.subr.mxu0 0.0
    %547 = vmatpush1.msra.mxu0 0.0
    %548 = vmatprep.subr.mxu0 0.0
    %549 = vmatpush1.msra.mxu0 0.0
    %550 = vmatprep.subr.mxu0 0.0
    %551 = vmatpush1.msra.mxu0 0.0
    %552 = vmatprep.subr.mxu0 0.0
    %553 = vmatpush1.msra.mxu0 0.0
    %554 = vmatprep.subr.mxu0 0.0
    %555 = vmatpush1.msra.mxu0 0.0
    %556 = vmatprep.subr.mxu0 0.0
    %557 = vmatpush1.msra.mxu0 0.0
    %558 = vmatprep.subr.mxu0 0.0
    %559 = vmatpush1.msra.mxu0 0.0
    %560 = vmatprep.subr.mxu0 0.0
    %561 = vmatpush1.msra.mxu0 0.0
    %562 = vmatprep.subr.mxu0 0.0
    %563 = vmatpush1.msra.mxu0 0.0
    %564 = vmatprep.subr.mxu0 0.0
    %565 = vmatpush1.msra.mxu0 0.0
    %566 = vmatprep.subr.mxu0 0.0
    %567 = vmatpush1.msra.mxu0 0.0
    %568 = vmatprep.subr.mxu0 0.0
    %569 = vmatpush1.msra.mxu0 0.0
    %570 = vmatprep.subr.mxu0 0.0
    %571 = vmatpush1.msra.mxu0 0.0
    %572 = vmatprep.subr.mxu0 0.0
    %573 = vmatpush1.msra.mxu0 0.0
    %574 = vmatprep.subr.mxu0 0.0
    %575 = vmatpush1.msra.mxu0 0.0
    %576 = vmatprep.subr.mxu0 0.0
    %577 = vmatpush1.msra.mxu0 0.0
    %578 = vmatprep.subr.mxu0 0.0
    %579 = vmatpush1.msra.mxu0 0.0
    %580 = vmatprep.subr.mxu0 0.0
    %581 = vmatpush1.msra.mxu0 0.0
    %582 = vmatprep.subr.mxu0 0.0
    %583 = vmatpush1.msra.mxu0 0.0
    %584 = vmatprep.subr.mxu0 0.0
    %585 = vmatpush1.msra.mxu0 0.0
    %586 = vmatprep.subr.mxu0 0.0
    %587 = vmatpush1.msra.mxu0 0.0
    %588 = vmatprep.subr.mxu0 0.0
    %589 = vmatpush1.msra.mxu0 0.0
    %590 = vmatprep.subr.mxu0 0.0
    %591 = vmatpush1.msra.mxu0 0.0
    %592 = vmatprep.subr.mxu0 0.0
    %593 = vmatpush1.msra.mxu0 0.0
    %594 = vmatprep.subr.mxu0 0.0
    %595 = vmatpush1.msra.mxu0 0.0
    %596 = vmatprep.subr.mxu0 0.0
    %597 = vmatpush1.msra.mxu0 0.0
    %598 = vmatprep.mubr.f32.mxu0 0.0
    %599 = vmatmul.mubr.f32.gmra.mrb[0].mxu0 %v255
    %v600 = vpop.f32.mrb[0].mxu0
    %v601 = vadd.f32 0.0, %v600
    %v602 = vpop.f32.mrb[0].mxu0
    %603 = vdwg.mxu0
    %v604 = vmul.f32 %v518, %v518
    %v605 = vmul.f32 %v521, %v521
    %v606 = vmul.f32 %v526, %v526
    %v607 = vmul.f32 %v529, %v529
    %608 = vmatprep.subr.mxu0 0.0
    %609 = vmatpush1.msra.mxu0 %v604
    %610 = vmatprep.subr.mxu0 0.0
    %611 = vmatpush1.msra.mxu0 %v605
    %612 = vmatprep.subr.mxu0 0.0
    %613 = vmatpush1.msra.mxu0 %v606
    %614 = vmatprep.subr.mxu0 0.0
    %615 = vmatpush1.msra.mxu0 %v607
    %616 = vmatprep.subr.mxu0 0.0
    %617 = vmatpush1.msra.mxu0 0.0
    %618 = vmatprep.subr.mxu0 0.0
    %619 = vmatpush1.msra.mxu0 0.0
    %620 = vmatprep.subr.mxu0 0.0
    %621 = vmatpush1.msra.mxu0 0.0
    %622 = vmatprep.subr.mxu0 0.0
    %623 = vmatpush1.msra.mxu0 0.0
    %624 = vmatprep.subr.mxu0 0.0
    %625 = vmatpush1.msra.mxu0 0.0
    %626 = vmatprep.subr.mxu0 0.0
    %627 = vmatpush1.msra.mxu0 0.0
    %628 = vmatprep.subr.mxu0 0.0
    %629 = vmatpush1.msra.mxu0 0.0
    %630 = vmatprep.subr.mxu0 0.0
    %631 = vmatpush1.msra.mxu0 0.0
    %632 = vmatprep.subr.mxu0 0.0
    %633 = vmatpush1.msra.mxu0 0.0
    %634 = vmatprep.subr.mxu0 0.0
    %635 = vmatpush1.msra.mxu0 0.0
    %636 = vmatprep.subr.mxu0 0.0
    %637 = vmatpush1.msra.mxu0 0.0
    %638 = vmatprep.subr.mxu0 0.0
    %639 = vmatpush1.msra.mxu0 0.0
    %640 = vmatprep.subr.mxu0 0.0
    %641 = vmatpush1.msra.mxu0 0.0
    %642 = vmatprep.subr.mxu0 0.0
    %643 = vmatpush1.msra.mxu0 0.0
    %644 = vmatprep.subr.mxu0 0.0
    %645 = vmatpush1.msra.mxu0 0.0
    %646 = vmatprep.subr.mxu0 0.0
    %647 = vmatpush1.msra.mxu0 0.0
    %648 = vmatprep.subr.mxu0 0.0
    %649 = vmatpush1.msra.mxu0 0.0
    %650 = vmatprep.subr.mxu0 0.0
    %651 = vmatpush1.msra.mxu0 0.0
    %652 = vmatprep.subr.mxu0 0.0
    %653 = vmatpush1.msra.mxu0 0.0
    %654 = vmatprep.subr.mxu0 0.0
    %655 = vmatpush1.msra.mxu0 0.0
    %656 = vmatprep.subr.mxu0 0.0
    %657 = vmatpush1.msra.mxu0 0.0
    %658 = vmatprep.subr.mxu0 0.0
    %659 = vmatpush1.msra.mxu0 0.0
    %660 = vmatprep.subr.mxu0 0.0
    %661 = vmatpush1.msra.mxu0 0.0
    %662 = vmatprep.subr.mxu0 0.0
    %663 = vmatpush1.msra.mxu0 0.0
    %664 = vmatprep.subr.mxu0 0.0
    %665 = vmatpush1.msra.mxu0 0.0
    %666 = vmatprep.subr.mxu0 0.0
    %667 = vmatpush1.msra.mxu0 0.0
    %668 = vmatprep.subr.mxu0 0.0
    %669 = vmatpush1.msra.mxu0 0.0
    %670 = vmatprep.subr.mxu0 0.0
    %671 = vmatpush1.msra.mxu0 0.0
    %672 = vmatprep.mubr.f32.mxu0 0.0
    %673 = vmatmul.mubr.f32.gmra.mrb[0].mxu0 %v255
    %v674 = vpop.f32.mrb[0].mxu0
    %v675 = vadd.f32 0.0, %v674
    %v676 = vpop.f32.mrb[0].mxu0
    %677 = vdwg.mxu0
    %v678 = vmul.f32 %v601, 0.03125
    %v679 = vmul.f32 %v675, 0.03125
    %v680 = vmul.f32 %v678, %v678
    %v681 = vsub.f32 %v679, %v680
    %v682 = vmax.f32 %v681, 0.0
    %v683 = vadd.f32 %v682, 1e-05
    %v684 = vrsqrt.pop %v683
    %v685 = vmul.f32 %v532, %v684
    %v686 = vmul.f32 %v678, %v685
    %v687 = vsub.f32 %v533, %v686
    %v689 = vlaneseq
    %v690 = vshrl.u32 %v689, 7
    %v691 = vsub.s32 0, %v690
    %v692 = vrot.slane %v685, %v691
    %v694 = vmul.f32 %v518, %v692
    %v695 = vmul.f32 %v521, %v692
    %v696 = vmul.f32 %v526, %v692
    %v697 = vmul.f32 %v529, %v692
    %v699 = vlaneseq
    %v700 = vshrl.u32 %v699, 7
    %v701 = vsub.s32 0, %v700
    %v702 = vrot.slane %v687, %v701
    %v704 = vadd.f32 %v694, %v702
    %v705 = vadd.f32 %v695, %v702
    %v706 = vadd.f32 %v696, %v702
    %v707 = vadd.f32 %v697, %v702
    %v708 = vmax.f32 %v704, 0.0
    %v709 = vmax.f32 %v705, 0.0
    %v710 = vmax.f32 %v706, 0.0
    %v711 = vmax.f32 %v707, 0.0
    %v712 = vpack.c.bf16 %v709, %v708
    %v713 = vpack.c.bf16 %v711, %v710
    %v714 = vld [vmem:[#allocation2] sm:$0xff]
    %v715 = vld [vmem:[#allocation2 + $0x8] sm:$0xff]
    %v716 = vld [vmem:[#allocation2 + $0x10] sm:$0xff]
    %v717 = vld [vmem:[#allocation2 + $0x18] sm:$0xff]
    %v718 = vld [vmem:[#allocation2 + $0x20] sm:$0xff]
    %v719 = vld [vmem:[#allocation2 + $0x28] sm:$0xff]
    %v720 = vld [vmem:[#allocation2 + $0x30] sm:$0xff]
    %v721 = vld [vmem:[#allocation2 + $0x38] sm:$0xff]
    %v722 = vld [vmem:[#allocation2 + $0x40] sm:$0xff]
    %v723 = vld [vmem:[#allocation2 + $0x48] sm:$0xff]
    %v724 = vld [vmem:[#allocation2 + $0x50] sm:$0xff]
    %v725 = vld [vmem:[#allocation2 + $0x58] sm:$0xff]
    %v726 = vld [vmem:[#allocation2 + $0x60] sm:$0xff]
    %v727 = vld [vmem:[#allocation2 + $0x68] sm:$0xff]
    %v728 = vld [vmem:[#allocation2 + $0x70] sm:$0xff]
    %v729 = vld [vmem:[#allocation2 + $0x78] sm:$0xff]
    %v730 = vld [vmem:[#allocation2 + $0x80] sm:$0xff]
    %v731 = vld [vmem:[#allocation2 + $0x88] sm:$0xff]
    %v732 = vld [vmem:[#allocation2 + $0x90] sm:$0xff]
    %v733 = vld [vmem:[#allocation2 + $0x98] sm:$0xff]
    %v734 = vld [vmem:[#allocation2 + $0xa0] sm:$0xff]
    %v735 = vld [vmem:[#allocation2 + $0xa8] sm:$0xff]
    %v736 = vld [vmem:[#allocation2 + $0xb0] sm:$0xff]
    %v737 = vld [vmem:[#allocation2 + $0xb8] sm:$0xff]
    %v738 = vld [vmem:[#allocation2 + $0xc0] sm:$0xff]
    %v739 = vld [vmem:[#allocation2 + $0xc8] sm:$0xff]
    %v740 = vld [vmem:[#allocation2 + $0xd0] sm:$0xff]
    %v741 = vld [vmem:[#allocation2 + $0xd8] sm:$0xff]
    %v742 = vld [vmem:[#allocation2 + $0xe0] sm:$0xff]
    %v743 = vld [vmem:[#allocation2 + $0xe8] sm:$0xff]
    %v744 = vld [vmem:[#allocation2 + $0xf0] sm:$0xff]
    %v745 = vld [vmem:[#allocation2 + $0xf8] sm:$0xff]
    %v746 = vld [vmem:[#allocation2 + $0x100] sm:$0xff]
    %v747 = vld [vmem:[#allocation2 + $0x108] sm:$0xff]
    %v748 = vld [vmem:[#allocation2 + $0x110] sm:$0xff]
    %v749 = vld [vmem:[#allocation2 + $0x118] sm:$0xff]
    %v750 = vld [vmem:[#allocation2 + $0x120] sm:$0xff]
    %v751 = vld [vmem:[#allocation2 + $0x128] sm:$0xff]
    %v752 = vld [vmem:[#allocation2 + $0x130] sm:$0xff]
    %v753 = vld [vmem:[#allocation2 + $0x138] sm:$0xff]
    %v754 = vld [vmem:[#allocation2 + $0x140] sm:$0xff]
    %v755 = vld [vmem:[#allocation2 + $0x148] sm:$0xff]
    %v756 = vld [vmem:[#allocation2 + $0x150] sm:$0xff]
    %v757 = vld [vmem:[#allocation2 + $0x158] sm:$0xff]
    %v758 = vld [vmem:[#allocation2 + $0x160] sm:$0xff]
    %v759 = vld [vmem:[#allocation2 + $0x168] sm:$0xff]
    %v760 = vld [vmem:[#allocation2 + $0x170] sm:$0xff]
    %v761 = vld [vmem:[#allocation2 + $0x178] sm:$0xff]
    %v762 = vld [vmem:[#allocation2 + $0x180] sm:$0xff]
    %v763 = vld [vmem:[#allocation2 + $0x188] sm:$0xff]
    %v764 = vld [vmem:[#allocation2 + $0x190] sm:$0xff]
    %v765 = vld [vmem:[#allocation2 + $0x198] sm:$0xff]
    %v766 = vld [vmem:[#allocation2 + $0x1a0] sm:$0xff]
    %v767 = vld [vmem:[#allocation2 + $0x1a8] sm:$0xff]
    %v768 = vld [vmem:[#allocation2 + $0x1b0] sm:$0xff]
    %v769 = vld [vmem:[#allocation2 + $0x1b8] sm:$0xff]
    %v770 = vld [vmem:[#allocation2 + $0x1c0] sm:$0xff]
    %v771 = vld [vmem:[#allocation2 + $0x1c8] sm:$0xff]
    %v772 = vld [vmem:[#allocation2 + $0x1d0] sm:$0xff]
    %v773 = vld [vmem:[#allocation2 + $0x1d8] sm:$0xff]
    %v774 = vld [vmem:[#allocation2 + $0x1e0] sm:$0xff]
    %v775 = vld [vmem:[#allocation2 + $0x1e8] sm:$0xff]
    %v776 = vld [vmem:[#allocation2 + $0x1f0] sm:$0xff]
    %v777 = vld [vmem:[#allocation2 + $0x1f8] sm:$0xff]
    %v778 = vld [vmem:[%s11] sm:$0xff]
    %v780 = vlaneseq
    %v781 = vshrl.u32 %v780, 7
    %v782 = vsub.s32 0, %v781
    %v783 = vrot.slane %v778, %v782
    %v784 = vlaneseq
    %v785 = vshrl.u32 %v784, 7
    %v786 = vsub.s32 1, %v785
    %v787 = vrot.slane %v778, %v786
    %v788 = vlaneseq
    %v789 = vshrl.u32 %v788, 7
    %v790 = vsub.s32 2, %v789
    %v791 = vrot.slane %v778, %v790
    %v792 = vlaneseq
    %v793 = vshrl.u32 %v792, 7
    %v794 = vsub.s32 3, %v793
    %v795 = vrot.slane %v778, %v794
    %v796 = vlaneseq
    %v797 = vshrl.u32 %v796, 7
    %v798 = vsub.s32 4, %v797
    %v799 = vrot.slane %v778, %v798
    %v800 = vlaneseq
    %v801 = vshrl.u32 %v800, 7
    %v802 = vsub.s32 5, %v801
    %v803 = vrot.slane %v778, %v802
    %v804 = vlaneseq
    %v805 = vshrl.u32 %v804, 7
    %v806 = vsub.s32 6, %v805
    %v807 = vrot.slane %v778, %v806
    %v808 = vlaneseq
    %v809 = vshrl.u32 %v808, 7
    %v810 = vsub.s32 7, %v809
    %v811 = vrot.slane %v778, %v810
    %v884 = vunpack.c.l.b16 %v714
    %v885 = vunpack.c.h.b16 %v714
    %v886 = vunpack.c.l.b16 %v715
    %v887 = vunpack.c.h.b16 %v715
    %v888 = vunpack.c.l.b16 %v716
    %v889 = vunpack.c.h.b16 %v716
    %v890 = vunpack.c.l.b16 %v717
    %v891 = vunpack.c.h.b16 %v717
    %v892 = vunpack.c.l.b16 %v718
    %v893 = vunpack.c.h.b16 %v718
    %v894 = vunpack.c.l.b16 %v719
    %v895 = vunpack.c.h.b16 %v719
    %v896 = vunpack.c.l.b16 %v720
    %v897 = vunpack.c.h.b16 %v720
    %v898 = vunpack.c.l.b16 %v721
    %v899 = vunpack.c.h.b16 %v721
    %v900 = vunpack.c.l.b16 %v722
    %v901 = vunpack.c.h.b16 %v722
    %v902 = vunpack.c.l.b16 %v723
    %v903 = vunpack.c.h.b16 %v723
    %v904 = vunpack.c.l.b16 %v724
    %v905 = vunpack.c.h.b16 %v724
    %v906 = vunpack.c.l.b16 %v725
    %v907 = vunpack.c.h.b16 %v725
    %v908 = vunpack.c.l.b16 %v726
    %v909 = vunpack.c.h.b16 %v726
    %v910 = vunpack.c.l.b16 %v727
    %v911 = vunpack.c.h.b16 %v727
    %v912 = vunpack.c.l.b16 %v728
    %v913 = vunpack.c.h.b16 %v728
    %v914 = vunpack.c.l.b16 %v729
    %v915 = vunpack.c.h.b16 %v729
    %v916 = vunpack.c.l.b16 %v730
    %v917 = vunpack.c.h.b16 %v730
    %v918 = vunpack.c.l.b16 %v731
    %v919 = vunpack.c.h.b16 %v731
    %v920 = vunpack.c.l.b16 %v732
    %v921 = vunpack.c.h.b16 %v732
    %v922 = vunpack.c.l.b16 %v733
    %v923 = vunpack.c.h.b16 %v733
    %v924 = vunpack.c.l.b16 %v734
    %v925 = vunpack.c.h.b16 %v734
    %v926 = vunpack.c.l.b16 %v735
    %v927 = vunpack.c.h.b16 %v735
    %v928 = vunpack.c.l.b16 %v736
    %v929 = vunpack.c.h.b16 %v736
    %v930 = vunpack.c.l.b16 %v737
    %v931 = vunpack.c.h.b16 %v737
    %v932 = vunpack.c.l.b16 %v738
    %v933 = vunpack.c.h.b16 %v738
    %v934 = vunpack.c.l.b16 %v739
    %v935 = vunpack.c.h.b16 %v739
    %v936 = vunpack.c.l.b16 %v740
    %v937 = vunpack.c.h.b16 %v740
    %v938 = vunpack.c.l.b16 %v741
    %v939 = vunpack.c.h.b16 %v741
    %v940 = vunpack.c.l.b16 %v742
    %v941 = vunpack.c.h.b16 %v742
    %v942 = vunpack.c.l.b16 %v743
    %v943 = vunpack.c.h.b16 %v743
    %v944 = vunpack.c.l.b16 %v744
    %v945 = vunpack.c.h.b16 %v744
    %v946 = vunpack.c.l.b16 %v745
    %v947 = vunpack.c.h.b16 %v745
    %v948 = vunpack.c.l.b16 %v746
    %v949 = vunpack.c.h.b16 %v746
    %v950 = vunpack.c.l.b16 %v747
    %v951 = vunpack.c.h.b16 %v747
    %v952 = vunpack.c.l.b16 %v748
    %v953 = vunpack.c.h.b16 %v748
    %v954 = vunpack.c.l.b16 %v749
    %v955 = vunpack.c.h.b16 %v749
    %v956 = vunpack.c.l.b16 %v750
    %v957 = vunpack.c.h.b16 %v750
    %v958 = vunpack.c.l.b16 %v751
    %v959 = vunpack.c.h.b16 %v751
    %v960 = vunpack.c.l.b16 %v752
    %v961 = vunpack.c.h.b16 %v752
    %v962 = vunpack.c.l.b16 %v753
    %v963 = vunpack.c.h.b16 %v753
    %v964 = vunpack.c.l.b16 %v754
    %v965 = vunpack.c.h.b16 %v754
    %v966 = vunpack.c.l.b16 %v755
    %v967 = vunpack.c.h.b16 %v755
    %v968 = vunpack.c.l.b16 %v756
    %v969 = vunpack.c.h.b16 %v756
    %v970 = vunpack.c.l.b16 %v757
    %v971 = vunpack.c.h.b16 %v757
    %v972 = vunpack.c.l.b16 %v758
    %v973 = vunpack.c.h.b16 %v758
    %v974 = vunpack.c.l.b16 %v759
    %v975 = vunpack.c.h.b16 %v759
    %v976 = vunpack.c.l.b16 %v760
    %v977 = vunpack.c.h.b16 %v760
    %v978 = vunpack.c.l.b16 %v761
    %v979 = vunpack.c.h.b16 %v761
    %v980 = vunpack.c.l.b16 %v762
    %v981 = vunpack.c.h.b16 %v762
    %v982 = vunpack.c.l.b16 %v763
    %v983 = vunpack.c.h.b16 %v763
    %v984 = vunpack.c.l.b16 %v764
    %v985 = vunpack.c.h.b16 %v764
    %v986 = vunpack.c.l.b16 %v765
    %v987 = vunpack.c.h.b16 %v765
    %v988 = vunpack.c.l.b16 %v766
    %v989 = vunpack.c.h.b16 %v766
    %v990 = vunpack.c.l.b16 %v767
    %v991 = vunpack.c.h.b16 %v767
    %v992 = vunpack.c.l.b16 %v768
    %v993 = vunpack.c.h.b16 %v768
    %v994 = vunpack.c.l.b16 %v769
    %v995 = vunpack.c.h.b16 %v769
    %v996 = vunpack.c.l.b16 %v770
    %v997 = vunpack.c.h.b16 %v770
    %v998 = vunpack.c.l.b16 %v771
    %v999 = vunpack.c.h.b16 %v771
    %v1000 = vunpack.c.l.b16 %v772
    %v1001 = vunpack.c.h.b16 %v772
    %v1002 = vunpack.c.l.b16 %v773
    %v1003 = vunpack.c.h.b16 %v773
    %v1004 = vunpack.c.l.b16 %v774
    %v1005 = vunpack.c.h.b16 %v774
    %v1006 = vunpack.c.l.b16 %v775
    %v1007 = vunpack.c.h.b16 %v775
    %v1008 = vunpack.c.l.b16 %v776
    %v1009 = vunpack.c.h.b16 %v776
    %v1010 = vunpack.c.l.b16 %v777
    %v1011 = vunpack.c.h.b16 %v777
    %v1012 = vpack.c.b16 %v892, %v884
    %v1013 = vpack.c.b16 %v893, %v885
    %v1014 = vpack.c.b16 %v894, %v886
    %v1015 = vpack.c.b16 %v895, %v887
    %v1016 = vpack.c.b16 %v896, %v888
    %v1017 = vpack.c.b16 %v897, %v889
    %v1018 = vpack.c.b16 %v898, %v890
    %v1019 = vpack.c.b16 %v899, %v891
    %v1020 = vpack.c.b16 %v908, %v900
    %v1021 = vpack.c.b16 %v909, %v901
    %v1022 = vpack.c.b16 %v910, %v902
    %v1023 = vpack.c.b16 %v911, %v903
    %v1024 = vpack.c.b16 %v912, %v904
    %v1025 = vpack.c.b16 %v913, %v905
    %v1026 = vpack.c.b16 %v914, %v906
    %v1027 = vpack.c.b16 %v915, %v907
    %v1028 = vpack.c.b16 %v924, %v916
    %v1029 = vpack.c.b16 %v925, %v917
    %v1030 = vpack.c.b16 %v926, %v918
    %v1031 = vpack.c.b16 %v927, %v919
    %v1032 = vpack.c.b16 %v928, %v920
    %v1033 = vpack.c.b16 %v929, %v921
    %v1034 = vpack.c.b16 %v930, %v922
    %v1035 = vpack.c.b16 %v931, %v923
    %v1036 = vpack.c.b16 %v940, %v932
    %v1037 = vpack.c.b16 %v941, %v933
    %v1038 = vpack.c.b16 %v942, %v934
    %v1039 = vpack.c.b16 %v943, %v935
    %v1040 = vpack.c.b16 %v944, %v936
    %v1041 = vpack.c.b16 %v945, %v937
    %v1042 = vpack.c.b16 %v946, %v938
    %v1043 = vpack.c.b16 %v947, %v939
    %v1044 = vpack.c.b16 %v956, %v948
    %v1045 = vpack.c.b16 %v957, %v949
    %v1046 = vpack.c.b16 %v958, %v950
    %v1047 = vpack.c.b16 %v959, %v951
    %v1048 = vpack.c.b16 %v960, %v952
    %v1049 = vpack.c.b16 %v961, %v953
    %v1050 = vpack.c.b16 %v962, %v954
    %v1051 = vpack.c.b16 %v963, %v955
    %v1052 = vpack.c.b16 %v972, %v964
    %v1053 = vpack.c.b16 %v973, %v965
    %v1054 = vpack.c.b16 %v974, %v966
    %v1055 = vpack.c.b16 %v975, %v967
    %v1056 = vpack.c.b16 %v976, %v968
    %v1057 = vpack.c.b16 %v977, %v969
    %v1058 = vpack.c.b16 %v978, %v970
    %v1059 = vpack.c.b16 %v979, %v971
    %v1060 = vpack.c.b16 %v988, %v980
    %v1061 = vpack.c.b16 %v989, %v981
    %v1062 = vpack.c.b16 %v990, %v982
    %v1063 = vpack.c.b16 %v991, %v983
    %v1064 = vpack.c.b16 %v992, %v984
    %v1065 = vpack.c.b16 %v993, %v985
    %v1066 = vpack.c.b16 %v994, %v986
    %v1067 = vpack.c.b16 %v995, %v987
    %v1068 = vpack.c.b16 %v1004, %v996
    %v1069 = vpack.c.b16 %v1005, %v997
    %v1070 = vpack.c.b16 %v1006, %v998
    %v1071 = vpack.c.b16 %v1007, %v999
    %v1072 = vpack.c.b16 %v1008, %v1000
    %v1073 = vpack.c.b16 %v1009, %v1001
    %v1074 = vpack.c.b16 %v1010, %v1002
    %v1075 = vpack.c.b16 %v1011, %v1003
    %1140 = vmatprep.subr.bf16.mxu0 %v1013
    %1141 = vmatpush1.bf16.msra.mxu0 %v1012
    %1142 = vmatprep.subr.bf16.mxu0 %v1021
    %1143 = vmatpush1.bf16.msra.mxu0 %v1020
    %1144 = vmatprep.subr.bf16.mxu0 %v1029
    %1145 = vmatpush1.bf16.msra.mxu0 %v1028
    %1146 = vmatprep.subr.bf16.mxu0 %v1037
    %1147 = vmatpush1.bf16.msra.mxu0 %v1036
    %1148 = vmatprep.subr.bf16.mxu0 %v1045
    %1149 = vmatpush1.bf16.msra.mxu0 %v1044
    %1150 = vmatprep.subr.bf16.mxu0 %v1053
    %1151 = vmatpush1.bf16.msra.mxu0 %v1052
    %1152 = vmatprep.subr.bf16.mxu0 %v1061
    %1153 = vmatpush1.bf16.msra.mxu0 %v1060
    %1154 = vmatprep.subr.bf16.mxu0 %v1069
    %1155 = vmatpush1.bf16.msra.mxu0 %v1068
    %1156 = vmatprep.subr.bf16.mxu0 0
    %1157 = vmatpush1.bf16.msra.mxu0 0
    %1158 = vmatprep.subr.bf16.mxu0 0
    %1159 = vmatpush1.bf16.msra.mxu0 0
    %1160 = vmatprep.subr.bf16.mxu0 0
    %1161 = vmatpush1.bf16.msra.mxu0 0
    %1162 = vmatprep.subr.bf16.mxu0 0
    %1163 = vmatpush1.bf16.msra.mxu0 0
    %1164 = vmatprep.subr.bf16.mxu0 0
    %1165 = vmatpush1.bf16.msra.mxu0 0
    %1166 = vmatprep.subr.bf16.mxu0 0
    %1167 = vmatpush1.bf16.msra.mxu0 0
    %1168 = vmatprep.subr.bf16.mxu0 0
    %1169 = vmatpush1.bf16.msra.mxu0 0
    %1170 = vmatprep.subr.bf16.mxu0 0
    %1171 = vmatpush1.bf16.msra.mxu0 0
    %1172 = vmatprep.mubr.bf16.mxu0 0
    %1173 = vmatmul.mubr.bf16.gmra.mrb[0].mxu0 %v712
    %v1174 = vpop.f32.mrb[0].mxu0
    %v1175 = vadd.f32 %v783, %v1174
    %v1176 = vpop.f32.mrb[0].mxu0
    %v1177 = vadd.f32 %v787, %v1176
    %v1178 = vpop.f32.mrb[0].mxu0
    %v1179 = vadd.f32 %v783, %v1178
    %v1180 = vpop.f32.mrb[0].mxu0
    %v1181 = vadd.f32 %v787, %v1180
    %1182 = vmatprep.mubr.bf16.mxu0 0
    %1183 = vmatmul.mubr.bf16.gmra.mrb[0].mxu0 %v713
    %v1184 = vpop.f32.mrb[0].mxu0
    %v1185 = vadd.f32 %v783, %v1184
    %v1186 = vpop.f32.mrb[0].mxu0
    %v1187 = vadd.f32 %v787, %v1186
    %v1188 = vpop.f32.mrb[0].mxu0
    %v1189 = vadd.f32 %v783, %v1188
    %v1190 = vpop.f32.mrb[0].mxu0
    %v1191 = vadd.f32 %v787, %v1190
    %1192 = vdwg.mxu0
    %1193 = vmatprep.subr.bf16.mxu0 %v1015
    %1194 = vmatpush1.bf16.msra.mxu0 %v1014
    %1195 = vmatprep.subr.bf16.mxu0 %v1023
    %1196 = vmatpush1.bf16.msra.mxu0 %v1022
    %1197 = vmatprep.subr.bf16.mxu0 %v1031
    %1198 = vmatpush1.bf16.msra.mxu0 %v1030
    %1199 = vmatprep.subr.bf16.mxu0 %v1039
    %1200 = vmatpush1.bf16.msra.mxu0 %v1038
    %1201 = vmatprep.subr.bf16.mxu0 %v1047
    %1202 = vmatpush1.bf16.msra.mxu0 %v1046
    %1203 = vmatprep.subr.bf16.mxu0 %v1055
    %1204 = vmatpush1.bf16.msra.mxu0 %v1054
    %1205 = vmatprep.subr.bf16.mxu0 %v1063
    %1206 = vmatpush1.bf16.msra.mxu0 %v1062
    %1207 = vmatprep.subr.bf16.mxu0 %v1071
    %1208 = vmatpush1.bf16.msra.mxu0 %v1070
    %1209 = vmatprep.subr.bf16.mxu0 0
    %1210 = vmatpush1.bf16.msra.mxu0 0
    %1211 = vmatprep.subr.bf16.mxu0 0
    %1212 = vmatpush1.bf16.msra.mxu0 0
    %1213 = vmatprep.subr.bf16.mxu0 0
    %1214 = vmatpush1.bf16.msra.mxu0 0
    %1215 = vmatprep.subr.bf16.mxu0 0
    %1216 = vmatpush1.bf16.msra.mxu0 0
    %1217 = vmatprep.subr.bf16.mxu0 0
    %1218 = vmatpush1.bf16.msra.mxu0 0
    %1219 = vmatprep.subr.bf16.mxu0 0
    %1220 = vmatpush1.bf16.msra.mxu0 0
    %1221 = vmatprep.subr.bf16.mxu0 0
    %1222 = vmatpush1.bf16.msra.mxu0 0
    %1223 = vmatprep.subr.bf16.mxu0 0
    %1224 = vmatpush1.bf16.msra.mxu0 0
    %1225 = vmatprep.mubr.bf16.mxu0 0
    %1226 = vmatmul.mubr.bf16.gmra.mrb[0].mxu0 %v712
    %v1227 = vpop.f32.mrb[0].mxu0
    %v1228 = vadd.f32 %v791, %v1227
    %v1229 = vpop.f32.mrb[0].mxu0
    %v1230 = vadd.f32 %v795, %v1229
    %v1231 = vpop.f32.mrb[0].mxu0
    %v1232 = vadd.f32 %v791, %v1231
    %v1233 = vpop.f32.mrb[0].mxu0
    %v1234 = vadd.f32 %v795, %v1233
    %1235 = vmatprep.mubr.bf16.mxu0 0
    %1236 = vmatmul.mubr.bf16.gmra.mrb[0].mxu0 %v713
    %v1237 = vpop.f32.mrb[0].mxu0
    %v1238 = vadd.f32 %v791, %v1237
    %v1239 = vpop.f32.mrb[0].mxu0
    %v1240 = vadd.f32 %v795, %v1239
    %v1241 = vpop.f32.mrb[0].mxu0
    %v1242 = vadd.f32 %v791, %v1241
    %v1243 = vpop.f32.mrb[0].mxu0
    %v1244 = vadd.f32 %v795, %v1243
    %1245 = vdwg.mxu0
    %1246 = vmatprep.subr.bf16.mxu0 %v1017
    %1247 = vmatpush1.bf16.msra.mxu0 %v1016
    %1248 = vmatprep.subr.bf16.mxu0 %v1025
    %1249 = vmatpush1.bf16.msra.mxu0 %v1024
    %1250 = vmatprep.subr.bf16.mxu0 %v1033
    %1251 = vmatpush1.bf16.msra.mxu0 %v1032
    %1252 = vmatprep.subr.bf16.mxu0 %v1041
    %1253 = vmatpush1.bf16.msra.mxu0 %v1040
    %1254 = vmatprep.subr.bf16.mxu0 %v1049
    %1255 = vmatpush1.bf16.msra.mxu0 %v1048
    %1256 = vmatprep.subr.bf16.mxu0 %v1057
    %1257 = vmatpush1.bf16.msra.mxu0 %v1056
    %1258 = vmatprep.subr.bf16.mxu0 %v1065
    %1259 = vmatpush1.bf16.msra.mxu0 %v1064
    %1260 = vmatprep.subr.bf16.mxu0 %v1073
    %1261 = vmatpush1.bf16.msra.mxu0 %v1072
    %1262 = vmatprep.subr.bf16.mxu0 0
    %1263 = vmatpush1.bf16.msra.mxu0 0
    %1264 = vmatprep.subr.bf16.mxu0 0
    %1265 = vmatpush1.bf16.msra.mxu0 0
    %1266 = vmatprep.subr.bf16.mxu0 0
    %1267 = vmatpush1.bf16.msra.mxu0 0
    %1268 = vmatprep.subr.bf16.mxu0 0
    %1269 = vmatpush1.bf16.msra.mxu0 0
    %1270 = vmatprep.subr.bf16.mxu0 0
    %1271 = vmatpush1.bf16.msra.mxu0 0
    %1272 = vmatprep.subr.bf16.mxu0 0
    %1273 = vmatpush1.bf16.msra.mxu0 0
    %1274 = vmatprep.subr.bf16.mxu0 0
    %1275 = vmatpush1.bf16.msra.mxu0 0
    %1276 = vmatprep.subr.bf16.mxu0 0
    %1277 = vmatpush1.bf16.msra.mxu0 0
    %1278 = vmatprep.mubr.bf16.mxu0 0
    %1279 = vmatmul.mubr.bf16.gmra.mrb[0].mxu0 %v712
    %v1280 = vpop.f32.mrb[0].mxu0
    %v1281 = vadd.f32 %v799, %v1280
    %v1282 = vpop.f32.mrb[0].mxu0
    %v1283 = vadd.f32 %v803, %v1282
    %v1284 = vpop.f32.mrb[0].mxu0
    %v1285 = vadd.f32 %v799, %v1284
    %v1286 = vpop.f32.mrb[0].mxu0
    %v1287 = vadd.f32 %v803, %v1286
    %1288 = vmatprep.mubr.bf16.mxu0 0
    %1289 = vmatmul.mubr.bf16.gmra.mrb[0].mxu0 %v713
    %v1290 = vpop.f32.mrb[0].mxu0
    %v1291 = vadd.f32 %v799, %v1290
    %v1292 = vpop.f32.mrb[0].mxu0
    %v1293 = vadd.f32 %v803, %v1292
    %v1294 = vpop.f32.mrb[0].mxu0
    %v1295 = vadd.f32 %v799, %v1294
    %v1296 = vpop.f32.mrb[0].mxu0
    %v1297 = vadd.f32 %v803, %v1296
    %1298 = vdwg.mxu0
    %1299 = vmatprep.subr.bf16.mxu0 %v1019
    %1300 = vmatpush1.bf16.msra.mxu0 %v1018
    %1301 = vmatprep.subr.bf16.mxu0 %v1027
    %1302 = vmatpush1.bf16.msra.mxu0 %v1026
    %1303 = vmatprep.subr.bf16.mxu0 %v1035
    %1304 = vmatpush1.bf16.msra.mxu0 %v1034
    %1305 = vmatprep.subr.bf16.mxu0 %v1043
    %1306 = vmatpush1.bf16.msra.mxu0 %v1042
    %1307 = vmatprep.subr.bf16.mxu0 %v1051
    %1308 = vmatpush1.bf16.msra.mxu0 %v1050
    %1309 = vmatprep.subr.bf16.mxu0 %v1059
    %1310 = vmatpush1.bf16.msra.mxu0 %v1058
    %1311 = vmatprep.subr.bf16.mxu0 %v1067
    %1312 = vmatpush1.bf16.msra.mxu0 %v1066
    %1313 = vmatprep.subr.bf16.mxu0 %v1075
    %1314 = vmatpush1.bf16.msra.mxu0 %v1074
    %1315 = vmatprep.subr.bf16.mxu0 0
    %1316 = vmatpush1.bf16.msra.mxu0 0
    %1317 = vmatprep.subr.bf16.mxu0 0
    %1318 = vmatpush1.bf16.msra.mxu0 0
    %1319 = vmatprep.subr.bf16.mxu0 0
    %1320 = vmatpush1.bf16.msra.mxu0 0
    %1321 = vmatprep.subr.bf16.mxu0 0
    %1322 = vmatpush1.bf16.msra.mxu0 0
    %1323 = vmatprep.subr.bf16.mxu0 0
    %1324 = vmatpush1.bf16.msra.mxu0 0
    %1325 = vmatprep.subr.bf16.mxu0 0
    %1326 = vmatpush1.bf16.msra.mxu0 0
    %1327 = vmatprep.subr.bf16.mxu0 0
    %1328 = vmatpush1.bf16.msra.mxu0 0
    %1329 = vmatprep.subr.bf16.mxu0 0
    %1330 = vmatpush1.bf16.msra.mxu0 0
    %1331 = vmatprep.mubr.bf16.mxu0 0
    %1332 = vmatmul.mubr.bf16.gmra.mrb[0].mxu0 %v712
    %v1333 = vpop.f32.mrb[0].mxu0
    %v1334 = vadd.f32 %v807, %v1333
    %v1335 = vpop.f32.mrb[0].mxu0
    %v1336 = vadd.f32 %v811, %v1335
    %v1337 = vpop.f32.mrb[0].mxu0
    %v1338 = vadd.f32 %v807, %v1337
    %v1339 = vpop.f32.mrb[0].mxu0
    %v1340 = vadd.f32 %v811, %v1339
    %1341 = vmatprep.mubr.bf16.mxu0 0
    %1342 = vmatmul.mubr.bf16.gmra.mrb[0].mxu0 %v713
    %v1343 = vpop.f32.mrb[0].mxu0
    %v1344 = vadd.f32 %v807, %v1343
    %v1345 = vpop.f32.mrb[0].mxu0
    %v1346 = vadd.f32 %v811, %v1345
    %v1347 = vpop.f32.mrb[0].mxu0
    %v1348 = vadd.f32 %v807, %v1347
    %v1349 = vpop.f32.mrb[0].mxu0
    %v1350 = vadd.f32 %v811, %v1349
    %1351 = vdwg.mxu0
    %v1352 = vld [vmem:[%s12] sm:$0xff]
    %v1353 = vld [vmem:[%s13] sm:$0xff]
    %1354 = vmatprep.subr.mxu0 %v1177
    %1355 = vmatpush1.msra.mxu0 %v1175
    %1356 = vmatprep.subr.mxu0 %v1181
    %1357 = vmatpush1.msra.mxu0 %v1179
    %1358 = vmatprep.subr.mxu0 %v1187
    %1359 = vmatpush1.msra.mxu0 %v1185
    %1360 = vmatprep.subr.mxu0 %v1191
    %1361 = vmatpush1.msra.mxu0 %v1189
    %1362 = vmatprep.subr.mxu0 0.0
    %1363 = vmatpush1.msra.mxu0 0.0
    %1364 = vmatprep.subr.mxu0 0.0
    %1365 = vmatpush1.msra.mxu0 0.0
    %1366 = vmatprep.subr.mxu0 0.0
    %1367 = vmatpush1.msra.mxu0 0.0
    %1368 = vmatprep.subr.mxu0 0.0
    %1369 = vmatpush1.msra.mxu0 0.0
    %1370 = vmatprep.subr.mxu0 0.0
    %1371 = vmatpush1.msra.mxu0 0.0
    %1372 = vmatprep.subr.mxu0 0.0
    %1373 = vmatpush1.msra.mxu0 0.0
    %1374 = vmatprep.subr.mxu0 0.0
    %1375 = vmatpush1.msra.mxu0 0.0
    %1376 = vmatprep.subr.mxu0 0.0
    %1377 = vmatpush1.msra.mxu0 0.0
    %1378 = vmatprep.subr.mxu0 0.0
    %1379 = vmatpush1.msra.mxu0 0.0
    %1380 = vmatprep.subr.mxu0 0.0
    %1381 = vmatpush1.msra.mxu0 0.0
    %1382 = vmatprep.subr.mxu0 0.0
    %1383 = vmatpush1.msra.mxu0 0.0
    %1384 = vmatprep.subr.mxu0 0.0
    %1385 = vmatpush1.msra.mxu0 0.0
    %1386 = vmatprep.subr.mxu0 0.0
    %1387 = vmatpush1.msra.mxu0 0.0
    %1388 = vmatprep.subr.mxu0 0.0
    %1389 = vmatpush1.msra.mxu0 0.0
    %1390 = vmatprep.subr.mxu0 0.0
    %1391 = vmatpush1.msra.mxu0 0.0
    %1392 = vmatprep.subr.mxu0 0.0
    %1393 = vmatpush1.msra.mxu0 0.0
    %1394 = vmatprep.subr.mxu0 0.0
    %1395 = vmatpush1.msra.mxu0 0.0
    %1396 = vmatprep.subr.mxu0 0.0
    %1397 = vmatpush1.msra.mxu0 0.0
    %1398 = vmatprep.subr.mxu0 0.0
    %1399 = vmatpush1.msra.mxu0 0.0
    %1400 = vmatprep.subr.mxu0 0.0
    %1401 = vmatpush1.msra.mxu0 0.0
    %1402 = vmatprep.subr.mxu0 0.0
    %1403 = vmatpush1.msra.mxu0 0.0
    %1404 = vmatprep.subr.mxu0 0.0
    %1405 = vmatpush1.msra.mxu0 0.0
    %1406 = vmatprep.subr.mxu0 0.0
    %1407 = vmatpush1.msra.mxu0 0.0
    %1408 = vmatprep.subr.mxu0 0.0
    %1409 = vmatpush1.msra.mxu0 0.0
    %1410 = vmatprep.subr.mxu0 0.0
    %1411 = vmatpush1.msra.mxu0 0.0
    %1412 = vmatprep.subr.mxu0 0.0
    %1413 = vmatpush1.msra.mxu0 0.0
    %1414 = vmatprep.subr.mxu0 0.0
    %1415 = vmatpush1.msra.mxu0 0.0
    %1416 = vmatprep.subr.mxu0 0.0
    %1417 = vmatpush1.msra.mxu0 0.0
    %1418 = vmatprep.mubr.f32.mxu0 0.0
    %1419 = vmatmul.mubr.f32.gmra.mrb[0].mxu0 %v255
    %v1420 = vpop.f32.mrb[0].mxu0
    %v1421 = vadd.f32 0.0, %v1420
    %v1422 = vpop.f32.mrb[0].mxu0
    %v1423 = vadd.f32 0.0, %v1422
    %1424 = vdwg.mxu0
    %1425 = vmatprep.subr.mxu0 %v1230
    %1426 = vmatpush1.msra.mxu0 %v1228
    %1427 = vmatprep.subr.mxu0 %v1234
    %1428 = vmatpush1.msra.mxu0 %v1232
    %1429 = vmatprep.subr.mxu0 %v1240
    %1430 = vmatpush1.msra.mxu0 %v1238
    %1431 = vmatprep.subr.mxu0 %v1244
    %1432 = vmatpush1.msra.mxu0 %v1242
    %1433 = vmatprep.subr.mxu0 0.0
    %1434 = vmatpush1.msra.mxu0 0.0
    %1435 = vmatprep.subr.mxu0 0.0
    %1436 = vmatpush1.msra.mxu0 0.0
    %1437 = vmatprep.subr.mxu0 0.0
    %1438 = vmatpush1.msra.mxu0 0.0
    %1439 = vmatprep.subr.mxu0 0.0
    %1440 = vmatpush1.msra.mxu0 0.0
    %1441 = vmatprep.subr.mxu0 0.0
    %1442 = vmatpush1.msra.mxu0 0.0
    %1443 = vmatprep.subr.mxu0 0.0
    %1444 = vmatpush1.msra.mxu0 0.0
    %1445 = vmatprep.subr.mxu0 0.0
    %1446 = vmatpush1.msra.mxu0 0.0
    %1447 = vmatprep.subr.mxu0 0.0
    %1448 = vmatpush1.msra.mxu0 0.0
    %1449 = vmatprep.subr.mxu0 0.0
    %1450 = vmatpush1.msra.mxu0 0.0
    %1451 = vmatprep.subr.mxu0 0.0
    %1452 = vmatpush1.msra.mxu0 0.0
    %1453 = vmatprep.subr.mxu0 0.0
    %1454 = vmatpush1.msra.mxu0 0.0
    %1455 = vmatprep.subr.mxu0 0.0
    %1456 = vmatpush1.msra.mxu0 0.0
    %1457 = vmatprep.subr.mxu0 0.0
    %1458 = vmatpush1.msra.mxu0 0.0
    %1459 = vmatprep.subr.mxu0 0.0
    %1460 = vmatpush1.msra.mxu0 0.0
    %1461 = vmatprep.subr.mxu0 0.0
    %1462 = vmatpush1.msra.mxu0 0.0
    %1463 = vmatprep.subr.mxu0 0.0
    %1464 = vmatpush1.msra.mxu0 0.0
    %1465 = vmatprep.subr.mxu0 0.0
    %1466 = vmatpush1.msra.mxu0 0.0
    %1467 = vmatprep.subr.mxu0 0.0
    %1468 = vmatpush1.msra.mxu0 0.0
    %1469 = vmatprep.subr.mxu0 0.0
    %1470 = vmatpush1.msra.mxu0 0.0
    %1471 = vmatprep.subr.mxu0 0.0
    %1472 = vmatpush1.msra.mxu0 0.0
    %1473 = vmatprep.subr.mxu0 0.0
    %1474 = vmatpush1.msra.mxu0 0.0
    %1475 = vmatprep.subr.mxu0 0.0
    %1476 = vmatpush1.msra.mxu0 0.0
    %1477 = vmatprep.subr.mxu0 0.0
    %1478 = vmatpush1.msra.mxu0 0.0
    %1479 = vmatprep.subr.mxu0 0.0
    %1480 = vmatpush1.msra.mxu0 0.0
    %1481 = vmatprep.subr.mxu0 0.0
    %1482 = vmatpush1.msra.mxu0 0.0
    %1483 = vmatprep.subr.mxu0 0.0
    %1484 = vmatpush1.msra.mxu0 0.0
    %1485 = vmatprep.subr.mxu0 0.0
    %1486 = vmatpush1.msra.mxu0 0.0
    %1487 = vmatprep.subr.mxu0 0.0
    %1488 = vmatpush1.msra.mxu0 0.0
    %1489 = vmatprep.mubr.f32.mxu0 0.0
    %1490 = vmatmul.mubr.f32.gmra.mrb[0].mxu0 %v255
    %v1491 = vpop.f32.mrb[0].mxu0
    %v1492 = vadd.f32 0.0, %v1491
    %v1493 = vpop.f32.mrb[0].mxu0
    %v1494 = vadd.f32 0.0, %v1493
    %1495 = vdwg.mxu0
    %1496 = vmatprep.subr.mxu0 %v1283
    %1497 = vmatpush1.msra.mxu0 %v1281
    %1498 = vmatprep.subr.mxu0 %v1287
    %1499 = vmatpush1.msra.mxu0 %v1285
    %1500 = vmatprep.subr.mxu0 %v1293
    %1501 = vmatpush1.msra.mxu0 %v1291
    %1502 = vmatprep.subr.mxu0 %v1297
    %1503 = vmatpush1.msra.mxu0 %v1295
    %1504 = vmatprep.subr.mxu0 0.0
    %1505 = vmatpush1.msra.mxu0 0.0
    %1506 = vmatprep.subr.mxu0 0.0
    %1507 = vmatpush1.msra.mxu0 0.0
    %1508 = vmatprep.subr.mxu0 0.0
    %1509 = vmatpush1.msra.mxu0 0.0
    %1510 = vmatprep.subr.mxu0 0.0
    %1511 = vmatpush1.msra.mxu0 0.0
    %1512 = vmatprep.subr.mxu0 0.0
    %1513 = vmatpush1.msra.mxu0 0.0
    %1514 = vmatprep.subr.mxu0 0.0
    %1515 = vmatpush1.msra.mxu0 0.0
    %1516 = vmatprep.subr.mxu0 0.0
    %1517 = vmatpush1.msra.mxu0 0.0
    %1518 = vmatprep.subr.mxu0 0.0
    %1519 = vmatpush1.msra.mxu0 0.0
    %1520 = vmatprep.subr.mxu0 0.0
    %1521 = vmatpush1.msra.mxu0 0.0
    %1522 = vmatprep.subr.mxu0 0.0
    %1523 = vmatpush1.msra.mxu0 0.0
    %1524 = vmatprep.subr.mxu0 0.0
    %1525 = vmatpush1.msra.mxu0 0.0
    %1526 = vmatprep.subr.mxu0 0.0
    %1527 = vmatpush1.msra.mxu0 0.0
    %1528 = vmatprep.subr.mxu0 0.0
    %1529 = vmatpush1.msra.mxu0 0.0
    %1530 = vmatprep.subr.mxu0 0.0
    %1531 = vmatpush1.msra.mxu0 0.0
    %1532 = vmatprep.subr.mxu0 0.0
    %1533 = vmatpush1.msra.mxu0 0.0
    %1534 = vmatprep.subr.mxu0 0.0
    %1535 = vmatpush1.msra.mxu0 0.0
    %1536 = vmatprep.subr.mxu0 0.0
    %1537 = vmatpush1.msra.mxu0 0.0
    %1538 = vmatprep.subr.mxu0 0.0
    %1539 = vmatpush1.msra.mxu0 0.0
    %1540 = vmatprep.subr.mxu0 0.0
    %1541 = vmatpush1.msra.mxu0 0.0
    %1542 = vmatprep.subr.mxu0 0.0
    %1543 = vmatpush1.msra.mxu0 0.0
    %1544 = vmatprep.subr.mxu0 0.0
    %1545 = vmatpush1.msra.mxu0 0.0
    %1546 = vmatprep.subr.mxu0 0.0
    %1547 = vmatpush1.msra.mxu0 0.0
    %1548 = vmatprep.subr.mxu0 0.0
    %1549 = vmatpush1.msra.mxu0 0.0
    %1550 = vmatprep.subr.mxu0 0.0
    %1551 = vmatpush1.msra.mxu0 0.0
    %1552 = vmatprep.subr.mxu0 0.0
    %1553 = vmatpush1.msra.mxu0 0.0
    %1554 = vmatprep.subr.mxu0 0.0
    %1555 = vmatpush1.msra.mxu0 0.0
    %1556 = vmatprep.subr.mxu0 0.0
    %1557 = vmatpush1.msra.mxu0 0.0
    %1558 = vmatprep.subr.mxu0 0.0
    %1559 = vmatpush1.msra.mxu0 0.0
    %1560 = vmatprep.mubr.f32.mxu0 0.0
    %1561 = vmatmul.mubr.f32.gmra.mrb[0].mxu0 %v255
    %v1562 = vpop.f32.mrb[0].mxu0
    %v1563 = vadd.f32 0.0, %v1562
    %v1564 = vpop.f32.mrb[0].mxu0
    %v1565 = vadd.f32 0.0, %v1564
    %1566 = vdwg.mxu0
    %1567 = vmatprep.subr.mxu0 %v1336
    %1568 = vmatpush1.msra.mxu0 %v1334
    %1569 = vmatprep.subr.mxu0 %v1340
    %1570 = vmatpush1.msra.mxu0 %v1338
    %1571 = vmatprep.subr.mxu0 %v1346
    %1572 = vmatpush1.msra.mxu0 %v1344
    %1573 = vmatprep.subr.mxu0 %v1350
    %1574 = vmatpush1.msra.mxu0 %v1348
    %1575 = vmatprep.subr.mxu0 0.0
    %1576 = vmatpush1.msra.mxu0 0.0
    %1577 = vmatprep.subr.mxu0 0.0
    %1578 = vmatpush1.msra.mxu0 0.0
    %1579 = vmatprep.subr.mxu0 0.0
    %1580 = vmatpush1.msra.mxu0 0.0
    %1581 = vmatprep.subr.mxu0 0.0
    %1582 = vmatpush1.msra.mxu0 0.0
    %1583 = vmatprep.subr.mxu0 0.0
    %1584 = vmatpush1.msra.mxu0 0.0
    %1585 = vmatprep.subr.mxu0 0.0
    %1586 = vmatpush1.msra.mxu0 0.0
    %1587 = vmatprep.subr.mxu0 0.0
    %1588 = vmatpush1.msra.mxu0 0.0
    %1589 = vmatprep.subr.mxu0 0.0
    %1590 = vmatpush1.msra.mxu0 0.0
    %1591 = vmatprep.subr.mxu0 0.0
    %1592 = vmatpush1.msra.mxu0 0.0
    %1593 = vmatprep.subr.mxu0 0.0
    %1594 = vmatpush1.msra.mxu0 0.0
    %1595 = vmatprep.subr.mxu0 0.0
    %1596 = vmatpush1.msra.mxu0 0.0
    %1597 = vmatprep.subr.mxu0 0.0
    %1598 = vmatpush1.msra.mxu0 0.0
    %1599 = vmatprep.subr.mxu0 0.0
    %1600 = vmatpush1.msra.mxu0 0.0
    %1601 = vmatprep.subr.mxu0 0.0
    %1602 = vmatpush1.msra.mxu0 0.0
    %1603 = vmatprep.subr.mxu0 0.0
    %1604 = vmatpush1.msra.mxu0 0.0
    %1605 = vmatprep.subr.mxu0 0.0
    %1606 = vmatpush1.msra.mxu0 0.0
    %1607 = vmatprep.subr.mxu0 0.0
    %1608 = vmatpush1.msra.mxu0 0.0
    %1609 = vmatprep.subr.mxu0 0.0
    %1610 = vmatpush1.msra.mxu0 0.0
    %1611 = vmatprep.subr.mxu0 0.0
    %1612 = vmatpush1.msra.mxu0 0.0
    %1613 = vmatprep.subr.mxu0 0.0
    %1614 = vmatpush1.msra.mxu0 0.0
    %1615 = vmatprep.subr.mxu0 0.0
    %1616 = vmatpush1.msra.mxu0 0.0
    %1617 = vmatprep.subr.mxu0 0.0
    %1618 = vmatpush1.msra.mxu0 0.0
    %1619 = vmatprep.subr.mxu0 0.0
    %1620 = vmatpush1.msra.mxu0 0.0
    %1621 = vmatprep.subr.mxu0 0.0
    %1622 = vmatpush1.msra.mxu0 0.0
    %1623 = vmatprep.subr.mxu0 0.0
    %1624 = vmatpush1.msra.mxu0 0.0
    %1625 = vmatprep.subr.mxu0 0.0
    %1626 = vmatpush1.msra.mxu0 0.0
    %1627 = vmatprep.subr.mxu0 0.0
    %1628 = vmatpush1.msra.mxu0 0.0
    %1629 = vmatprep.subr.mxu0 0.0
    %1630 = vmatpush1.msra.mxu0 0.0
    %1631 = vmatprep.mubr.f32.mxu0 0.0
    %1632 = vmatmul.mubr.f32.gmra.mrb[0].mxu0 %v255
    %v1633 = vpop.f32.mrb[0].mxu0
    %v1634 = vadd.f32 0.0, %v1633
    %v1635 = vpop.f32.mrb[0].mxu0
    %v1636 = vadd.f32 0.0, %v1635
    %1637 = vdwg.mxu0
    %v1638 = vmul.f32 %v1175, %v1175
    %v1639 = vmul.f32 %v1177, %v1177
    %v1640 = vmul.f32 %v1228, %v1228
    %v1641 = vmul.f32 %v1230, %v1230
    %v1642 = vmul.f32 %v1281, %v1281
    %v1643 = vmul.f32 %v1283, %v1283
    %v1644 = vmul.f32 %v1334, %v1334
    %v1645 = vmul.f32 %v1336, %v1336
    %v1646 = vmul.f32 %v1179, %v1179
    %v1647 = vmul.f32 %v1181, %v1181
    %v1648 = vmul.f32 %v1232, %v1232
    %v1649 = vmul.f32 %v1234, %v1234
    %v1650 = vmul.f32 %v1285, %v1285
    %v1651 = vmul.f32 %v1287, %v1287
    %v1652 = vmul.f32 %v1338, %v1338
    %v1653 = vmul.f32 %v1340, %v1340
    %v1654 = vmul.f32 %v1185, %v1185
    %v1655 = vmul.f32 %v1187, %v1187
    %v1656 = vmul.f32 %v1238, %v1238
    %v1657 = vmul.f32 %v1240, %v1240
    %v1658 = vmul.f32 %v1291, %v1291
    %v1659 = vmul.f32 %v1293, %v1293
    %v1660 = vmul.f32 %v1344, %v1344
    %v1661 = vmul.f32 %v1346, %v1346
    %v1662 = vmul.f32 %v1189, %v1189
    %v1663 = vmul.f32 %v1191, %v1191
    %v1664 = vmul.f32 %v1242, %v1242
    %v1665 = vmul.f32 %v1244, %v1244
    %v1666 = vmul.f32 %v1295, %v1295
    %v1667 = vmul.f32 %v1297, %v1297
    %v1668 = vmul.f32 %v1348, %v1348
    %v1669 = vmul.f32 %v1350, %v1350
    %1670 = vmatprep.subr.mxu0 %v1639
    %1671 = vmatpush1.msra.mxu0 %v1638
    %1672 = vmatprep.subr.mxu0 %v1647
    %1673 = vmatpush1.msra.mxu0 %v1646
    %1674 = vmatprep.subr.mxu0 %v1655
    %1675 = vmatpush1.msra.mxu0 %v1654
    %1676 = vmatprep.subr.mxu0 %v1663
    %1677 = vmatpush1.msra.mxu0 %v1662
    %1678 = vmatprep.subr.mxu0 0.0
    %1679 = vmatpush1.msra.mxu0 0.0
    %1680 = vmatprep.subr.mxu0 0.0
    %1681 = vmatpush1.msra.mxu0 0.0
    %1682 = vmatprep.subr.mxu0 0.0
    %1683 = vmatpush1.msra.mxu0 0.0
    %1684 = vmatprep.subr.mxu0 0.0
    %1685 = vmatpush1.msra.mxu0 0.0
    %1686 = vmatprep.subr.mxu0 0.0
    %1687 = vmatpush1.msra.mxu0 0.0
    %1688 = vmatprep.subr.mxu0 0.0
    %1689 = vmatpush1.msra.mxu0 0.0
    %1690 = vmatprep.subr.mxu0 0.0
    %1691 = vmatpush1.msra.mxu0 0.0
    %1692 = vmatprep.subr.mxu0 0.0
    %1693 = vmatpush1.msra.mxu0 0.0
    %1694 = vmatprep.subr.mxu0 0.0
    %1695 = vmatpush1.msra.mxu0 0.0
    %1696 = vmatprep.subr.mxu0 0.0
    %1697 = vmatpush1.msra.mxu0 0.0
    %1698 = vmatprep.subr.mxu0 0.0
    %1699 = vmatpush1.msra.mxu0 0.0
    %1700 = vmatprep.subr.mxu0 0.0
    %1701 = vmatpush1.msra.mxu0 0.0
    %1702 = vmatprep.subr.mxu0 0.0
    %1703 = vmatpush1.msra.mxu0 0.0
    %1704 = vmatprep.subr.mxu0 0.0
    %1705 = vmatpush1.msra.mxu0 0.0
    %1706 = vmatprep.subr.mxu0 0.0
    %1707 = vmatpush1.msra.mxu0 0.0
    %1708 = vmatprep.subr.mxu0 0.0
    %1709 = vmatpush1.msra.mxu0 0.0
    %1710 = vmatprep.subr.mxu0 0.0
    %1711 = vmatpush1.msra.mxu0 0.0
    %1712 = vmatprep.subr.mxu0 0.0
    %1713 = vmatpush1.msra.mxu0 0.0
    %1714 = vmatprep.subr.mxu0 0.0
    %1715 = vmatpush1.msra.mxu0 0.0
    %1716 = vmatprep.subr.mxu0 0.0
    %1717 = vmatpush1.msra.mxu0 0.0
    %1718 = vmatprep.subr.mxu0 0.0
    %1719 = vmatpush1.msra.mxu0 0.0
    %1720 = vmatprep.subr.mxu0 0.0
    %1721 = vmatpush1.msra.mxu0 0.0
    %1722 = vmatprep.subr.mxu0 0.0
    %1723 = vmatpush1.msra.mxu0 0.0
    %1724 = vmatprep.subr.mxu0 0.0
    %1725 = vmatpush1.msra.mxu0 0.0
    %1726 = vmatprep.subr.mxu0 0.0
    %1727 = vmatpush1.msra.mxu0 0.0
    %1728 = vmatprep.subr.mxu0 0.0
    %1729 = vmatpush1.msra.mxu0 0.0
    %1730 = vmatprep.subr.mxu0 0.0
    %1731 = vmatpush1.msra.mxu0 0.0
    %1732 = vmatprep.subr.mxu0 0.0
    %1733 = vmatpush1.msra.mxu0 0.0
    %1734 = vmatprep.mubr.f32.mxu0 0.0
    %1735 = vmatmul.mubr.f32.gmra.mrb[0].mxu0 %v255
    %v1736 = vpop.f32.mrb[0].mxu0
    %v1737 = vadd.f32 0.0, %v1736
    %v1738 = vpop.f32.mrb[0].mxu0
    %v1739 = vadd.f32 0.0, %v1738
    %1740 = vdwg.mxu0
    %1741 = vmatprep.subr.mxu0 %v1641
    %1742 = vmatpush1.msra.mxu0 %v1640
    %1743 = vmatprep.subr.mxu0 %v1649
    %1744 = vmatpush1.msra.mxu0 %v1648
    %1745 = vmatprep.subr.mxu0 %v1657
    %1746 = vmatpush1.msra.mxu0 %v1656
    %1747 = vmatprep.subr.mxu0 %v1665
    %1748 = vmatpush1.msra.mxu0 %v1664
    %1749 = vmatprep.subr.mxu0 0.0
    %1750 = vmatpush1.msra.mxu0 0.0
    %1751 = vmatprep.subr.mxu0 0.0
    %1752 = vmatpush1.msra.mxu0 0.0
    %1753 = vmatprep.subr.mxu0 0.0
    %1754 = vmatpush1.msra.mxu0 0.0
    %1755 = vmatprep.subr.mxu0 0.0
    %1756 = vmatpush1.msra.mxu0 0.0
    %1757 = vmatprep.subr.mxu0 0.0
    %1758 = vmatpush1.msra.mxu0 0.0
    %1759 = vmatprep.subr.mxu0 0.0
    %1760 = vmatpush1.msra.mxu0 0.0
    %1761 = vmatprep.subr.mxu0 0.0
    %1762 = vmatpush1.msra.mxu0 0.0
    %1763 = vmatprep.subr.mxu0 0.0
    %1764 = vmatpush1.msra.mxu0 0.0
    %1765 = vmatprep.subr.mxu0 0.0
    %1766 = vmatpush1.msra.mxu0 0.0
    %1767 = vmatprep.subr.mxu0 0.0
    %1768 = vmatpush1.msra.mxu0 0.0
    %1769 = vmatprep.subr.mxu0 0.0
    %1770 = vmatpush1.msra.mxu0 0.0
    %1771 = vmatprep.subr.mxu0 0.0
    %1772 = vmatpush1.msra.mxu0 0.0
    %1773 = vmatprep.subr.mxu0 0.0
    %1774 = vmatpush1.msra.mxu0 0.0
    %1775 = vmatprep.subr.mxu0 0.0
    %1776 = vmatpush1.msra.mxu0 0.0
    %1777 = vmatprep.subr.mxu0 0.0
    %1778 = vmatpush1.msra.mxu0 0.0
    %1779 = vmatprep.subr.mxu0 0.0
    %1780 = vmatpush1.msra.mxu0 0.0
    %1781 = vmatprep.subr.mxu0 0.0
    %1782 = vmatpush1.msra.mxu0 0.0
    %1783 = vmatprep.subr.mxu0 0.0
    %1784 = vmatpush1.msra.mxu0 0.0
    %1785 = vmatprep.subr.mxu0 0.0
    %1786 = vmatpush1.msra.mxu0 0.0
    %1787 = vmatprep.subr.mxu0 0.0
    %1788 = vmatpush1.msra.mxu0 0.0
    %1789 = vmatprep.subr.mxu0 0.0
    %1790 = vmatpush1.msra.mxu0 0.0
    %1791 = vmatprep.subr.mxu0 0.0
    %1792 = vmatpush1.msra.mxu0 0.0
    %1793 = vmatprep.subr.mxu0 0.0
    %1794 = vmatpush1.msra.mxu0 0.0
    %1795 = vmatprep.subr.mxu0 0.0
    %1796 = vmatpush1.msra.mxu0 0.0
    %1797 = vmatprep.subr.mxu0 0.0
    %1798 = vmatpush1.msra.mxu0 0.0
    %1799 = vmatprep.subr.mxu0 0.0
    %1800 = vmatpush1.msra.mxu0 0.0
    %1801 = vmatprep.subr.mxu0 0.0
    %1802 = vmatpush1.msra.mxu0 0.0
    %1803 = vmatprep.subr.mxu0 0.0
    %1804 = vmatpush1.msra.mxu0 0.0
    %1805 = vmatprep.mubr.f32.mxu0 0.0
    %1806 = vmatmul.mubr.f32.gmra.mrb[0].mxu0 %v255
    %v1807 = vpop.f32.mrb[0].mxu0
    %v1808 = vadd.f32 0.0, %v1807
    %v1809 = vpop.f32.mrb[0].mxu0
    %v1810 = vadd.f32 0.0, %v1809
    %1811 = vdwg.mxu0
    %1812 = vmatprep.subr.mxu0 %v1643
    %1813 = vmatpush1.msra.mxu0 %v1642
    %1814 = vmatprep.subr.mxu0 %v1651
    %1815 = vmatpush1.msra.mxu0 %v1650
    %1816 = vmatprep.subr.mxu0 %v1659
    %1817 = vmatpush1.msra.mxu0 %v1658
    %1818 = vmatprep.subr.mxu0 %v1667
    %1819 = vmatpush1.msra.mxu0 %v1666
    %1820 = vmatprep.subr.mxu0 0.0
    %1821 = vmatpush1.msra.mxu0 0.0
    %1822 = vmatprep.subr.mxu0 0.0
    %1823 = vmatpush1.msra.mxu0 0.0
    %1824 = vmatprep.subr.mxu0 0.0
    %1825 = vmatpush1.msra.mxu0 0.0
    %1826 = vmatprep.subr.mxu0 0.0
    %1827 = vmatpush1.msra.mxu0 0.0
    %1828 = vmatprep.subr.mxu0 0.0
    %1829 = vmatpush1.msra.mxu0 0.0
    %1830 = vmatprep.subr.mxu0 0.0
    %1831 = vmatpush1.msra.mxu0 0.0
    %1832 = vmatprep.subr.mxu0 0.0
    %1833 = vmatpush1.msra.mxu0 0.0
    %1834 = vmatprep.subr.mxu0 0.0
    %1835 = vmatpush1.msra.mxu0 0.0
    %1836 = vmatprep.subr.mxu0 0.0
    %1837 = vmatpush1.msra.mxu0 0.0
    %1838 = vmatprep.subr.mxu0 0.0
    %1839 = vmatpush1.msra.mxu0 0.0
    %1840 = vmatprep.subr.mxu0 0.0
    %1841 = vmatpush1.msra.mxu0 0.0
    %1842 = vmatprep.subr.mxu0 0.0
    %1843 = vmatpush1.msra.mxu0 0.0
    %1844 = vmatprep.subr.mxu0 0.0
    %1845 = vmatpush1.msra.mxu0 0.0
    %1846 = vmatprep.subr.mxu0 0.0
    %1847 = vmatpush1.msra.mxu0 0.0
    %1848 = vmatprep.subr.mxu0 0.0
    %1849 = vmatpush1.msra.mxu0 0.0
    %1850 = vmatprep.subr.mxu0 0.0
    %1851 = vmatpush1.msra.mxu0 0.0
    %1852 = vmatprep.subr.mxu0 0.0
    %1853 = vmatpush1.msra.mxu0 0.0
    %1854 = vmatprep.subr.mxu0 0.0
    %1855 = vmatpush1.msra.mxu0 0.0
    %1856 = vmatprep.subr.mxu0 0.0
    %1857 = vmatpush1.msra.mxu0 0.0
    %1858 = vmatprep.subr.mxu0 0.0
    %1859 = vmatpush1.msra.mxu0 0.0
    %1860 = vmatprep.subr.mxu0 0.0
    %1861 = vmatpush1.msra.mxu0 0.0
    %1862 = vmatprep.subr.mxu0 0.0
    %1863 = vmatpush1.msra.mxu0 0.0
    %1864 = vmatprep.subr.mxu0 0.0
    %1865 = vmatpush1.msra.mxu0 0.0
    %1866 = vmatprep.subr.mxu0 0.0
    %1867 = vmatpush1.msra.mxu0 0.0
    %1868 = vmatprep.subr.mxu0 0.0
    %1869 = vmatpush1.msra.mxu0 0.0
    %1870 = vmatprep.subr.mxu0 0.0
    %1871 = vmatpush1.msra.mxu0 0.0
    %1872 = vmatprep.subr.mxu0 0.0
    %1873 = vmatpush1.msra.mxu0 0.0
    %1874 = vmatprep.subr.mxu0 0.0
    %1875 = vmatpush1.msra.mxu0 0.0
    %1876 = vmatprep.mubr.f32.mxu0 0.0
    %1877 = vmatmul.mubr.f32.gmra.mrb[0].mxu0 %v255
    %v1878 = vpop.f32.mrb[0].mxu0
    %v1879 = vadd.f32 0.0, %v1878
    %v1880 = vpop.f32.mrb[0].mxu0
    %v1881 = vadd.f32 0.0, %v1880
    %1882 = vdwg.mxu0
    %1883 = vmatprep.subr.mxu0 %v1645
    %1884 = vmatpush1.msra.mxu0 %v1644
    %1885 = vmatprep.subr.mxu0 %v1653
    %1886 = vmatpush1.msra.mxu0 %v1652
    %1887 = vmatprep.subr.mxu0 %v1661
    %1888 = vmatpush1.msra.mxu0 %v1660
    %1889 = vmatprep.subr.mxu0 %v1669
    %1890 = vmatpush1.msra.mxu0 %v1668
    %1891 = vmatprep.subr.mxu0 0.0
    %1892 = vmatpush1.msra.mxu0 0.0
    %1893 = vmatprep.subr.mxu0 0.0
    %1894 = vmatpush1.msra.mxu0 0.0
    %1895 = vmatprep.subr.mxu0 0.0
    %1896 = vmatpush1.msra.mxu0 0.0
    %1897 = vmatprep.subr.mxu0 0.0
    %1898 = vmatpush1.msra.mxu0 0.0
    %1899 = vmatprep.subr.mxu0 0.0
    %1900 = vmatpush1.msra.mxu0 0.0
    %1901 = vmatprep.subr.mxu0 0.0
    %1902 = vmatpush1.msra.mxu0 0.0
    %1903 = vmatprep.subr.mxu0 0.0
    %1904 = vmatpush1.msra.mxu0 0.0
    %1905 = vmatprep.subr.mxu0 0.0
    %1906 = vmatpush1.msra.mxu0 0.0
    %1907 = vmatprep.subr.mxu0 0.0
    %1908 = vmatpush1.msra.mxu0 0.0
    %1909 = vmatprep.subr.mxu0 0.0
    %1910 = vmatpush1.msra.mxu0 0.0
    %1911 = vmatprep.subr.mxu0 0.0
    %1912 = vmatpush1.msra.mxu0 0.0
    %1913 = vmatprep.subr.mxu0 0.0
    %1914 = vmatpush1.msra.mxu0 0.0
    %1915 = vmatprep.subr.mxu0 0.0
    %1916 = vmatpush1.msra.mxu0 0.0
    %1917 = vmatprep.subr.mxu0 0.0
    %1918 = vmatpush1.msra.mxu0 0.0
    %1919 = vmatprep.subr.mxu0 0.0
    %1920 = vmatpush1.msra.mxu0 0.0
    %1921 = vmatprep.subr.mxu0 0.0
    %1922 = vmatpush1.msra.mxu0 0.0
    %1923 = vmatprep.subr.mxu0 0.0
    %1924 = vmatpush1.msra.mxu0 0.0
    %1925 = vmatprep.subr.mxu0 0.0
    %1926 = vmatpush1.msra.mxu0 0.0
    %1927 = vmatprep.subr.mxu0 0.0
    %1928 = vmatpush1.msra.mxu0 0.0
    %1929 = vmatprep.subr.mxu0 0.0
    %1930 = vmatpush1.msra.mxu0 0.0
    %1931 = vmatprep.subr.mxu0 0.0
    %1932 = vmatpush1.msra.mxu0 0.0
    %1933 = vmatprep.subr.mxu0 0.0
    %1934 = vmatpush1.msra.mxu0 0.0
    %1935 = vmatprep.subr.mxu0 0.0
    %1936 = vmatpush1.msra.mxu0 0.0
    %1937 = vmatprep.subr.mxu0 0.0
    %1938 = vmatpush1.msra.mxu0 0.0
    %1939 = vmatprep.subr.mxu0 0.0
    %1940 = vmatpush1.msra.mxu0 0.0
    %1941 = vmatprep.subr.mxu0 0.0
    %1942 = vmatpush1.msra.mxu0 0.0
    %1943 = vmatprep.subr.mxu0 0.0
    %1944 = vmatpush1.msra.mxu0 0.0
    %1945 = vmatprep.subr.mxu0 0.0
    %1946 = vmatpush1.msra.mxu0 0.0
    %1947 = vmatprep.mubr.f32.mxu0 0.0
    %1948 = vmatmul.mubr.f32.gmra.mrb[0].mxu0 %v255
    %v1949 = vpop.f32.mrb[0].mxu0
    %v1950 = vadd.f32 0.0, %v1949
    %v1951 = vpop.f32.mrb[0].mxu0
    %v1952 = vadd.f32 0.0, %v1951
    %1953 = vdwg.mxu0
    %v1954 = vmul.f32 %v1421, 0.03125
    %v1955 = vmul.f32 %v1423, 0.03125
    %v1956 = vmul.f32 %v1492, 0.03125
    %v1957 = vmul.f32 %v1494, 0.03125
    %v1958 = vmul.f32 %v1563, 0.03125
    %v1959 = vmul.f32 %v1565, 0.03125
    %v1960 = vmul.f32 %v1634, 0.03125
    %v1961 = vmul.f32 %v1636, 0.03125
    %v1962 = vmul.f32 %v1737, 0.03125
    %v1963 = vmul.f32 %v1739, 0.03125
    %v1964 = vmul.f32 %v1808, 0.03125
    %v1965 = vmul.f32 %v1810, 0.03125
    %v1966 = vmul.f32 %v1879, 0.03125
    %v1967 = vmul.f32 %v1881, 0.03125
    %v1968 = vmul.f32 %v1950, 0.03125
    %v1969 = vmul.f32 %v1952, 0.03125
    %v1970 = vmul.f32 %v1954, %v1954
    %v1971 = vmul.f32 %v1955, %v1955
    %v1972 = vmul.f32 %v1956, %v1956
    %v1973 = vmul.f32 %v1957, %v1957
    %v1974 = vmul.f32 %v1958, %v1958
    %v1975 = vmul.f32 %v1959, %v1959
    %v1976 = vmul.f32 %v1960, %v1960
    %v1977 = vmul.f32 %v1961, %v1961
    %v1978 = vsub.f32 %v1962, %v1970
    %v1979 = vsub.f32 %v1963, %v1971
    %v1980 = vsub.f32 %v1964, %v1972
    %v1981 = vsub.f32 %v1965, %v1973
    %v1982 = vsub.f32 %v1966, %v1974
    %v1983 = vsub.f32 %v1967, %v1975
    %v1984 = vsub.f32 %v1968, %v1976
    %v1985 = vsub.f32 %v1969, %v1977
    %v1986 = vmax.f32 %v1978, 0.0
    %v1987 = vmax.f32 %v1979, 0.0
    %v1988 = vmax.f32 %v1980, 0.0
    %v1989 = vmax.f32 %v1981, 0.0
    %v1990 = vmax.f32 %v1982, 0.0
    %v1991 = vmax.f32 %v1983, 0.0
    %v1992 = vmax.f32 %v1984, 0.0
    %v1993 = vmax.f32 %v1985, 0.0
    %v1994 = vadd.f32 %v1986, 1e-05
    %v1995 = vadd.f32 %v1987, 1e-05
    %v1996 = vadd.f32 %v1988, 1e-05
    %v1997 = vadd.f32 %v1989, 1e-05
    %v1998 = vadd.f32 %v1990, 1e-05
    %v1999 = vadd.f32 %v1991, 1e-05
    %v2000 = vadd.f32 %v1992, 1e-05
    %v2001 = vadd.f32 %v1993, 1e-05
    %v2002 = vrsqrt.pop %v1994
    %v2003 = vrsqrt.pop %v1995
    %v2004 = vrsqrt.pop %v1996
    %v2005 = vrsqrt.pop %v1997
    %v2006 = vrsqrt.pop %v1998
    %v2007 = vrsqrt.pop %v1999
    %v2008 = vrsqrt.pop %v2000
    %v2009 = vrsqrt.pop %v2001
    %v2018 = vcombine.low %v2002, %v2003
    %v2019 = vcombine.low %v2004, %v2005
    %v2020 = vcombine.low %v2006, %v2007
    %v2021 = vcombine.low %v2008, %v2009
    %v2023 = vunpack.c.l.s4 1966171168
    %v2024 = vunpack.c.0.s8 %v2023
    %v2025 = vlaneseq
    %v2026 = vshrl.u32 %v2025, 7
    %v2027 = vsub.s32 %v2024, %v2026
    %v2028 = vrot.slane %v2018, %v2027
    %v2030 = vunpack.c.l.s4 1966171168
    %v2031 = vunpack.c.0.s8 %v2030
    %v2032 = vlaneseq
    %v2033 = vshrl.u32 %v2032, 7
    %v2034 = vsub.s32 %v2031, %v2033
    %v2035 = vrot.slane %v2019, %v2034
    %v2037 = vunpack.c.l.s4 1966171168
    %v2038 = vunpack.c.0.s8 %v2037
    %v2039 = vlaneseq
    %v2040 = vshrl.u32 %v2039, 7
    %v2041 = vsub.s32 %v2038, %v2040
    %v2042 = vrot.slane %v2020, %v2041
    %v2044 = vunpack.c.l.s4 1966171168
    %v2045 = vunpack.c.0.s8 %v2044
    %v2046 = vlaneseq
    %v2047 = vshrl.u32 %v2046, 7
    %v2048 = vsub.s32 %v2045, %v2047
    %v2049 = vrot.slane %v2021, %v2048
    %v2050 = vcombine.low %v2028, %v2035
    %v2051 = vcombine.low %v2042, %v2049
    %v2053 = vunpack.c.l.s4 1966171168
    %v2054 = vunpack.c.0.s8 %v2053
    %v2055 = vlaneseq
    %v2056 = vshrl.u32 %v2055, 7
    %v2057 = vsub.s32 %v2054, %v2056
    %v2058 = vrot.slane %v2050, %v2057
    %v2060 = vunpack.c.l.s4 1966171168
    %v2061 = vunpack.c.0.s8 %v2060
    %v2062 = vlaneseq
    %v2063 = vshrl.u32 %v2062, 7
    %v2064 = vsub.s32 %v2061, %v2063
    %v2065 = vrot.slane %v2051, %v2064
    %v2066 = vcombine.low %v2058, %v2065
    %v2068 = vmul.f32 %v1352, %v2066
    %v2070 = vlaneseq
    %v2071 = vshrl.u32 %v2070, 7
    %v2072 = vsub.s32 0, %v2071
    %v2073 = vrot.slane %v2068, %v2072
    %v2074 = vlaneseq
    %v2075 = vshrl.u32 %v2074, 7
    %v2076 = vsub.s32 1, %v2075
    %v2077 = vrot.slane %v2068, %v2076
    %v2078 = vlaneseq
    %v2079 = vshrl.u32 %v2078, 7
    %v2080 = vsub.s32 2, %v2079
    %v2081 = vrot.slane %v2068, %v2080
    %v2082 = vlaneseq
    %v2083 = vshrl.u32 %v2082, 7
    %v2084 = vsub.s32 3, %v2083
    %v2085 = vrot.slane %v2068, %v2084
    %v2086 = vlaneseq
    %v2087 = vshrl.u32 %v2086, 7
    %v2088 = vsub.s32 4, %v2087
    %v2089 = vrot.slane %v2068, %v2088
    %v2090 = vlaneseq
    %v2091 = vshrl.u32 %v2090, 7
    %v2092 = vsub.s32 5, %v2091
    %v2093 = vrot.slane %v2068, %v2092
    %v2094 = vlaneseq
    %v2095 = vshrl.u32 %v2094, 7
    %v2096 = vsub.s32 6, %v2095
    %v2097 = vrot.slane %v2068, %v2096
    %v2098 = vlaneseq
    %v2099 = vshrl.u32 %v2098, 7
    %v2100 = vsub.s32 7, %v2099
    %v2101 = vrot.slane %v2068, %v2100
    %v2110 = vmul.f32 %v1954, %v2073
    %v2111 = vmul.f32 %v1955, %v2077
    %v2112 = vmul.f32 %v1956, %v2081
    %v2113 = vmul.f32 %v1957, %v2085
    %v2114 = vmul.f32 %v1958, %v2089
    %v2115 = vmul.f32 %v1959, %v2093
    %v2116 = vmul.f32 %v1960, %v2097
    %v2117 = vmul.f32 %v1961, %v2101
    %v2126 = vcombine.low %v2110, %v2111
    %v2127 = vcombine.low %v2112, %v2113
    %v2128 = vcombine.low %v2114, %v2115
    %v2129 = vcombine.low %v2116, %v2117
    %v2131 = vunpack.c.l.s4 1966171168
    %v2132 = vunpack.c.0.s8 %v2131
    %v2133 = vlaneseq
    %v2134 = vshrl.u32 %v2133, 7
    %v2135 = vsub.s32 %v2132, %v2134
    %v2136 = vrot.slane %v2126, %v2135
    %v2138 = vunpack.c.l.s4 1966171168
    %v2139 = vunpack.c.0.s8 %v2138
    %v2140 = vlaneseq
    %v2141 = vshrl.u32 %v2140, 7
    %v2142 = vsub.s32 %v2139, %v2141
    %v2143 = vrot.slane %v2127, %v2142
    %v2145 = vunpack.c.l.s4 1966171168
    %v2146 = vunpack.c.0.s8 %v2145
    %v2147 = vlaneseq
    %v2148 = vshrl.u32 %v2147, 7
    %v2149 = vsub.s32 %v2146, %v2148
    %v2150 = vrot.slane %v2128, %v2149
    %v2152 = vunpack.c.l.s4 1966171168
    %v2153 = vunpack.c.0.s8 %v2152
    %v2154 = vlaneseq
    %v2155 = vshrl.u32 %v2154, 7
    %v2156 = vsub.s32 %v2153, %v2155
    %v2157 = vrot.slane %v2129, %v2156
    %v2158 = vcombine.low %v2136, %v2143
    %v2159 = vcombine.low %v2150, %v2157
    %v2161 = vunpack.c.l.s4 1966171168
    %v2162 = vunpack.c.0.s8 %v2161
    %v2163 = vlaneseq
    %v2164 = vshrl.u32 %v2163, 7
    %v2165 = vsub.s32 %v2162, %v2164
    %v2166 = vrot.slane %v2158, %v2165
    %v2168 = vunpack.c.l.s4 1966171168
    %v2169 = vunpack.c.0.s8 %v2168
    %v2170 = vlaneseq
    %v2171 = vshrl.u32 %v2170, 7
    %v2172 = vsub.s32 %v2169, %v2171
    %v2173 = vrot.slane %v2159, %v2172
    %v2174 = vcombine.low %v2166, %v2173
    %v2176 = vsub.f32 %v1353, %v2174
    %v2177 = vmul.f32 %v1175, %v2073
    %v2178 = vmul.f32 %v1177, %v2077
    %v2179 = vmul.f32 %v1228, %v2081
    %v2180 = vmul.f32 %v1230, %v2085
    %v2181 = vmul.f32 %v1281, %v2089
    %v2182 = vmul.f32 %v1283, %v2093
    %v2183 = vmul.f32 %v1334, %v2097
    %v2184 = vmul.f32 %v1336, %v2101
    %v2185 = vmul.f32 %v1179, %v2073
    %v2186 = vmul.f32 %v1181, %v2077
    %v2187 = vmul.f32 %v1232, %v2081
    %v2188 = vmul.f32 %v1234, %v2085
    %v2189 = vmul.f32 %v1285, %v2089
    %v2190 = vmul.f32 %v1287, %v2093
    %v2191 = vmul.f32 %v1338, %v2097
    %v2192 = vmul.f32 %v1340, %v2101
    %v2193 = vmul.f32 %v1185, %v2073
    %v2194 = vmul.f32 %v1187, %v2077
    %v2195 = vmul.f32 %v1238, %v2081
    %v2196 = vmul.f32 %v1240, %v2085
    %v2197 = vmul.f32 %v1291, %v2089
    %v2198 = vmul.f32 %v1293, %v2093
    %v2199 = vmul.f32 %v1344, %v2097
    %v2200 = vmul.f32 %v1346, %v2101
    %v2201 = vmul.f32 %v1189, %v2073
    %v2202 = vmul.f32 %v1191, %v2077
    %v2203 = vmul.f32 %v1242, %v2081
    %v2204 = vmul.f32 %v1244, %v2085
    %v2205 = vmul.f32 %v1295, %v2089
    %v2206 = vmul.f32 %v1297, %v2093
    %v2207 = vmul.f32 %v1348, %v2097
    %v2208 = vmul.f32 %v1350, %v2101
    %v2210 = vlaneseq
    %v2211 = vshrl.u32 %v2210, 7
    %v2212 = vsub.s32 0, %v2211
    %v2213 = vrot.slane %v2176, %v2212
    %v2214 = vlaneseq
    %v2215 = vshrl.u32 %v2214, 7
    %v2216 = vsub.s32 1, %v2215
    %v2217 = vrot.slane %v2176, %v2216
    %v2218 = vlaneseq
    %v2219 = vshrl.u32 %v2218, 7
    %v2220 = vsub.s32 2, %v2219
    %v2221 = vrot.slane %v2176, %v2220
    %v2222 = vlaneseq
    %v2223 = vshrl.u32 %v2222, 7
    %v2224 = vsub.s32 3, %v2223
    %v2225 = vrot.slane %v2176, %v2224
    %v2226 = vlaneseq
    %v2227 = vshrl.u32 %v2226, 7
    %v2228 = vsub.s32 4, %v2227
    %v2229 = vrot.slane %v2176, %v2228
    %v2230 = vlaneseq
    %v2231 = vshrl.u32 %v2230, 7
    %v2232 = vsub.s32 5, %v2231
    %v2233 = vrot.slane %v2176, %v2232
    %v2234 = vlaneseq
    %v2235 = vshrl.u32 %v2234, 7
    %v2236 = vsub.s32 6, %v2235
    %v2237 = vrot.slane %v2176, %v2236
    %v2238 = vlaneseq
    %v2239 = vshrl.u32 %v2238, 7
    %v2240 = vsub.s32 7, %v2239
    %v2241 = vrot.slane %v2176, %v2240
    %v2250 = vadd.f32 %v2177, %v2213
    %v2251 = vadd.f32 %v2178, %v2217
    %v2252 = vadd.f32 %v2179, %v2221
    %v2253 = vadd.f32 %v2180, %v2225
    %v2254 = vadd.f32 %v2181, %v2229
    %v2255 = vadd.f32 %v2182, %v2233
    %v2256 = vadd.f32 %v2183, %v2237
    %v2257 = vadd.f32 %v2184, %v2241
    %v2258 = vadd.f32 %v2185, %v2213
    %v2259 = vadd.f32 %v2186, %v2217
    %v2260 = vadd.f32 %v2187, %v2221
    %v2261 = vadd.f32 %v2188, %v2225
    %v2262 = vadd.f32 %v2189, %v2229
    %v2263 = vadd.f32 %v2190, %v2233
    %v2264 = vadd.f32 %v2191, %v2237
    %v2265 = vadd.f32 %v2192, %v2241
    %v2266 = vadd.f32 %v2193, %v2213
    %v2267 = vadd.f32 %v2194, %v2217
    %v2268 = vadd.f32 %v2195, %v2221
    %v2269 = vadd.f32 %v2196, %v2225
    %v2270 = vadd.f32 %v2197, %v2229
    %v2271 = vadd.f32 %v2198, %v2233
    %v2272 = vadd.f32 %v2199, %v2237
    %v2273 = vadd.f32 %v2200, %v2241
    %v2274 = vadd.f32 %v2201, %v2213
    %v2275 = vadd.f32 %v2202, %v2217
    %v2276 = vadd.f32 %v2203, %v2221
    %v2277 = vadd.f32 %v2204, %v2225
    %v2278 = vadd.f32 %v2205, %v2229
    %v2279 = vadd.f32 %v2206, %v2233
    %v2280 = vadd.f32 %v2207, %v2237
    %v2281 = vadd.f32 %v2208, %v2241
    %v2282 = vmax.f32 %v2250, 0.0
    %v2283 = vmax.f32 %v2251, 0.0
    %v2284 = vmax.f32 %v2252, 0.0
    %v2285 = vmax.f32 %v2253, 0.0
    %v2286 = vmax.f32 %v2254, 0.0
    %v2287 = vmax.f32 %v2255, 0.0
    %v2288 = vmax.f32 %v2256, 0.0
    %v2289 = vmax.f32 %v2257, 0.0
    %v2290 = vmax.f32 %v2258, 0.0
    %v2291 = vmax.f32 %v2259, 0.0
    %v2292 = vmax.f32 %v2260, 0.0
    %v2293 = vmax.f32 %v2261, 0.0
    %v2294 = vmax.f32 %v2262, 0.0
    %v2295 = vmax.f32 %v2263, 0.0
    %v2296 = vmax.f32 %v2264, 0.0
    %v2297 = vmax.f32 %v2265, 0.0
    %v2298 = vmax.f32 %v2266, 0.0
    %v2299 = vmax.f32 %v2267, 0.0
    %v2300 = vmax.f32 %v2268, 0.0
    %v2301 = vmax.f32 %v2269, 0.0
    %v2302 = vmax.f32 %v2270, 0.0
    %v2303 = vmax.f32 %v2271, 0.0
    %v2304 = vmax.f32 %v2272, 0.0
    %v2305 = vmax.f32 %v2273, 0.0
    %v2306 = vmax.f32 %v2274, 0.0
    %v2307 = vmax.f32 %v2275, 0.0
    %v2308 = vmax.f32 %v2276, 0.0
    %v2309 = vmax.f32 %v2277, 0.0
    %v2310 = vmax.f32 %v2278, 0.0
    %v2311 = vmax.f32 %v2279, 0.0
    %v2312 = vmax.f32 %v2280, 0.0
    %v2313 = vmax.f32 %v2281, 0.0
    %v2314 = vpack.c.bf16 %v2290, %v2282
    %v2315 = vpack.c.bf16 %v2291, %v2283
    %v2316 = vpack.c.bf16 %v2292, %v2284
    %v2317 = vpack.c.bf16 %v2293, %v2285
    %v2318 = vpack.c.bf16 %v2294, %v2286
    %v2319 = vpack.c.bf16 %v2295, %v2287
    %v2320 = vpack.c.bf16 %v2296, %v2288
    %v2321 = vpack.c.bf16 %v2297, %v2289
    %v2322 = vpack.c.bf16 %v2306, %v2298
    %v2323 = vpack.c.bf16 %v2307, %v2299
    %v2324 = vpack.c.bf16 %v2308, %v2300
    %v2325 = vpack.c.bf16 %v2309, %v2301
    %v2326 = vpack.c.bf16 %v2310, %v2302
    %v2327 = vpack.c.bf16 %v2311, %v2303
    %v2328 = vpack.c.bf16 %v2312, %v2304
    %v2329 = vpack.c.bf16 %v2313, %v2305
    %v2330 = vunpack.i.l.bf16 %v2314
    %v2331 = vunpack.i.h.bf16 %v2314
    %v2332 = vmax.f32 %v2330, %v2331
    %v2333 = vrot.slane %v2332, 4
    %v2334 = vmax.f32 %v2332, %v2333
    %v2335 = vrot.slane %v2334, 2
    %v2336 = vmax.f32 %v2334, %v2335
    %v2337 = vrot.slane %v2336, 1
    %v2338 = vmax.f32 %v2336, %v2337
    %v2339 = vpack.i.bf16 %v2338, %v2338
    %v2340 = vunpack.i.l.bf16 %v2315
    %v2341 = vunpack.i.h.bf16 %v2315
    %v2342 = vmax.f32 %v2340, %v2341
    %v2343 = vrot.slane %v2342, 4
    %v2344 = vmax.f32 %v2342, %v2343
    %v2345 = vrot.slane %v2344, 2
    %v2346 = vmax.f32 %v2344, %v2345
    %v2347 = vrot.slane %v2346, 1
    %v2348 = vmax.f32 %v2346, %v2347
    %v2349 = vpack.i.bf16 %v2348, %v2348
    %v2350 = vunpack.i.l.bf16 %v2316
    %v2351 = vunpack.i.h.bf16 %v2316
    %v2352 = vmax.f32 %v2350, %v2351
    %v2353 = vrot.slane %v2352, 4
    %v2354 = vmax.f32 %v2352, %v2353
    %v2355 = vrot.slane %v2354, 2
    %v2356 = vmax.f32 %v2354, %v2355
    %v2357 = vrot.slane %v2356, 1
    %v2358 = vmax.f32 %v2356, %v2357
    %v2359 = vpack.i.bf16 %v2358, %v2358
    %v2360 = vunpack.i.l.bf16 %v2317
    %v2361 = vunpack.i.h.bf16 %v2317
    %v2362 = vmax.f32 %v2360, %v2361
    %v2363 = vrot.slane %v2362, 4
    %v2364 = vmax.f32 %v2362, %v2363
    %v2365 = vrot.slane %v2364, 2
    %v2366 = vmax.f32 %v2364, %v2365
    %v2367 = vrot.slane %v2366, 1
    %v2368 = vmax.f32 %v2366, %v2367
    %v2369 = vpack.i.bf16 %v2368, %v2368
    %v2370 = vunpack.i.l.bf16 %v2318
    %v2371 = vunpack.i.h.bf16 %v2318
    %v2372 = vmax.f32 %v2370, %v2371
    %v2373 = vrot.slane %v2372, 4
    %v2374 = vmax.f32 %v2372, %v2373
    %v2375 = vrot.slane %v2374, 2
    %v2376 = vmax.f32 %v2374, %v2375
    %v2377 = vrot.slane %v2376, 1
    %v2378 = vmax.f32 %v2376, %v2377
    %v2379 = vpack.i.bf16 %v2378, %v2378
    %v2380 = vunpack.i.l.bf16 %v2319
    %v2381 = vunpack.i.h.bf16 %v2319
    %v2382 = vmax.f32 %v2380, %v2381
    %v2383 = vrot.slane %v2382, 4
    %v2384 = vmax.f32 %v2382, %v2383
    %v2385 = vrot.slane %v2384, 2
    %v2386 = vmax.f32 %v2384, %v2385
    %v2387 = vrot.slane %v2386, 1
    %v2388 = vmax.f32 %v2386, %v2387
    %v2389 = vpack.i.bf16 %v2388, %v2388
    %v2390 = vunpack.i.l.bf16 %v2320
    %v2391 = vunpack.i.h.bf16 %v2320
    %v2392 = vmax.f32 %v2390, %v2391
    %v2393 = vrot.slane %v2392, 4
    %v2394 = vmax.f32 %v2392, %v2393
    %v2395 = vrot.slane %v2394, 2
    %v2396 = vmax.f32 %v2394, %v2395
    %v2397 = vrot.slane %v2396, 1
    %v2398 = vmax.f32 %v2396, %v2397
    %v2399 = vpack.i.bf16 %v2398, %v2398
    %v2400 = vunpack.i.l.bf16 %v2321
    %v2401 = vunpack.i.h.bf16 %v2321
    %v2402 = vmax.f32 %v2400, %v2401
    %v2403 = vrot.slane %v2402, 4
    %v2404 = vmax.f32 %v2402, %v2403
    %v2405 = vrot.slane %v2404, 2
    %v2406 = vmax.f32 %v2404, %v2405
    %v2407 = vrot.slane %v2406, 1
    %v2408 = vmax.f32 %v2406, %v2407
    %v2409 = vpack.i.bf16 %v2408, %v2408
    %v2410 = vunpack.i.l.bf16 %v2322
    %v2411 = vunpack.i.h.bf16 %v2322
    %v2412 = vmax.f32 %v2410, %v2411
    %v2413 = vrot.slane %v2412, 4
    %v2414 = vmax.f32 %v2412, %v2413
    %v2415 = vrot.slane %v2414, 2
    %v2416 = vmax.f32 %v2414, %v2415
    %v2417 = vrot.slane %v2416, 1
    %v2418 = vmax.f32 %v2416, %v2417
    %v2419 = vpack.i.bf16 %v2418, %v2418
    %v2420 = vunpack.i.l.bf16 %v2323
    %v2421 = vunpack.i.h.bf16 %v2323
    %v2422 = vmax.f32 %v2420, %v2421
    %v2423 = vrot.slane %v2422, 4
    %v2424 = vmax.f32 %v2422, %v2423
    %v2425 = vrot.slane %v2424, 2
    %v2426 = vmax.f32 %v2424, %v2425
    %v2427 = vrot.slane %v2426, 1
    %v2428 = vmax.f32 %v2426, %v2427
    %v2429 = vpack.i.bf16 %v2428, %v2428
    %v2430 = vunpack.i.l.bf16 %v2324
    %v2431 = vunpack.i.h.bf16 %v2324
    %v2432 = vmax.f32 %v2430, %v2431
    %v2433 = vrot.slane %v2432, 4
    %v2434 = vmax.f32 %v2432, %v2433
    %v2435 = vrot.slane %v2434, 2
    %v2436 = vmax.f32 %v2434, %v2435
    %v2437 = vrot.slane %v2436, 1
    %v2438 = vmax.f32 %v2436, %v2437
    %v2439 = vpack.i.bf16 %v2438, %v2438
    %v2440 = vunpack.i.l.bf16 %v2325
    %v2441 = vunpack.i.h.bf16 %v2325
    %v2442 = vmax.f32 %v2440, %v2441
    %v2443 = vrot.slane %v2442, 4
    %v2444 = vmax.f32 %v2442, %v2443
    %v2445 = vrot.slane %v2444, 2
    %v2446 = vmax.f32 %v2444, %v2445
    %v2447 = vrot.slane %v2446, 1
    %v2448 = vmax.f32 %v2446, %v2447
    %v2449 = vpack.i.bf16 %v2448, %v2448
    %v2450 = vunpack.i.l.bf16 %v2326
    %v2451 = vunpack.i.h.bf16 %v2326
    %v2452 = vmax.f32 %v2450, %v2451
    %v2453 = vrot.slane %v2452, 4
    %v2454 = vmax.f32 %v2452, %v2453
    %v2455 = vrot.slane %v2454, 2
    %v2456 = vmax.f32 %v2454, %v2455
    %v2457 = vrot.slane %v2456, 1
    %v2458 = vmax.f32 %v2456, %v2457
    %v2459 = vpack.i.bf16 %v2458, %v2458
    %v2460 = vunpack.i.l.bf16 %v2327
    %v2461 = vunpack.i.h.bf16 %v2327
    %v2462 = vmax.f32 %v2460, %v2461
    %v2463 = vrot.slane %v2462, 4
    %v2464 = vmax.f32 %v2462, %v2463
    %v2465 = vrot.slane %v2464, 2
    %v2466 = vmax.f32 %v2464, %v2465
    %v2467 = vrot.slane %v2466, 1
    %v2468 = vmax.f32 %v2466, %v2467
    %v2469 = vpack.i.bf16 %v2468, %v2468
    %v2470 = vunpack.i.l.bf16 %v2328
    %v2471 = vunpack.i.h.bf16 %v2328
    %v2472 = vmax.f32 %v2470, %v2471
    %v2473 = vrot.slane %v2472, 4
    %v2474 = vmax.f32 %v2472, %v2473
    %v2475 = vrot.slane %v2474, 2
    %v2476 = vmax.f32 %v2474, %v2475
    %v2477 = vrot.slane %v2476, 1
    %v2478 = vmax.f32 %v2476, %v2477
    %v2479 = vpack.i.bf16 %v2478, %v2478
    %v2480 = vunpack.i.l.bf16 %v2329
    %v2481 = vunpack.i.h.bf16 %v2329
    %v2482 = vmax.f32 %v2480, %v2481
    %v2483 = vrot.slane %v2482, 4
    %v2484 = vmax.f32 %v2482, %v2483
    %v2485 = vrot.slane %v2484, 2
    %v2486 = vmax.f32 %v2484, %v2485
    %v2487 = vrot.slane %v2486, 1
    %v2488 = vmax.f32 %v2486, %v2487
    %v2489 = vpack.i.bf16 %v2488, %v2488
    %v2490 = vld [vmem:[#allocation5] sm:$0xff]
    %v2491 = vld [vmem:[#allocation5 + $0x8] sm:$0xff]
    %v2492 = vld [vmem:[#allocation5 + $0x10] sm:$0xff]
    %v2493 = vld [vmem:[#allocation5 + $0x18] sm:$0xff]
    %v2494 = vld [vmem:[#allocation5 + $0x20] sm:$0xff]
    %v2495 = vld [vmem:[#allocation5 + $0x28] sm:$0xff]
    %v2496 = vld [vmem:[#allocation5 + $0x30] sm:$0xff]
    %v2497 = vld [vmem:[#allocation5 + $0x38] sm:$0xff]
    %v2498 = vld [vmem:[#allocation5 + $0x40] sm:$0xff]
    %v2499 = vld [vmem:[#allocation5 + $0x48] sm:$0xff]
    %v2500 = vld [vmem:[#allocation5 + $0x50] sm:$0xff]
    %v2501 = vld [vmem:[#allocation5 + $0x58] sm:$0xff]
    %v2502 = vld [vmem:[#allocation5 + $0x60] sm:$0xff]
    %v2503 = vld [vmem:[#allocation5 + $0x68] sm:$0xff]
    %v2504 = vld [vmem:[#allocation5 + $0x70] sm:$0xff]
    %v2505 = vld [vmem:[#allocation5 + $0x78] sm:$0xff]
    %v2506 = vld [vmem:[#allocation5 + $0x80] sm:$0xff]
    %v2507 = vld [vmem:[#allocation5 + $0x88] sm:$0xff]
    %v2508 = vld [vmem:[#allocation5 + $0x90] sm:$0xff]
    %v2509 = vld [vmem:[#allocation5 + $0x98] sm:$0xff]
    %v2510 = vld [vmem:[#allocation5 + $0xa0] sm:$0xff]
    %v2511 = vld [vmem:[#allocation5 + $0xa8] sm:$0xff]
    %v2512 = vld [vmem:[#allocation5 + $0xb0] sm:$0xff]
    %v2513 = vld [vmem:[#allocation5 + $0xb8] sm:$0xff]
    %v2514 = vld [vmem:[#allocation5 + $0xc0] sm:$0xff]
    %v2515 = vld [vmem:[#allocation5 + $0xc8] sm:$0xff]
    %v2516 = vld [vmem:[#allocation5 + $0xd0] sm:$0xff]
    %v2517 = vld [vmem:[#allocation5 + $0xd8] sm:$0xff]
    %v2518 = vld [vmem:[#allocation5 + $0xe0] sm:$0xff]
    %v2519 = vld [vmem:[#allocation5 + $0xe8] sm:$0xff]
    %v2520 = vld [vmem:[#allocation5 + $0xf0] sm:$0xff]
    %v2521 = vld [vmem:[#allocation5 + $0xf8] sm:$0xff]
    %v2522 = vld [vmem:[#allocation5 + $0x100] sm:$0xff]
    %v2523 = vld [vmem:[#allocation5 + $0x108] sm:$0xff]
    %v2524 = vld [vmem:[#allocation5 + $0x110] sm:$0xff]
    %v2525 = vld [vmem:[#allocation5 + $0x118] sm:$0xff]
    %v2526 = vld [vmem:[#allocation5 + $0x120] sm:$0xff]
    %v2527 = vld [vmem:[#allocation5 + $0x128] sm:$0xff]
    %v2528 = vld [vmem:[#allocation5 + $0x130] sm:$0xff]
    %v2529 = vld [vmem:[#allocation5 + $0x138] sm:$0xff]
    %v2530 = vld [vmem:[#allocation5 + $0x140] sm:$0xff]
    %v2531 = vld [vmem:[#allocation5 + $0x148] sm:$0xff]
    %v2532 = vld [vmem:[#allocation5 + $0x150] sm:$0xff]
    %v2533 = vld [vmem:[#allocation5 + $0x158] sm:$0xff]
    %v2534 = vld [vmem:[#allocation5 + $0x160] sm:$0xff]
    %v2535 = vld [vmem:[#allocation5 + $0x168] sm:$0xff]
    %v2536 = vld [vmem:[#allocation5 + $0x170] sm:$0xff]
    %v2537 = vld [vmem:[#allocation5 + $0x178] sm:$0xff]
    %v2538 = vld [vmem:[#allocation5 + $0x180] sm:$0xff]
    %v2539 = vld [vmem:[#allocation5 + $0x188] sm:$0xff]
    %v2540 = vld [vmem:[#allocation5 + $0x190] sm:$0xff]
    %v2541 = vld [vmem:[#allocation5 + $0x198] sm:$0xff]
    %v2542 = vld [vmem:[#allocation5 + $0x1a0] sm:$0xff]
    %v2543 = vld [vmem:[#allocation5 + $0x1a8] sm:$0xff]
    %v2544 = vld [vmem:[#allocation5 + $0x1b0] sm:$0xff]
    %v2545 = vld [vmem:[#allocation5 + $0x1b8] sm:$0xff]
    %v2546 = vld [vmem:[#allocation5 + $0x1c0] sm:$0xff]
    %v2547 = vld [vmem:[#allocation5 + $0x1c8] sm:$0xff]
    %v2548 = vld [vmem:[#allocation5 + $0x1d0] sm:$0xff]
    %v2549 = vld [vmem:[#allocation5 + $0x1d8] sm:$0xff]
    %v2550 = vld [vmem:[#allocation5 + $0x1e0] sm:$0xff]
    %v2551 = vld [vmem:[#allocation5 + $0x1e8] sm:$0xff]
    %v2552 = vld [vmem:[#allocation5 + $0x1f0] sm:$0xff]
    %v2553 = vld [vmem:[#allocation5 + $0x1f8] sm:$0xff]
    %v2554 = vld [vmem:[#allocation5 + $0x200] sm:$0xff]
    %v2555 = vld [vmem:[#allocation5 + $0x208] sm:$0xff]
    %v2556 = vld [vmem:[#allocation5 + $0x210] sm:$0xff]
    %v2557 = vld [vmem:[#allocation5 + $0x218] sm:$0xff]
    %v2558 = vld [vmem:[#allocation5 + $0x220] sm:$0xff]
    %v2559 = vld [vmem:[#allocation5 + $0x228] sm:$0xff]
    %v2560 = vld [vmem:[#allocation5 + $0x230] sm:$0xff]
    %v2561 = vld [vmem:[#allocation5 + $0x238] sm:$0xff]
    %v2562 = vld [vmem:[#allocation5 + $0x240] sm:$0xff]
    %v2563 = vld [vmem:[#allocation5 + $0x248] sm:$0xff]
    %v2564 = vld [vmem:[#allocation5 + $0x250] sm:$0xff]
    %v2565 = vld [vmem:[#allocation5 + $0x258] sm:$0xff]
    %v2566 = vld [vmem:[#allocation5 + $0x260] sm:$0xff]
    %v2567 = vld [vmem:[#allocation5 + $0x268] sm:$0xff]
    %v2568 = vld [vmem:[#allocation5 + $0x270] sm:$0xff]
    %v2569 = vld [vmem:[#allocation5 + $0x278] sm:$0xff]
    %v2570 = vld [vmem:[#allocation5 + $0x280] sm:$0xff]
    %v2571 = vld [vmem:[#allocation5 + $0x288] sm:$0xff]
    %v2572 = vld [vmem:[#allocation5 + $0x290] sm:$0xff]
    %v2573 = vld [vmem:[#allocation5 + $0x298] sm:$0xff]
    %v2574 = vld [vmem:[#allocation5 + $0x2a0] sm:$0xff]
    %v2575 = vld [vmem:[#allocation5 + $0x2a8] sm:$0xff]
    %v2576 = vld [vmem:[#allocation5 + $0x2b0] sm:$0xff]
    %v2577 = vld [vmem:[#allocation5 + $0x2b8] sm:$0xff]
    %v2578 = vld [vmem:[#allocation5 + $0x2c0] sm:$0xff]
    %v2579 = vld [vmem:[#allocation5 + $0x2c8] sm:$0xff]
    %v2580 = vld [vmem:[#allocation5 + $0x2d0] sm:$0xff]
    %v2581 = vld [vmem:[#allocation5 + $0x2d8] sm:$0xff]
    %v2582 = vld [vmem:[#allocation5 + $0x2e0] sm:$0xff]
    %v2583 = vld [vmem:[#allocation5 + $0x2e8] sm:$0xff]
    %v2584 = vld [vmem:[#allocation5 + $0x2f0] sm:$0xff]
    %v2585 = vld [vmem:[#allocation5 + $0x2f8] sm:$0xff]
    %v2586 = vld [vmem:[#allocation5 + $0x300] sm:$0xff]
    %v2587 = vld [vmem:[#allocation5 + $0x308] sm:$0xff]
    %v2588 = vld [vmem:[#allocation5 + $0x310] sm:$0xff]
    %v2589 = vld [vmem:[#allocation5 + $0x318] sm:$0xff]
    %v2590 = vld [vmem:[#allocation5 + $0x320] sm:$0xff]
    %v2591 = vld [vmem:[#allocation5 + $0x328] sm:$0xff]
    %v2592 = vld [vmem:[#allocation5 + $0x330] sm:$0xff]
    %v2593 = vld [vmem:[#allocation5 + $0x338] sm:$0xff]
    %v2594 = vld [vmem:[#allocation5 + $0x340] sm:$0xff]
    %v2595 = vld [vmem:[#allocation5 + $0x348] sm:$0xff]
    %v2596 = vld [vmem:[#allocation5 + $0x350] sm:$0xff]
    %v2597 = vld [vmem:[#allocation5 + $0x358] sm:$0xff]
    %v2598 = vld [vmem:[#allocation5 + $0x360] sm:$0xff]
    %v2599 = vld [vmem:[#allocation5 + $0x368] sm:$0xff]
    %v2600 = vld [vmem:[#allocation5 + $0x370] sm:$0xff]
    %v2601 = vld [vmem:[#allocation5 + $0x378] sm:$0xff]
    %v2602 = vld [vmem:[#allocation5 + $0x380] sm:$0xff]
    %v2603 = vld [vmem:[#allocation5 + $0x388] sm:$0xff]
    %v2604 = vld [vmem:[#allocation5 + $0x390] sm:$0xff]
    %v2605 = vld [vmem:[#allocation5 + $0x398] sm:$0xff]
    %v2606 = vld [vmem:[#allocation5 + $0x3a0] sm:$0xff]
    %v2607 = vld [vmem:[#allocation5 + $0x3a8] sm:$0xff]
    %v2608 = vld [vmem:[#allocation5 + $0x3b0] sm:$0xff]
    %v2609 = vld [vmem:[#allocation5 + $0x3b8] sm:$0xff]
    %v2610 = vld [vmem:[#allocation5 + $0x3c0] sm:$0xff]
    %v2611 = vld [vmem:[#allocation5 + $0x3c8] sm:$0xff]
    %v2612 = vld [vmem:[#allocation5 + $0x3d0] sm:$0xff]
    %v2613 = vld [vmem:[#allocation5 + $0x3d8] sm:$0xff]
    %v2614 = vld [vmem:[#allocation5 + $0x3e0] sm:$0xff]
    %v2615 = vld [vmem:[#allocation5 + $0x3e8] sm:$0xff]
    %v2616 = vld [vmem:[#allocation5 + $0x3f0] sm:$0xff]
    %v2617 = vld [vmem:[#allocation5 + $0x3f8] sm:$0xff]
    %v2618 = vld [vmem:[#allocation5 + $0x400] sm:$0xff]
    %v2619 = vld [vmem:[#allocation5 + $0x408] sm:$0xff]
    %v2620 = vld [vmem:[#allocation5 + $0x410] sm:$0xff]
    %v2621 = vld [vmem:[#allocation5 + $0x418] sm:$0xff]
    %v2622 = vld [vmem:[#allocation5 + $0x420] sm:$0xff]
    %v2623 = vld [vmem:[#allocation5 + $0x428] sm:$0xff]
    %v2624 = vld [vmem:[#allocation5 + $0x430] sm:$0xff]
    %v2625 = vld [vmem:[#allocation5 + $0x438] sm:$0xff]
    %v2626 = vld [vmem:[#allocation5 + $0x440] sm:$0xff]
    %v2627 = vld [vmem:[#allocation5 + $0x448] sm:$0xff]
    %v2628 = vld [vmem:[#allocation5 + $0x450] sm:$0xff]
    %v2629 = vld [vmem:[#allocation5 + $0x458] sm:$0xff]
    %v2630 = vld [vmem:[#allocation5 + $0x460] sm:$0xff]
    %v2631 = vld [vmem:[#allocation5 + $0x468] sm:$0xff]
    %v2632 = vld [vmem:[#allocation5 + $0x470] sm:$0xff]
    %v2633 = vld [vmem:[#allocation5 + $0x478] sm:$0xff]
    %v2634 = vld [vmem:[#allocation5 + $0x480] sm:$0xff]
    %v2635 = vld [vmem:[#allocation5 + $0x488] sm:$0xff]
    %v2636 = vld [vmem:[#allocation5 + $0x490] sm:$0xff]
    %v2637 = vld [vmem:[#allocation5 + $0x498] sm:$0xff]
    %v2638 = vld [vmem:[#allocation5 + $0x4a0] sm:$0xff]
    %v2639 = vld [vmem:[#allocation5 + $0x4a8] sm:$0xff]
    %v2640 = vld [vmem:[#allocation5 + $0x4b0] sm:$0xff]
    %v2641 = vld [vmem:[#allocation5 + $0x4b8] sm:$0xff]
    %v2642 = vld [vmem:[#allocation5 + $0x4c0] sm:$0xff]
    %v2643 = vld [vmem:[#allocation5 + $0x4c8] sm:$0xff]
    %v2644 = vld [vmem:[#allocation5 + $0x4d0] sm:$0xff]
    %v2645 = vld [vmem:[#allocation5 + $0x4d8] sm:$0xff]
    %v2646 = vld [vmem:[#allocation5 + $0x4e0] sm:$0xff]
    %v2647 = vld [vmem:[#allocation5 + $0x4e8] sm:$0xff]
    %v2648 = vld [vmem:[#allocation5 + $0x4f0] sm:$0xff]
    %v2649 = vld [vmem:[#allocation5 + $0x4f8] sm:$0xff]
    %v2650 = vld [vmem:[#allocation5 + $0x500] sm:$0xff]
    %v2651 = vld [vmem:[#allocation5 + $0x508] sm:$0xff]
    %v2652 = vld [vmem:[#allocation5 + $0x510] sm:$0xff]
    %v2653 = vld [vmem:[#allocation5 + $0x518] sm:$0xff]
    %v2654 = vld [vmem:[#allocation5 + $0x520] sm:$0xff]
    %v2655 = vld [vmem:[#allocation5 + $0x528] sm:$0xff]
    %v2656 = vld [vmem:[#allocation5 + $0x530] sm:$0xff]
    %v2657 = vld [vmem:[#allocation5 + $0x538] sm:$0xff]
    %v2658 = vld [vmem:[#allocation5 + $0x540] sm:$0xff]
    %v2659 = vld [vmem:[#allocation5 + $0x548] sm:$0xff]
    %v2660 = vld [vmem:[#allocation5 + $0x550] sm:$0xff]
    %v2661 = vld [vmem:[#allocation5 + $0x558] sm:$0xff]
    %v2662 = vld [vmem:[#allocation5 + $0x560] sm:$0xff]
    %v2663 = vld [vmem:[#allocation5 + $0x568] sm:$0xff]
    %v2664 = vld [vmem:[#allocation5 + $0x570] sm:$0xff]
    %v2665 = vld [vmem:[#allocation5 + $0x578] sm:$0xff]
    %v2666 = vld [vmem:[#allocation5 + $0x580] sm:$0xff]
    %v2667 = vld [vmem:[#allocation5 + $0x588] sm:$0xff]
    %v2668 = vld [vmem:[#allocation5 + $0x590] sm:$0xff]
    %v2669 = vld [vmem:[#allocation5 + $0x598] sm:$0xff]
    %v2670 = vld [vmem:[#allocation5 + $0x5a0] sm:$0xff]
    %v2671 = vld [vmem:[#allocation5 + $0x5a8] sm:$0xff]
    %v2672 = vld [vmem:[#allocation5 + $0x5b0] sm:$0xff]
    %v2673 = vld [vmem:[#allocation5 + $0x5b8] sm:$0xff]
    %v2674 = vld [vmem:[#allocation5 + $0x5c0] sm:$0xff]
    %v2675 = vld [vmem:[#allocation5 + $0x5c8] sm:$0xff]
    %v2676 = vld [vmem:[#allocation5 + $0x5d0] sm:$0xff]
    %v2677 = vld [vmem:[#allocation5 + $0x5d8] sm:$0xff]
    %v2678 = vld [vmem:[#allocation5 + $0x5e0] sm:$0xff]
    %v2679 = vld [vmem:[#allocation5 + $0x5e8] sm:$0xff]
    %v2680 = vld [vmem:[#allocation5 + $0x5f0] sm:$0xff]
    %v2681 = vld [vmem:[#allocation5 + $0x5f8] sm:$0xff]
    %v2682 = vld [vmem:[#allocation5 + $0x600] sm:$0xff]
    %v2683 = vld [vmem:[#allocation5 + $0x608] sm:$0xff]
    %v2684 = vld [vmem:[#allocation5 + $0x610] sm:$0xff]
    %v2685 = vld [vmem:[#allocation5 + $0x618] sm:$0xff]
    %v2686 = vld [vmem:[#allocation5 + $0x620] sm:$0xff]
    %v2687 = vld [vmem:[#allocation5 + $0x628] sm:$0xff]
    %v2688 = vld [vmem:[#allocation5 + $0x630] sm:$0xff]
    %v2689 = vld [vmem:[#allocation5 + $0x638] sm:$0xff]
    %v2690 = vld [vmem:[#allocation5 + $0x640] sm:$0xff]
    %v2691 = vld [vmem:[#allocation5 + $0x648] sm:$0xff]
    %v2692 = vld [vmem:[#allocation5 + $0x650] sm:$0xff]
    %v2693 = vld [vmem:[#allocation5 + $0x658] sm:$0xff]
    %v2694 = vld [vmem:[#allocation5 + $0x660] sm:$0xff]
    %v2695 = vld [vmem:[#allocation5 + $0x668] sm:$0xff]
    %v2696 = vld [vmem:[#allocation5 + $0x670] sm:$0xff]
    %v2697 = vld [vmem:[#allocation5 + $0x678] sm:$0xff]
    %v2698 = vld [vmem:[#allocation5 + $0x680] sm:$0xff]
    %v2699 = vld [vmem:[#allocation5 + $0x688] sm:$0xff]
    %v2700 = vld [vmem:[#allocation5 + $0x690] sm:$0xff]
    %v2701 = vld [vmem:[#allocation5 + $0x698] sm:$0xff]
    %v2702 = vld [vmem:[#allocation5 + $0x6a0] sm:$0xff]
    %v2703 = vld [vmem:[#allocation5 + $0x6a8] sm:$0xff]
    %v2704 = vld [vmem:[#allocation5 + $0x6b0] sm:$0xff]
    %v2705 = vld [vmem:[#allocation5 + $0x6b8] sm:$0xff]
    %v2706 = vld [vmem:[#allocation5 + $0x6c0] sm:$0xff]
    %v2707 = vld [vmem:[#allocation5 + $0x6c8] sm:$0xff]
    %v2708 = vld [vmem:[#allocation5 + $0x6d0] sm:$0xff]
    %v2709 = vld [vmem:[#allocation5 + $0x6d8] sm:$0xff]
    %v2710 = vld [vmem:[#allocation5 + $0x6e0] sm:$0xff]
    %v2711 = vld [vmem:[#allocation5 + $0x6e8] sm:$0xff]
    %v2712 = vld [vmem:[#allocation5 + $0x6f0] sm:$0xff]
    %v2713 = vld [vmem:[#allocation5 + $0x6f8] sm:$0xff]
    %v2714 = vld [vmem:[#allocation5 + $0x700] sm:$0xff]
    %v2715 = vld [vmem:[#allocation5 + $0x708] sm:$0xff]
    %v2716 = vld [vmem:[#allocation5 + $0x710] sm:$0xff]
    %v2717 = vld [vmem:[#allocation5 + $0x718] sm:$0xff]
    %v2718 = vld [vmem:[#allocation5 + $0x720] sm:$0xff]
    %v2719 = vld [vmem:[#allocation5 + $0x728] sm:$0xff]
    %v2720 = vld [vmem:[#allocation5 + $0x730] sm:$0xff]
    %v2721 = vld [vmem:[#allocation5 + $0x738] sm:$0xff]
    %v2722 = vld [vmem:[#allocation5 + $0x740] sm:$0xff]
    %v2723 = vld [vmem:[#allocation5 + $0x748] sm:$0xff]
    %v2724 = vld [vmem:[#allocation5 + $0x750] sm:$0xff]
    %v2725 = vld [vmem:[#allocation5 + $0x758] sm:$0xff]
    %v2726 = vld [vmem:[#allocation5 + $0x760] sm:$0xff]
    %v2727 = vld [vmem:[#allocation5 + $0x768] sm:$0xff]
    %v2728 = vld [vmem:[#allocation5 + $0x770] sm:$0xff]
    %v2729 = vld [vmem:[#allocation5 + $0x778] sm:$0xff]
    %v2730 = vld [vmem:[#allocation5 + $0x780] sm:$0xff]
    %v2731 = vld [vmem:[#allocation5 + $0x788] sm:$0xff]
    %v2732 = vld [vmem:[#allocation5 + $0x790] sm:$0xff]
    %v2733 = vld [vmem:[#allocation5 + $0x798] sm:$0xff]
    %v2734 = vld [vmem:[#allocation5 + $0x7a0] sm:$0xff]
    %v2735 = vld [vmem:[#allocation5 + $0x7a8] sm:$0xff]
    %v2736 = vld [vmem:[#allocation5 + $0x7b0] sm:$0xff]
    %v2737 = vld [vmem:[#allocation5 + $0x7b8] sm:$0xff]
    %v2738 = vld [vmem:[#allocation5 + $0x7c0] sm:$0xff]
    %v2739 = vld [vmem:[#allocation5 + $0x7c8] sm:$0xff]
    %v2740 = vld [vmem:[#allocation5 + $0x7d0] sm:$0xff]
    %v2741 = vld [vmem:[#allocation5 + $0x7d8] sm:$0xff]
    %v2742 = vld [vmem:[#allocation5 + $0x7e0] sm:$0xff]
    %v2743 = vld [vmem:[#allocation5 + $0x7e8] sm:$0xff]
    %v2744 = vld [vmem:[#allocation5 + $0x7f0] sm:$0xff]
    %v2745 = vld [vmem:[#allocation5 + $0x7f8] sm:$0xff]
    %v2746 = vld [vmem:[%s15] sm:$0xf]
    %v2748 = vlaneseq
    %v2749 = vshrl.u32 %v2748, 7
    %v2750 = vsub.s32 0, %v2749
    %v2751 = vrot.slane %v2746, %v2750
    %v2752 = vlaneseq
    %v2753 = vshrl.u32 %v2752, 7
    %v2754 = vsub.s32 1, %v2753
    %v2755 = vrot.slane %v2746, %v2754
    %v2756 = vlaneseq
    %v2757 = vshrl.u32 %v2756, 7
    %v2758 = vsub.s32 2, %v2757
    %v2759 = vrot.slane %v2746, %v2758
    %v2760 = vlaneseq
    %v2761 = vshrl.u32 %v2760, 7
    %v2762 = vsub.s32 3, %v2761
    %v2763 = vrot.slane %v2746, %v2762
    %v2784 = vunpack.c.l.b16 %v2339
    %v2785 = vunpack.c.l.b16 %v2349
    %v2786 = vunpack.c.l.b16 %v2359
    %v2787 = vunpack.c.l.b16 %v2369
    %v2788 = vunpack.c.l.b16 %v2379
    %v2789 = vunpack.c.l.b16 %v2389
    %v2790 = vunpack.c.l.b16 %v2399
    %v2791 = vunpack.c.l.b16 %v2409
    %v2792 = vunpack.c.l.b16 %v2419
    %v2793 = vunpack.c.l.b16 %v2429
    %v2794 = vunpack.c.l.b16 %v2439
    %v2795 = vunpack.c.l.b16 %v2449
    %v2796 = vunpack.c.l.b16 %v2459
    %v2797 = vunpack.c.l.b16 %v2469
    %v2798 = vunpack.c.l.b16 %v2479
    %v2799 = vunpack.c.l.b16 %v2489
    %vm2800 = vcmask 1041409
    %v2801 = vsel %vm2800, %v2792, %v2784
    %v2802 = vsel %vm2800, %v2793, %v2785
    %v2803 = vsel %vm2800, %v2794, %v2786
    %v2804 = vsel %vm2800, %v2795, %v2787
    %v2805 = vsel %vm2800, %v2796, %v2788
    %v2806 = vsel %vm2800, %v2797, %v2789
    %v2807 = vsel %vm2800, %v2798, %v2790
    %v2808 = vsel %vm2800, %v2799, %v2791
    %v2809 = vpack.c.b16 %v2801, %v2801
    %v2810 = vpack.c.b16 %v2802, %v2802
    %v2811 = vpack.c.b16 %v2803, %v2803
    %v2812 = vpack.c.b16 %v2804, %v2804
    %v2813 = vpack.c.b16 %v2805, %v2805
    %v2814 = vpack.c.b16 %v2806, %v2806
    %v2815 = vpack.c.b16 %v2807, %v2807
    %v2816 = vpack.c.b16 %v2808, %v2808
    %v3081 = vunpack.c.l.b16 %v2490
    %v3082 = vunpack.c.h.b16 %v2490
    %v3083 = vunpack.c.l.b16 %v2491
    %v3084 = vunpack.c.h.b16 %v2491
    %v3085 = vunpack.c.l.b16 %v2492
    %v3086 = vunpack.c.h.b16 %v2492
    %v3087 = vunpack.c.l.b16 %v2493
    %v3088 = vunpack.c.h.b16 %v2493
    %v3089 = vunpack.c.l.b16 %v2494
    %v3090 = vunpack.c.h.b16 %v2494
    %v3091 = vunpack.c.l.b16 %v2495
    %v3092 = vunpack.c.h.b16 %v2495
    %v3093 = vunpack.c.l.b16 %v2496
    %v3094 = vunpack.c.h.b16 %v2496
    %v3095 = vunpack.c.l.b16 %v2497
    %v3096 = vunpack.c.h.b16 %v2497
    %v3097 = vunpack.c.l.b16 %v2498
    %v3098 = vunpack.c.h.b16 %v2498
    %v3099 = vunpack.c.l.b16 %v2499
    %v3100 = vunpack.c.h.b16 %v2499
    %v3101 = vunpack.c.l.b16 %v2500
    %v3102 = vunpack.c.h.b16 %v2500
    %v3103 = vunpack.c.l.b16 %v2501
    %v3104 = vunpack.c.h.b16 %v2501
    %v3105 = vunpack.c.l.b16 %v2502
    %v3106 = vunpack.c.h.b16 %v2502
    %v3107 = vunpack.c.l.b16 %v2503
    %v3108 = vunpack.c.h.b16 %v2503
    %v3109 = vunpack.c.l.b16 %v2504
    %v3110 = vunpack.c.h.b16 %v2504
    %v3111 = vunpack.c.l.b16 %v2505
    %v3112 = vunpack.c.h.b16 %v2505
    %v3113 = vunpack.c.l.b16 %v2506
    %v3114 = vunpack.c.h.b16 %v2506
    %v3115 = vunpack.c.l.b16 %v2507
    %v3116 = vunpack.c.h.b16 %v2507
    %v3117 = vunpack.c.l.b16 %v2508
    %v3118 = vunpack.c.h.b16 %v2508
    %v3119 = vunpack.c.l.b16 %v2509
    %v3120 = vunpack.c.h.b16 %v2509
    %v3121 = vunpack.c.l.b16 %v2510
    %v3122 = vunpack.c.h.b16 %v2510
    %v3123 = vunpack.c.l.b16 %v2511
    %v3124 = vunpack.c.h.b16 %v2511
    %v3125 = vunpack.c.l.b16 %v2512
    %v3126 = vunpack.c.h.b16 %v2512
    %v3127 = vunpack.c.l.b16 %v2513
    %v3128 = vunpack.c.h.b16 %v2513
    %v3129 = vunpack.c.l.b16 %v2514
    %v3130 = vunpack.c.h.b16 %v2514
    %v3131 = vunpack.c.l.b16 %v2515
    %v3132 = vunpack.c.h.b16 %v2515
    %v3133 = vunpack.c.l.b16 %v2516
    %v3134 = vunpack.c.h.b16 %v2516
    %v3135 = vunpack.c.l.b16 %v2517
    %v3136 = vunpack.c.h.b16 %v2517
    %v3137 = vunpack.c.l.b16 %v2518
    %v3138 = vunpack.c.h.b16 %v2518
    %v3139 = vunpack.c.l.b16 %v2519
    %v3140 = vunpack.c.h.b16 %v2519
    %v3141 = vunpack.c.l.b16 %v2520
    %v3142 = vunpack.c.h.b16 %v2520
    %v3143 = vunpack.c.l.b16 %v2521
    %v3144 = vunpack.c.h.b16 %v2521
    %v3145 = vunpack.c.l.b16 %v2522
    %v3146 = vunpack.c.h.b16 %v2522
    %v3147 = vunpack.c.l.b16 %v2523
    %v3148 = vunpack.c.h.b16 %v2523
    %v3149 = vunpack.c.l.b16 %v2524
    %v3150 = vunpack.c.h.b16 %v2524
    %v3151 = vunpack.c.l.b16 %v2525
    %v3152 = vunpack.c.h.b16 %v2525
    %v3153 = vunpack.c.l.b16 %v2526
    %v3154 = vunpack.c.h.b16 %v2526
    %v3155 = vunpack.c.l.b16 %v2527
    %v3156 = vunpack.c.h.b16 %v2527
    %v3157 = vunpack.c.l.b16 %v2528
    %v3158 = vunpack.c.h.b16 %v2528
    %v3159 = vunpack.c.l.b16 %v2529
    %v3160 = vunpack.c.h.b16 %v2529
    %v3161 = vunpack.c.l.b16 %v2530
    %v3162 = vunpack.c.h.b16 %v2530
    %v3163 = vunpack.c.l.b16 %v2531
    %v3164 = vunpack.c.h.b16 %v2531
    %v3165 = vunpack.c.l.b16 %v2532
    %v3166 = vunpack.c.h.b16 %v2532
    %v3167 = vunpack.c.l.b16 %v2533
    %v3168 = vunpack.c.h.b16 %v2533
    %v3169 = vunpack.c.l.b16 %v2534
    %v3170 = vunpack.c.h.b16 %v2534
    %v3171 = vunpack.c.l.b16 %v2535
    %v3172 = vunpack.c.h.b16 %v2535
    %v3173 = vunpack.c.l.b16 %v2536
    %v3174 = vunpack.c.h.b16 %v2536
    %v3175 = vunpack.c.l.b16 %v2537
    %v3176 = vunpack.c.h.b16 %v2537
    %v3177 = vunpack.c.l.b16 %v2538
    %v3178 = vunpack.c.h.b16 %v2538
    %v3179 = vunpack.c.l.b16 %v2539
    %v3180 = vunpack.c.h.b16 %v2539
    %v3181 = vunpack.c.l.b16 %v2540
    %v3182 = vunpack.c.h.b16 %v2540
    %v3183 = vunpack.c.l.b16 %v2541
    %v3184 = vunpack.c.h.b16 %v2541
    %v3185 = vunpack.c.l.b16 %v2542
    %v3186 = vunpack.c.h.b16 %v2542
    %v3187 = vunpack.c.l.b16 %v2543
    %v3188 = vunpack.c.h.b16 %v2543
    %v3189 = vunpack.c.l.b16 %v2544
    %v3190 = vunpack.c.h.b16 %v2544
    %v3191 = vunpack.c.l.b16 %v2545
    %v3192 = vunpack.c.h.b16 %v2545
    %v3193 = vunpack.c.l.b16 %v2546
    %v3194 = vunpack.c.h.b16 %v2546
    %v3195 = vunpack.c.l.b16 %v2547
    %v3196 = vunpack.c.h.b16 %v2547
    %v3197 = vunpack.c.l.b16 %v2548
    %v3198 = vunpack.c.h.b16 %v2548
    %v3199 = vunpack.c.l.b16 %v2549
    %v3200 = vunpack.c.h.b16 %v2549
    %v3201 = vunpack.c.l.b16 %v2550
    %v3202 = vunpack.c.h.b16 %v2550
    %v3203 = vunpack.c.l.b16 %v2551
    %v3204 = vunpack.c.h.b16 %v2551
    %v3205 = vunpack.c.l.b16 %v2552
    %v3206 = vunpack.c.h.b16 %v2552
    %v3207 = vunpack.c.l.b16 %v2553
    %v3208 = vunpack.c.h.b16 %v2553
    %v3209 = vunpack.c.l.b16 %v2554
    %v3210 = vunpack.c.h.b16 %v2554
    %v3211 = vunpack.c.l.b16 %v2555
    %v3212 = vunpack.c.h.b16 %v2555
    %v3213 = vunpack.c.l.b16 %v2556
    %v3214 = vunpack.c.h.b16 %v2556
    %v3215 = vunpack.c.l.b16 %v2557
    %v3216 = vunpack.c.h.b16 %v2557
    %v3217 = vunpack.c.l.b16 %v2558
    %v3218 = vunpack.c.h.b16 %v2558
    %v3219 = vunpack.c.l.b16 %v2559
    %v3220 = vunpack.c.h.b16 %v2559
    %v3221 = vunpack.c.l.b16 %v2560
    %v3222 = vunpack.c.h.b16 %v2560
    %v3223 = vunpack.c.l.b16 %v2561
    %v3224 = vunpack.c.h.b16 %v2561
    %v3225 = vunpack.c.l.b16 %v2562
    %v3226 = vunpack.c.h.b16 %v2562
    %v3227 = vunpack.c.l.b16 %v2563
    %v3228 = vunpack.c.h.b16 %v2563
    %v3229 = vunpack.c.l.b16 %v2564
    %v3230 = vunpack.c.h.b16 %v2564
    %v3231 = vunpack.c.l.b16 %v2565
    %v3232 = vunpack.c.h.b16 %v2565
    %v3233 = vunpack.c.l.b16 %v2566
    %v3234 = vunpack.c.h.b16 %v2566
    %v3235 = vunpack.c.l.b16 %v2567
    %v3236 = vunpack.c.h.b16 %v2567
    %v3237 = vunpack.c.l.b16 %v2568
    %v3238 = vunpack.c.h.b16 %v2568
    %v3239 = vunpack.c.l.b16 %v2569
    %v3240 = vunpack.c.h.b16 %v2569
    %v3241 = vunpack.c.l.b16 %v2570
    %v3242 = vunpack.c.h.b16 %v2570
    %v3243 = vunpack.c.l.b16 %v2571
    %v3244 = vunpack.c.h.b16 %v2571
    %v3245 = vunpack.c.l.b16 %v2572
    %v3246 = vunpack.c.h.b16 %v2572
    %v3247 = vunpack.c.l.b16 %v2573
    %v3248 = vunpack.c.h.b16 %v2573
    %v3249 = vunpack.c.l.b16 %v2574
    %v3250 = vunpack.c.h.b16 %v2574
    %v3251 = vunpack.c.l.b16 %v2575
    %v3252 = vunpack.c.h.b16 %v2575
    %v3253 = vunpack.c.l.b16 %v2576
    %v3254 = vunpack.c.h.b16 %v2576
    %v3255 = vunpack.c.l.b16 %v2577
    %v3256 = vunpack.c.h.b16 %v2577
    %v3257 = vunpack.c.l.b16 %v2578
    %v3258 = vunpack.c.h.b16 %v2578
    %v3259 = vunpack.c.l.b16 %v2579
    %v3260 = vunpack.c.h.b16 %v2579
    %v3261 = vunpack.c.l.b16 %v2580
    %v3262 = vunpack.c.h.b16 %v2580
    %v3263 = vunpack.c.l.b16 %v2581
    %v3264 = vunpack.c.h.b16 %v2581
    %v3265 = vunpack.c.l.b16 %v2582
    %v3266 = vunpack.c.h.b16 %v2582
    %v3267 = vunpack.c.l.b16 %v2583
    %v3268 = vunpack.c.h.b16 %v2583
    %v3269 = vunpack.c.l.b16 %v2584
    %v3270 = vunpack.c.h.b16 %v2584
    %v3271 = vunpack.c.l.b16 %v2585
    %v3272 = vunpack.c.h.b16 %v2585
    %v3273 = vunpack.c.l.b16 %v2586
    %v3274 = vunpack.c.h.b16 %v2586
    %v3275 = vunpack.c.l.b16 %v2587
    %v3276 = vunpack.c.h.b16 %v2587
    %v3277 = vunpack.c.l.b16 %v2588
    %v3278 = vunpack.c.h.b16 %v2588
    %v3279 = vunpack.c.l.b16 %v2589
    %v3280 = vunpack.c.h.b16 %v2589
    %v3281 = vunpack.c.l.b16 %v2590
    %v3282 = vunpack.c.h.b16 %v2590
    %v3283 = vunpack.c.l.b16 %v2591
    %v3284 = vunpack.c.h.b16 %v2591
    %v3285 = vunpack.c.l.b16 %v2592
    %v3286 = vunpack.c.h.b16 %v2592
    %v3287 = vunpack.c.l.b16 %v2593
    %v3288 = vunpack.c.h.b16 %v2593
    %v3289 = vunpack.c.l.b16 %v2594
    %v3290 = vunpack.c.h.b16 %v2594
    %v3291 = vunpack.c.l.b16 %v2595
    %v3292 = vunpack.c.h.b16 %v2595
    %v3293 = vunpack.c.l.b16 %v2596
    %v3294 = vunpack.c.h.b16 %v2596
    %v3295 = vunpack.c.l.b16 %v2597
    %v3296 = vunpack.c.h.b16 %v2597
    %v3297 = vunpack.c.l.b16 %v2598
    %v3298 = vunpack.c.h.b16 %v2598
    %v3299 = vunpack.c.l.b16 %v2599
    %v3300 = vunpack.c.h.b16 %v2599
    %v3301 = vunpack.c.l.b16 %v2600
    %v3302 = vunpack.c.h.b16 %v2600
    %v3303 = vunpack.c.l.b16 %v2601
    %v3304 = vunpack.c.h.b16 %v2601
    %v3305 = vunpack.c.l.b16 %v2602
    %v3306 = vunpack.c.h.b16 %v2602
    %v3307 = vunpack.c.l.b16 %v2603
    %v3308 = vunpack.c.h.b16 %v2603
    %v3309 = vunpack.c.l.b16 %v2604
    %v3310 = vunpack.c.h.b16 %v2604
    %v3311 = vunpack.c.l.b16 %v2605
    %v3312 = vunpack.c.h.b16 %v2605
    %v3313 = vunpack.c.l.b16 %v2606
    %v3314 = vunpack.c.h.b16 %v2606
    %v3315 = vunpack.c.l.b16 %v2607
    %v3316 = vunpack.c.h.b16 %v2607
    %v3317 = vunpack.c.l.b16 %v2608
    %v3318 = vunpack.c.h.b16 %v2608
    %v3319 = vunpack.c.l.b16 %v2609
    %v3320 = vunpack.c.h.b16 %v2609
    %v3321 = vunpack.c.l.b16 %v2610
    %v3322 = vunpack.c.h.b16 %v2610
    %v3323 = vunpack.c.l.b16 %v2611
    %v3324 = vunpack.c.h.b16 %v2611
    %v3325 = vunpack.c.l.b16 %v2612
    %v3326 = vunpack.c.h.b16 %v2612
    %v3327 = vunpack.c.l.b16 %v2613
    %v3328 = vunpack.c.h.b16 %v2613
    %v3329 = vunpack.c.l.b16 %v2614
    %v3330 = vunpack.c.h.b16 %v2614
    %v3331 = vunpack.c.l.b16 %v2615
    %v3332 = vunpack.c.h.b16 %v2615
    %v3333 = vunpack.c.l.b16 %v2616
    %v3334 = vunpack.c.h.b16 %v2616
    %v3335 = vunpack.c.l.b16 %v2617
    %v3336 = vunpack.c.h.b16 %v2617
    %v3337 = vunpack.c.l.b16 %v2618
    %v3338 = vunpack.c.h.b16 %v2618
    %v3339 = vunpack.c.l.b16 %v2619
    %v3340 = vunpack.c.h.b16 %v2619
    %v3341 = vunpack.c.l.b16 %v2620
    %v3342 = vunpack.c.h.b16 %v2620
    %v3343 = vunpack.c.l.b16 %v2621
    %v3344 = vunpack.c.h.b16 %v2621
    %v3345 = vunpack.c.l.b16 %v2622
    %v3346 = vunpack.c.h.b16 %v2622
    %v3347 = vunpack.c.l.b16 %v2623
    %v3348 = vunpack.c.h.b16 %v2623
    %v3349 = vunpack.c.l.b16 %v2624
    %v3350 = vunpack.c.h.b16 %v2624
    %v3351 = vunpack.c.l.b16 %v2625
    %v3352 = vunpack.c.h.b16 %v2625
    %v3353 = vunpack.c.l.b16 %v2626
    %v3354 = vunpack.c.h.b16 %v2626
    %v3355 = vunpack.c.l.b16 %v2627
    %v3356 = vunpack.c.h.b16 %v2627
    %v3357 = vunpack.c.l.b16 %v2628
    %v3358 = vunpack.c.h.b16 %v2628
    %v3359 = vunpack.c.l.b16 %v2629
    %v3360 = vunpack.c.h.b16 %v2629
    %v3361 = vunpack.c.l.b16 %v2630
    %v3362 = vunpack.c.h.b16 %v2630
    %v3363 = vunpack.c.l.b16 %v2631
    %v3364 = vunpack.c.h.b16 %v2631
    %v3365 = vunpack.c.l.b16 %v2632
    %v3366 = vunpack.c.h.b16 %v2632
    %v3367 = vunpack.c.l.b16 %v2633
    %v3368 = vunpack.c.h.b16 %v2633
    %v3369 = vunpack.c.l.b16 %v2634
    %v3370 = vunpack.c.h.b16 %v2634
    %v3371 = vunpack.c.l.b16 %v2635
    %v3372 = vunpack.c.h.b16 %v2635
    %v3373 = vunpack.c.l.b16 %v2636
    %v3374 = vunpack.c.h.b16 %v2636
    %v3375 = vunpack.c.l.b16 %v2637
    %v3376 = vunpack.c.h.b16 %v2637
    %v3377 = vunpack.c.l.b16 %v2638
    %v3378 = vunpack.c.h.b16 %v2638
    %v3379 = vunpack.c.l.b16 %v2639
    %v3380 = vunpack.c.h.b16 %v2639
    %v3381 = vunpack.c.l.b16 %v2640
    %v3382 = vunpack.c.h.b16 %v2640
    %v3383 = vunpack.c.l.b16 %v2641
    %v3384 = vunpack.c.h.b16 %v2641
    %v3385 = vunpack.c.l.b16 %v2642
    %v3386 = vunpack.c.h.b16 %v2642
    %v3387 = vunpack.c.l.b16 %v2643
    %v3388 = vunpack.c.h.b16 %v2643
    %v3389 = vunpack.c.l.b16 %v2644
    %v3390 = vunpack.c.h.b16 %v2644
    %v3391 = vunpack.c.l.b16 %v2645
    %v3392 = vunpack.c.h.b16 %v2645
    %v3393 = vunpack.c.l.b16 %v2646
    %v3394 = vunpack.c.h.b16 %v2646
    %v3395 = vunpack.c.l.b16 %v2647
    %v3396 = vunpack.c.h.b16 %v2647
    %v3397 = vunpack.c.l.b16 %v2648
    %v3398 = vunpack.c.h.b16 %v2648
    %v3399 = vunpack.c.l.b16 %v2649
    %v3400 = vunpack.c.h.b16 %v2649
    %v3401 = vunpack.c.l.b16 %v2650
    %v3402 = vunpack.c.h.b16 %v2650
    %v3403 = vunpack.c.l.b16 %v2651
    %v3404 = vunpack.c.h.b16 %v2651
    %v3405 = vunpack.c.l.b16 %v2652
    %v3406 = vunpack.c.h.b16 %v2652
    %v3407 = vunpack.c.l.b16 %v2653
    %v3408 = vunpack.c.h.b16 %v2653
    %v3409 = vunpack.c.l.b16 %v2654
    %v3410 = vunpack.c.h.b16 %v2654
    %v3411 = vunpack.c.l.b16 %v2655
    %v3412 = vunpack.c.h.b16 %v2655
    %v3413 = vunpack.c.l.b16 %v2656
    %v3414 = vunpack.c.h.b16 %v2656
    %v3415 = vunpack.c.l.b16 %v2657
    %v3416 = vunpack.c.h.b16 %v2657
    %v3417 = vunpack.c.l.b16 %v2658
    %v3418 = vunpack.c.h.b16 %v2658
    %v3419 = vunpack.c.l.b16 %v2659
    %v3420 = vunpack.c.h.b16 %v2659
    %v3421 = vunpack.c.l.b16 %v2660
    %v3422 = vunpack.c.h.b16 %v2660
    %v3423 = vunpack.c.l.b16 %v2661
    %v3424 = vunpack.c.h.b16 %v2661
    %v3425 = vunpack.c.l.b16 %v2662
    %v3426 = vunpack.c.h.b16 %v2662
    %v3427 = vunpack.c.l.b16 %v2663
    %v3428 = vunpack.c.h.b16 %v2663
    %v3429 = vunpack.c.l.b16 %v2664
    %v3430 = vunpack.c.h.b16 %v2664
    %v3431 = vunpack.c.l.b16 %v2665
    %v3432 = vunpack.c.h.b16 %v2665
    %v3433 = vunpack.c.l.b16 %v2666
    %v3434 = vunpack.c.h.b16 %v2666
    %v3435 = vunpack.c.l.b16 %v2667
    %v3436 = vunpack.c.h.b16 %v2667
    %v3437 = vunpack.c.l.b16 %v2668
    %v3438 = vunpack.c.h.b16 %v2668
    %v3439 = vunpack.c.l.b16 %v2669
    %v3440 = vunpack.c.h.b16 %v2669
    %v3441 = vunpack.c.l.b16 %v2670
    %v3442 = vunpack.c.h.b16 %v2670
    %v3443 = vunpack.c.l.b16 %v2671
    %v3444 = vunpack.c.h.b16 %v2671
    %v3445 = vunpack.c.l.b16 %v2672
    %v3446 = vunpack.c.h.b16 %v2672
    %v3447 = vunpack.c.l.b16 %v2673
    %v3448 = vunpack.c.h.b16 %v2673
    %v3449 = vunpack.c.l.b16 %v2674
    %v3450 = vunpack.c.h.b16 %v2674
    %v3451 = vunpack.c.l.b16 %v2675
    %v3452 = vunpack.c.h.b16 %v2675
    %v3453 = vunpack.c.l.b16 %v2676
    %v3454 = vunpack.c.h.b16 %v2676
    %v3455 = vunpack.c.l.b16 %v2677
    %v3456 = vunpack.c.h.b16 %v2677
    %v3457 = vunpack.c.l.b16 %v2678
    %v3458 = vunpack.c.h.b16 %v2678
    %v3459 = vunpack.c.l.b16 %v2679
    %v3460 = vunpack.c.h.b16 %v2679
    %v3461 = vunpack.c.l.b16 %v2680
    %v3462 = vunpack.c.h.b16 %v2680
    %v3463 = vunpack.c.l.b16 %v2681
    %v3464 = vunpack.c.h.b16 %v2681
    %v3465 = vunpack.c.l.b16 %v2682
    %v3466 = vunpack.c.h.b16 %v2682
    %v3467 = vunpack.c.l.b16 %v2683
    %v3468 = vunpack.c.h.b16 %v2683
    %v3469 = vunpack.c.l.b16 %v2684
    %v3470 = vunpack.c.h.b16 %v2684
    %v3471 = vunpack.c.l.b16 %v2685
    %v3472 = vunpack.c.h.b16 %v2685
    %v3473 = vunpack.c.l.b16 %v2686
    %v3474 = vunpack.c.h.b16 %v2686
    %v3475 = vunpack.c.l.b16 %v2687
    %v3476 = vunpack.c.h.b16 %v2687
    %v3477 = vunpack.c.l.b16 %v2688
    %v3478 = vunpack.c.h.b16 %v2688
    %v3479 = vunpack.c.l.b16 %v2689
    %v3480 = vunpack.c.h.b16 %v2689
    %v3481 = vunpack.c.l.b16 %v2690
    %v3482 = vunpack.c.h.b16 %v2690
    %v3483 = vunpack.c.l.b16 %v2691
    %v3484 = vunpack.c.h.b16 %v2691
    %v3485 = vunpack.c.l.b16 %v2692
    %v3486 = vunpack.c.h.b16 %v2692
    %v3487 = vunpack.c.l.b16 %v2693
    %v3488 = vunpack.c.h.b16 %v2693
    %v3489 = vunpack.c.l.b16 %v2694
    %v3490 = vunpack.c.h.b16 %v2694
    %v3491 = vunpack.c.l.b16 %v2695
    %v3492 = vunpack.c.h.b16 %v2695
    %v3493 = vunpack.c.l.b16 %v2696
    %v3494 = vunpack.c.h.b16 %v2696
    %v3495 = vunpack.c.l.b16 %v2697
    %v3496 = vunpack.c.h.b16 %v2697
    %v3497 = vunpack.c.l.b16 %v2698
    %v3498 = vunpack.c.h.b16 %v2698
    %v3499 = vunpack.c.l.b16 %v2699
    %v3500 = vunpack.c.h.b16 %v2699
    %v3501 = vunpack.c.l.b16 %v2700
    %v3502 = vunpack.c.h.b16 %v2700
    %v3503 = vunpack.c.l.b16 %v2701
    %v3504 = vunpack.c.h.b16 %v2701
    %v3505 = vunpack.c.l.b16 %v2702
    %v3506 = vunpack.c.h.b16 %v2702
    %v3507 = vunpack.c.l.b16 %v2703
    %v3508 = vunpack.c.h.b16 %v2703
    %v3509 = vunpack.c.l.b16 %v2704
    %v3510 = vunpack.c.h.b16 %v2704
    %v3511 = vunpack.c.l.b16 %v2705
    %v3512 = vunpack.c.h.b16 %v2705
    %v3513 = vunpack.c.l.b16 %v2706
    %v3514 = vunpack.c.h.b16 %v2706
    %v3515 = vunpack.c.l.b16 %v2707
    %v3516 = vunpack.c.h.b16 %v2707
    %v3517 = vunpack.c.l.b16 %v2708
    %v3518 = vunpack.c.h.b16 %v2708
    %v3519 = vunpack.c.l.b16 %v2709
    %v3520 = vunpack.c.h.b16 %v2709
    %v3521 = vunpack.c.l.b16 %v2710
    %v3522 = vunpack.c.h.b16 %v2710
    %v3523 = vunpack.c.l.b16 %v2711
    %v3524 = vunpack.c.h.b16 %v2711
    %v3525 = vunpack.c.l.b16 %v2712
    %v3526 = vunpack.c.h.b16 %v2712
    %v3527 = vunpack.c.l.b16 %v2713
    %v3528 = vunpack.c.h.b16 %v2713
    %v3529 = vunpack.c.l.b16 %v2714
    %v3530 = vunpack.c.h.b16 %v2714
    %v3531 = vunpack.c.l.b16 %v2715
    %v3532 = vunpack.c.h.b16 %v2715
    %v3533 = vunpack.c.l.b16 %v2716
    %v3534 = vunpack.c.h.b16 %v2716
    %v3535 = vunpack.c.l.b16 %v2717
    %v3536 = vunpack.c.h.b16 %v2717
    %v3537 = vunpack.c.l.b16 %v2718
    %v3538 = vunpack.c.h.b16 %v2718
    %v3539 = vunpack.c.l.b16 %v2719
    %v3540 = vunpack.c.h.b16 %v2719
    %v3541 = vunpack.c.l.b16 %v2720
    %v3542 = vunpack.c.h.b16 %v2720
    %v3543 = vunpack.c.l.b16 %v2721
    %v3544 = vunpack.c.h.b16 %v2721
    %v3545 = vunpack.c.l.b16 %v2722
    %v3546 = vunpack.c.h.b16 %v2722
    %v3547 = vunpack.c.l.b16 %v2723
    %v3548 = vunpack.c.h.b16 %v2723
    %v3549 = vunpack.c.l.b16 %v2724
    %v3550 = vunpack.c.h.b16 %v2724
    %v3551 = vunpack.c.l.b16 %v2725
    %v3552 = vunpack.c.h.b16 %v2725
    %v3553 = vunpack.c.l.b16 %v2726
    %v3554 = vunpack.c.h.b16 %v2726
    %v3555 = vunpack.c.l.b16 %v2727
    %v3556 = vunpack.c.h.b16 %v2727
    %v3557 = vunpack.c.l.b16 %v2728
    %v3558 = vunpack.c.h.b16 %v2728
    %v3559 = vunpack.c.l.b16 %v2729
    %v3560 = vunpack.c.h.b16 %v2729
    %v3561 = vunpack.c.l.b16 %v2730
    %v3562 = vunpack.c.h.b16 %v2730
    %v3563 = vunpack.c.l.b16 %v2731
    %v3564 = vunpack.c.h.b16 %v2731
    %v3565 = vunpack.c.l.b16 %v2732
    %v3566 = vunpack.c.h.b16 %v2732
    %v3567 = vunpack.c.l.b16 %v2733
    %v3568 = vunpack.c.h.b16 %v2733
    %v3569 = vunpack.c.l.b16 %v2734
    %v3570 = vunpack.c.h.b16 %v2734
    %v3571 = vunpack.c.l.b16 %v2735
    %v3572 = vunpack.c.h.b16 %v2735
    %v3573 = vunpack.c.l.b16 %v2736
    %v3574 = vunpack.c.h.b16 %v2736
    %v3575 = vunpack.c.l.b16 %v2737
    %v3576 = vunpack.c.h.b16 %v2737
    %v3577 = vunpack.c.l.b16 %v2738
    %v3578 = vunpack.c.h.b16 %v2738
    %v3579 = vunpack.c.l.b16 %v2739
    %v3580 = vunpack.c.h.b16 %v2739
    %v3581 = vunpack.c.l.b16 %v2740
    %v3582 = vunpack.c.h.b16 %v2740
    %v3583 = vunpack.c.l.b16 %v2741
    %v3584 = vunpack.c.h.b16 %v2741
    %v3585 = vunpack.c.l.b16 %v2742
    %v3586 = vunpack.c.h.b16 %v2742
    %v3587 = vunpack.c.l.b16 %v2743
    %v3588 = vunpack.c.h.b16 %v2743
    %v3589 = vunpack.c.l.b16 %v2744
    %v3590 = vunpack.c.h.b16 %v2744
    %v3591 = vunpack.c.l.b16 %v2745
    %v3592 = vunpack.c.h.b16 %v2745
    %v3593 = vpack.c.b16 %v3085, %v3081
    %v3594 = vpack.c.b16 %v3086, %v3082
    %v3595 = vpack.c.b16 %v3087, %v3083
    %v3596 = vpack.c.b16 %v3088, %v3084
    %v3597 = vpack.c.b16 %v3093, %v3089
    %v3598 = vpack.c.b16 %v3094, %v3090
    %v3599 = vpack.c.b16 %v3095, %v3091
    %v3600 = vpack.c.b16 %v3096, %v3092
    %v3601 = vpack.c.b16 %v3101, %v3097
    %v3602 = vpack.c.b16 %v3102, %v3098
    %v3603 = vpack.c.b16 %v3103, %v3099
    %v3604 = vpack.c.b16 %v3104, %v3100
    %v3605 = vpack.c.b16 %v3109, %v3105
    %v3606 = vpack.c.b16 %v3110, %v3106
    %v3607 = vpack.c.b16 %v3111, %v3107
    %v3608 = vpack.c.b16 %v3112, %v3108
    %v3609 = vpack.c.b16 %v3117, %v3113
    %v3610 = vpack.c.b16 %v3118, %v3114
    %v3611 = vpack.c.b16 %v3119, %v3115
    %v3612 = vpack.c.b16 %v3120, %v3116
    %v3613 = vpack.c.b16 %v3125, %v3121
    %v3614 = vpack.c.b16 %v3126, %v3122
    %v3615 = vpack.c.b16 %v3127, %v3123
    %v3616 = vpack.c.b16 %v3128, %v3124
    %v3617 = vpack.c.b16 %v3133, %v3129
    %v3618 = vpack.c.b16 %v3134, %v3130
    %v3619 = vpack.c.b16 %v3135, %v3131
    %v3620 = vpack.c.b16 %v3136, %v3132
    %v3621 = vpack.c.b16 %v3141, %v3137
    %v3622 = vpack.c.b16 %v3142, %v3138
    %v3623 = vpack.c.b16 %v3143, %v3139
    %v3624 = vpack.c.b16 %v3144, %v3140
    %v3625 = vpack.c.b16 %v3149, %v3145
    %v3626 = vpack.c.b16 %v3150, %v3146
    %v3627 = vpack.c.b16 %v3151, %v3147
    %v3628 = vpack.c.b16 %v3152, %v3148
    %v3629 = vpack.c.b16 %v3157, %v3153
    %v3630 = vpack.c.b16 %v3158, %v3154
    %v3631 = vpack.c.b16 %v3159, %v3155
    %v3632 = vpack.c.b16 %v3160, %v3156
    %v3633 = vpack.c.b16 %v3165, %v3161
    %v3634 = vpack.c.b16 %v3166, %v3162
    %v3635 = vpack.c.b16 %v3167, %v3163
    %v3636 = vpack.c.b16 %v3168, %v3164
    %v3637 = vpack.c.b16 %v3173, %v3169
    %v3638 = vpack.c.b16 %v3174, %v3170
    %v3639 = vpack.c.b16 %v3175, %v3171
    %v3640 = vpack.c.b16 %v3176, %v3172
    %v3641 = vpack.c.b16 %v3181, %v3177
    %v3642 = vpack.c.b16 %v3182, %v3178
    %v3643 = vpack.c.b16 %v3183, %v3179
    %v3644 = vpack.c.b16 %v3184, %v3180
    %v3645 = vpack.c.b16 %v3189, %v3185
    %v3646 = vpack.c.b16 %v3190, %v3186
    %v3647 = vpack.c.b16 %v3191, %v3187
    %v3648 = vpack.c.b16 %v3192, %v3188
    %v3649 = vpack.c.b16 %v3197, %v3193
    %v3650 = vpack.c.b16 %v3198, %v3194
    %v3651 = vpack.c.b16 %v3199, %v3195
    %v3652 = vpack.c.b16 %v3200, %v3196
    %v3653 = vpack.c.b16 %v3205, %v3201
    %v3654 = vpack.c.b16 %v3206, %v3202
    %v3655 = vpack.c.b16 %v3207, %v3203
    %v3656 = vpack.c.b16 %v3208, %v3204
    %v3657 = vpack.c.b16 %v3213, %v3209
    %v3658 = vpack.c.b16 %v3214, %v3210
    %v3659 = vpack.c.b16 %v3215, %v3211
    %v3660 = vpack.c.b16 %v3216, %v3212
    %v3661 = vpack.c.b16 %v3221, %v3217
    %v3662 = vpack.c.b16 %v3222, %v3218
    %v3663 = vpack.c.b16 %v3223, %v3219
    %v3664 = vpack.c.b16 %v3224, %v3220
    %v3665 = vpack.c.b16 %v3229, %v3225
    %v3666 = vpack.c.b16 %v3230, %v3226
    %v3667 = vpack.c.b16 %v3231, %v3227
    %v3668 = vpack.c.b16 %v3232, %v3228
    %v3669 = vpack.c.b16 %v3237, %v3233
    %v3670 = vpack.c.b16 %v3238, %v3234
    %v3671 = vpack.c.b16 %v3239, %v3235
    %v3672 = vpack.c.b16 %v3240, %v3236
    %v3673 = vpack.c.b16 %v3245, %v3241
    %v3674 = vpack.c.b16 %v3246, %v3242
    %v3675 = vpack.c.b16 %v3247, %v3243
    %v3676 = vpack.c.b16 %v3248, %v3244
    %v3677 = vpack.c.b16 %v3253, %v3249
    %v3678 = vpack.c.b16 %v3254, %v3250
    %v3679 = vpack.c.b16 %v3255, %v3251
    %v3680 = vpack.c.b16 %v3256, %v3252
    %v3681 = vpack.c.b16 %v3261, %v3257
    %v3682 = vpack.c.b16 %v3262, %v3258
    %v3683 = vpack.c.b16 %v3263, %v3259
    %v3684 = vpack.c.b16 %v3264, %v3260
    %v3685 = vpack.c.b16 %v3269, %v3265
    %v3686 = vpack.c.b16 %v3270, %v3266
    %v3687 = vpack.c.b16 %v3271, %v3267
    %v3688 = vpack.c.b16 %v3272, %v3268
    %v3689 = vpack.c.b16 %v3277, %v3273
    %v3690 = vpack.c.b16 %v3278, %v3274
    %v3691 = vpack.c.b16 %v3279, %v3275
    %v3692 = vpack.c.b16 %v3280, %v3276
    %v3693 = vpack.c.b16 %v3285, %v3281
    %v3694 = vpack.c.b16 %v3286, %v3282
    %v3695 = vpack.c.b16 %v3287, %v3283
    %v3696 = vpack.c.b16 %v3288, %v3284
    %v3697 = vpack.c.b16 %v3293, %v3289
    %v3698 = vpack.c.b16 %v3294, %v3290
    %v3699 = vpack.c.b16 %v3295, %v3291
    %v3700 = vpack.c.b16 %v3296, %v3292
    %v3701 = vpack.c.b16 %v3301, %v3297
    %v3702 = vpack.c.b16 %v3302, %v3298
    %v3703 = vpack.c.b16 %v3303, %v3299
    %v3704 = vpack.c.b16 %v3304, %v3300
    %v3705 = vpack.c.b16 %v3309, %v3305
    %v3706 = vpack.c.b16 %v3310, %v3306
    %v3707 = vpack.c.b16 %v3311, %v3307
    %v3708 = vpack.c.b16 %v3312, %v3308
    %v3709 = vpack.c.b16 %v3317, %v3313
    %v3710 = vpack.c.b16 %v3318, %v3314
    %v3711 = vpack.c.b16 %v3319, %v3315
    %v3712 = vpack.c.b16 %v3320, %v3316
    %v3713 = vpack.c.b16 %v3325, %v3321
    %v3714 = vpack.c.b16 %v3326, %v3322
    %v3715 = vpack.c.b16 %v3327, %v3323
    %v3716 = vpack.c.b16 %v3328, %v3324
    %v3717 = vpack.c.b16 %v3333, %v3329
    %v3718 = vpack.c.b16 %v3334, %v3330
    %v3719 = vpack.c.b16 %v3335, %v3331
    %v3720 = vpack.c.b16 %v3336, %v3332
    %v3721 = vpack.c.b16 %v3341, %v3337
    %v3722 = vpack.c.b16 %v3342, %v3338
    %v3723 = vpack.c.b16 %v3343, %v3339
    %v3724 = vpack.c.b16 %v3344, %v3340
    %v3725 = vpack.c.b16 %v3349, %v3345
    %v3726 = vpack.c.b16 %v3350, %v3346
    %v3727 = vpack.c.b16 %v3351, %v3347
    %v3728 = vpack.c.b16 %v3352, %v3348
    %v3729 = vpack.c.b16 %v3357, %v3353
    %v3730 = vpack.c.b16 %v3358, %v3354
    %v3731 = vpack.c.b16 %v3359, %v3355
    %v3732 = vpack.c.b16 %v3360, %v3356
    %v3733 = vpack.c.b16 %v3365, %v3361
    %v3734 = vpack.c.b16 %v3366, %v3362
    %v3735 = vpack.c.b16 %v3367, %v3363
    %v3736 = vpack.c.b16 %v3368, %v3364
    %v3737 = vpack.c.b16 %v3373, %v3369
    %v3738 = vpack.c.b16 %v3374, %v3370
    %v3739 = vpack.c.b16 %v3375, %v3371
    %v3740 = vpack.c.b16 %v3376, %v3372
    %v3741 = vpack.c.b16 %v3381, %v3377
    %v3742 = vpack.c.b16 %v3382, %v3378
    %v3743 = vpack.c.b16 %v3383, %v3379
    %v3744 = vpack.c.b16 %v3384, %v3380
    %v3745 = vpack.c.b16 %v3389, %v3385
    %v3746 = vpack.c.b16 %v3390, %v3386
    %v3747 = vpack.c.b16 %v3391, %v3387
    %v3748 = vpack.c.b16 %v3392, %v3388
    %v3749 = vpack.c.b16 %v3397, %v3393
    %v3750 = vpack.c.b16 %v3398, %v3394
    %v3751 = vpack.c.b16 %v3399, %v3395
    %v3752 = vpack.c.b16 %v3400, %v3396
    %v3753 = vpack.c.b16 %v3405, %v3401
    %v3754 = vpack.c.b16 %v3406, %v3402
    %v3755 = vpack.c.b16 %v3407, %v3403
    %v3756 = vpack.c.b16 %v3408, %v3404
    %v3757 = vpack.c.b16 %v3413, %v3409
    %v3758 = vpack.c.b16 %v3414, %v3410
    %v3759 = vpack.c.b16 %v3415, %v3411
    %v3760 = vpack.c.b16 %v3416, %v3412
    %v3761 = vpack.c.b16 %v3421, %v3417
    %v3762 = vpack.c.b16 %v3422, %v3418
    %v3763 = vpack.c.b16 %v3423, %v3419
    %v3764 = vpack.c.b16 %v3424, %v3420
    %v3765 = vpack.c.b16 %v3429, %v3425
    %v3766 = vpack.c.b16 %v3430, %v3426
    %v3767 = vpack.c.b16 %v3431, %v3427
    %v3768 = vpack.c.b16 %v3432, %v3428
    %v3769 = vpack.c.b16 %v3437, %v3433
    %v3770 = vpack.c.b16 %v3438, %v3434
    %v3771 = vpack.c.b16 %v3439, %v3435
    %v3772 = vpack.c.b16 %v3440, %v3436
    %v3773 = vpack.c.b16 %v3445, %v3441
    %v3774 = vpack.c.b16 %v3446, %v3442
    %v3775 = vpack.c.b16 %v3447, %v3443
    %v3776 = vpack.c.b16 %v3448, %v3444
    %v3777 = vpack.c.b16 %v3453, %v3449
    %v3778 = vpack.c.b16 %v3454, %v3450
    %v3779 = vpack.c.b16 %v3455, %v3451
    %v3780 = vpack.c.b16 %v3456, %v3452
    %v3781 = vpack.c.b16 %v3461, %v3457
    %v3782 = vpack.c.b16 %v3462, %v3458
    %v3783 = vpack.c.b16 %v3463, %v3459
    %v3784 = vpack.c.b16 %v3464, %v3460
    %v3785 = vpack.c.b16 %v3469, %v3465
    %v3786 = vpack.c.b16 %v3470, %v3466
    %v3787 = vpack.c.b16 %v3471, %v3467
    %v3788 = vpack.c.b16 %v3472, %v3468
    %v3789 = vpack.c.b16 %v3477, %v3473
    %v3790 = vpack.c.b16 %v3478, %v3474
    %v3791 = vpack.c.b16 %v3479, %v3475
    %v3792 = vpack.c.b16 %v3480, %v3476
    %v3793 = vpack.c.b16 %v3485, %v3481
    %v3794 = vpack.c.b16 %v3486, %v3482
    %v3795 = vpack.c.b16 %v3487, %v3483
    %v3796 = vpack.c.b16 %v3488, %v3484
    %v3797 = vpack.c.b16 %v3493, %v3489
    %v3798 = vpack.c.b16 %v3494, %v3490
    %v3799 = vpack.c.b16 %v3495, %v3491
    %v3800 = vpack.c.b16 %v3496, %v3492
    %v3801 = vpack.c.b16 %v3501, %v3497
    %v3802 = vpack.c.b16 %v3502, %v3498
    %v3803 = vpack.c.b16 %v3503, %v3499
    %v3804 = vpack.c.b16 %v3504, %v3500
    %v3805 = vpack.c.b16 %v3509, %v3505
    %v3806 = vpack.c.b16 %v3510, %v3506
    %v3807 = vpack.c.b16 %v3511, %v3507
    %v3808 = vpack.c.b16 %v3512, %v3508
    %v3809 = vpack.c.b16 %v3517, %v3513
    %v3810 = vpack.c.b16 %v3518, %v3514
    %v3811 = vpack.c.b16 %v3519, %v3515
    %v3812 = vpack.c.b16 %v3520, %v3516
    %v3813 = vpack.c.b16 %v3525, %v3521
    %v3814 = vpack.c.b16 %v3526, %v3522
    %v3815 = vpack.c.b16 %v3527, %v3523
    %v3816 = vpack.c.b16 %v3528, %v3524
    %v3817 = vpack.c.b16 %v3533, %v3529
    %v3818 = vpack.c.b16 %v3534, %v3530
    %v3819 = vpack.c.b16 %v3535, %v3531
    %v3820 = vpack.c.b16 %v3536, %v3532
    %v3821 = vpack.c.b16 %v3541, %v3537
    %v3822 = vpack.c.b16 %v3542, %v3538
    %v3823 = vpack.c.b16 %v3543, %v3539
    %v3824 = vpack.c.b16 %v3544, %v3540
    %v3825 = vpack.c.b16 %v3549, %v3545
    %v3826 = vpack.c.b16 %v3550, %v3546
    %v3827 = vpack.c.b16 %v3551, %v3547
    %v3828 = vpack.c.b16 %v3552, %v3548
    %v3829 = vpack.c.b16 %v3557, %v3553
    %v3830 = vpack.c.b16 %v3558, %v3554
    %v3831 = vpack.c.b16 %v3559, %v3555
    %v3832 = vpack.c.b16 %v3560, %v3556
    %v3833 = vpack.c.b16 %v3565, %v3561
    %v3834 = vpack.c.b16 %v3566, %v3562
    %v3835 = vpack.c.b16 %v3567, %v3563
    %v3836 = vpack.c.b16 %v3568, %v3564
    %v3837 = vpack.c.b16 %v3573, %v3569
    %v3838 = vpack.c.b16 %v3574, %v3570
    %v3839 = vpack.c.b16 %v3575, %v3571
    %v3840 = vpack.c.b16 %v3576, %v3572
    %v3841 = vpack.c.b16 %v3581, %v3577
    %v3842 = vpack.c.b16 %v3582, %v3578
    %v3843 = vpack.c.b16 %v3583, %v3579
    %v3844 = vpack.c.b16 %v3584, %v3580
    %v3845 = vpack.c.b16 %v3589, %v3585
    %v3846 = vpack.c.b16 %v3590, %v3586
    %v3847 = vpack.c.b16 %v3591, %v3587
    %v3848 = vpack.c.b16 %v3592, %v3588
    %4105 = vmatprep.subr.bf16.mxu0 %v3594
    %4106 = vmatpush1.bf16.msra.mxu0 %v3593
    %4107 = vmatprep.subr.bf16.mxu0 %v3598
    %4108 = vmatpush1.bf16.msra.mxu0 %v3597
    %4109 = vmatprep.subr.bf16.mxu0 %v3602
    %4110 = vmatpush1.bf16.msra.mxu0 %v3601
    %4111 = vmatprep.subr.bf16.mxu0 %v3606
    %4112 = vmatpush1.bf16.msra.mxu0 %v3605
    %4113 = vmatprep.subr.bf16.mxu0 %v3610
    %4114 = vmatpush1.bf16.msra.mxu0 %v3609
    %4115 = vmatprep.subr.bf16.mxu0 %v3614
    %4116 = vmatpush1.bf16.msra.mxu0 %v3613
    %4117 = vmatprep.subr.bf16.mxu0 %v3618
    %4118 = vmatpush1.bf16.msra.mxu0 %v3617
    %4119 = vmatprep.subr.bf16.mxu0 %v3622
    %4120 = vmatpush1.bf16.msra.mxu0 %v3621
    %4121 = vmatprep.subr.bf16.mxu0 %v3626
    %4122 = vmatpush1.bf16.msra.mxu0 %v3625
    %4123 = vmatprep.subr.bf16.mxu0 %v3630
    %4124 = vmatpush1.bf16.msra.mxu0 %v3629
    %4125 = vmatprep.subr.bf16.mxu0 %v3634
    %4126 = vmatpush1.bf16.msra.mxu0 %v3633
    %4127 = vmatprep.subr.bf16.mxu0 %v3638
    %4128 = vmatpush1.bf16.msra.mxu0 %v3637
    %4129 = vmatprep.subr.bf16.mxu0 %v3642
    %4130 = vmatpush1.bf16.msra.mxu0 %v3641
    %4131 = vmatprep.subr.bf16.mxu0 %v3646
    %4132 = vmatpush1.bf16.msra.mxu0 %v3645
    %4133 = vmatprep.subr.bf16.mxu0 %v3650
    %4134 = vmatpush1.bf16.msra.mxu0 %v3649
    %4135 = vmatprep.subr.bf16.mxu0 %v3654
    %4136 = vmatpush1.bf16.msra.mxu0 %v3653
    %4137 = vmatprep.mubr.bf16.mxu0 %v2810
    %4138 = vmatmul.mubr.bf16.gmra.mrb[0].mxu0 %v2809
    %v4139 = vpop.f32.mrb[0].mxu0
    %v4140 = vadd.f32 %v2751, %v4139
    %v4141 = vpop.f32.mrb[0].mxu0
    %v4142 = vadd.f32 %v2755, %v4141
    %v4143 = vpop.f32.mrb[0].mxu0
    %v4144 = vpop.f32.mrb[0].mxu0
    %4145 = vdwg.mxu0
    %4146 = vmatprep.subr.bf16.mxu0 %v3658
    %4147 = vmatpush1.bf16.msra.mxu0 %v3657
    %4148 = vmatprep.subr.bf16.mxu0 %v3662
    %4149 = vmatpush1.bf16.msra.mxu0 %v3661
    %4150 = vmatprep.subr.bf16.mxu0 %v3666
    %4151 = vmatpush1.bf16.msra.mxu0 %v3665
    %4152 = vmatprep.subr.bf16.mxu0 %v3670
    %4153 = vmatpush1.bf16.msra.mxu0 %v3669
    %4154 = vmatprep.subr.bf16.mxu0 %v3674
    %4155 = vmatpush1.bf16.msra.mxu0 %v3673
    %4156 = vmatprep.subr.bf16.mxu0 %v3678
    %4157 = vmatpush1.bf16.msra.mxu0 %v3677
    %4158 = vmatprep.subr.bf16.mxu0 %v3682
    %4159 = vmatpush1.bf16.msra.mxu0 %v3681
    %4160 = vmatprep.subr.bf16.mxu0 %v3686
    %4161 = vmatpush1.bf16.msra.mxu0 %v3685
    %4162 = vmatprep.subr.bf16.mxu0 %v3690
    %4163 = vmatpush1.bf16.msra.mxu0 %v3689
    %4164 = vmatprep.subr.bf16.mxu0 %v3694
    %4165 = vmatpush1.bf16.msra.mxu0 %v3693
    %4166 = vmatprep.subr.bf16.mxu0 %v3698
    %4167 = vmatpush1.bf16.msra.mxu0 %v3697
    %4168 = vmatprep.subr.bf16.mxu0 %v3702
    %4169 = vmatpush1.bf16.msra.mxu0 %v3701
    %4170 = vmatprep.subr.bf16.mxu0 %v3706
    %4171 = vmatpush1.bf16.msra.mxu0 %v3705
    %4172 = vmatprep.subr.bf16.mxu0 %v3710
    %4173 = vmatpush1.bf16.msra.mxu0 %v3709
    %4174 = vmatprep.subr.bf16.mxu0 %v3714
    %4175 = vmatpush1.bf16.msra.mxu0 %v3713
    %4176 = vmatprep.subr.bf16.mxu0 %v3718
    %4177 = vmatpush1.bf16.msra.mxu0 %v3717
    %4178 = vmatprep.mubr.bf16.mxu0 %v2812
    %4179 = vmatmul.mubr.bf16.gmra.mrb[0].mxu0 %v2811
    %v4180 = vpop.f32.mrb[0].mxu0
    %v4181 = vadd.f32 %v4140, %v4180
    %v4182 = vpop.f32.mrb[0].mxu0
    %v4183 = vadd.f32 %v4142, %v4182
    %v4184 = vpop.f32.mrb[0].mxu0
    %v4185 = vpop.f32.mrb[0].mxu0
    %4186 = vdwg.mxu0
    %4187 = vmatprep.subr.bf16.mxu0 %v3722
    %4188 = vmatpush1.bf16.msra.mxu0 %v3721
    %4189 = vmatprep.subr.bf16.mxu0 %v3726
    %4190 = vmatpush1.bf16.msra.mxu0 %v3725
    %4191 = vmatprep.subr.bf16.mxu0 %v3730
    %4192 = vmatpush1.bf16.msra.mxu0 %v3729
    %4193 = vmatprep.subr.bf16.mxu0 %v3734
    %4194 = vmatpush1.bf16.msra.mxu0 %v3733
    %4195 = vmatprep.subr.bf16.mxu0 %v3738
    %4196 = vmatpush1.bf16.msra.mxu0 %v3737
    %4197 = vmatprep.subr.bf16.mxu0 %v3742
    %4198 = vmatpush1.bf16.msra.mxu0 %v3741
    %4199 = vmatprep.subr.bf16.mxu0 %v3746
    %4200 = vmatpush1.bf16.msra.mxu0 %v3745
    %4201 = vmatprep.subr.bf16.mxu0 %v3750
    %4202 = vmatpush1.bf16.msra.mxu0 %v3749
    %4203 = vmatprep.subr.bf16.mxu0 %v3754
    %4204 = vmatpush1.bf16.msra.mxu0 %v3753
    %4205 = vmatprep.subr.bf16.mxu0 %v3758
    %4206 = vmatpush1.bf16.msra.mxu0 %v3757
    %4207 = vmatprep.subr.bf16.mxu0 %v3762
    %4208 = vmatpush1.bf16.msra.mxu0 %v3761
    %4209 = vmatprep.subr.bf16.mxu0 %v3766
    %4210 = vmatpush1.bf16.msra.mxu0 %v3765
    %4211 = vmatprep.subr.bf16.mxu0 %v3770
    %4212 = vmatpush1.bf16.msra.mxu0 %v3769
    %4213 = vmatprep.subr.bf16.mxu0 %v3774
    %4214 = vmatpush1.bf16.msra.mxu0 %v3773
    %4215 = vmatprep.subr.bf16.mxu0 %v3778
    %4216 = vmatpush1.bf16.msra.mxu0 %v3777
    %4217 = vmatprep.subr.bf16.mxu0 %v3782
    %4218 = vmatpush1.bf16.msra.mxu0 %v3781
    %4219 = vmatprep.mubr.bf16.mxu0 %v2814
    %4220 = vmatmul.mubr.bf16.gmra.mrb[0].mxu0 %v2813
    %v4221 = vpop.f32.mrb[0].mxu0
    %v4222 = vadd.f32 %v4181, %v4221
    %v4223 = vpop.f32.mrb[0].mxu0
    %v4224 = vadd.f32 %v4183, %v4223
    %v4225 = vpop.f32.mrb[0].mxu0
    %v4226 = vpop.f32.mrb[0].mxu0
    %4227 = vdwg.mxu0
    %4228 = vmatprep.subr.bf16.mxu0 %v3786
    %4229 = vmatpush1.bf16.msra.mxu0 %v3785
    %4230 = vmatprep.subr.bf16.mxu0 %v3790
    %4231 = vmatpush1.bf16.msra.mxu0 %v3789
    %4232 = vmatprep.subr.bf16.mxu0 %v3794
    %4233 = vmatpush1.bf16.msra.mxu0 %v3793
    %4234 = vmatprep.subr.bf16.mxu0 %v3798
    %4235 = vmatpush1.bf16.msra.mxu0 %v3797
    %4236 = vmatprep.subr.bf16.mxu0 %v3802
    %4237 = vmatpush1.bf16.msra.mxu0 %v3801
    %4238 = vmatprep.subr.bf16.mxu0 %v3806
    %4239 = vmatpush1.bf16.msra.mxu0 %v3805
    %4240 = vmatprep.subr.bf16.mxu0 %v3810
    %4241 = vmatpush1.bf16.msra.mxu0 %v3809
    %4242 = vmatprep.subr.bf16.mxu0 %v3814
    %4243 = vmatpush1.bf16.msra.mxu0 %v3813
    %4244 = vmatprep.subr.bf16.mxu0 %v3818
    %4245 = vmatpush1.bf16.msra.mxu0 %v3817
    %4246 = vmatprep.subr.bf16.mxu0 %v3822
    %4247 = vmatpush1.bf16.msra.mxu0 %v3821
    %4248 = vmatprep.subr.bf16.mxu0 %v3826
    %4249 = vmatpush1.bf16.msra.mxu0 %v3825
    %4250 = vmatprep.subr.bf16.mxu0 %v3830
    %4251 = vmatpush1.bf16.msra.mxu0 %v3829
    %4252 = vmatprep.subr.bf16.mxu0 %v3834
    %4253 = vmatpush1.bf16.msra.mxu0 %v3833
    %4254 = vmatprep.subr.bf16.mxu0 %v3838
    %4255 = vmatpush1.bf16.msra.mxu0 %v3837
    %4256 = vmatprep.subr.bf16.mxu0 %v3842
    %4257 = vmatpush1.bf16.msra.mxu0 %v3841
    %4258 = vmatprep.subr.bf16.mxu0 %v3846
    %4259 = vmatpush1.bf16.msra.mxu0 %v3845
    %4260 = vmatprep.mubr.bf16.mxu0 %v2816
    %4261 = vmatmul.mubr.bf16.gmra.mrb[0].mxu0 %v2815
    %v4262 = vpop.f32.mrb[0].mxu0
    %v4263 = vadd.f32 %v4222, %v4262
    %v4264 = vpop.f32.mrb[0].mxu0
    %v4265 = vadd.f32 %v4224, %v4264
    %v4266 = vpop.f32.mrb[0].mxu0
    %v4267 = vpop.f32.mrb[0].mxu0
    %4268 = vdwg.mxu0
    %4269 = vmatprep.subr.bf16.mxu0 %v3596
    %4270 = vmatpush1.bf16.msra.mxu0 %v3595
    %4271 = vmatprep.subr.bf16.mxu0 %v3600
    %4272 = vmatpush1.bf16.msra.mxu0 %v3599
    %4273 = vmatprep.subr.bf16.mxu0 %v3604
    %4274 = vmatpush1.bf16.msra.mxu0 %v3603
    %4275 = vmatprep.subr.bf16.mxu0 %v3608
    %4276 = vmatpush1.bf16.msra.mxu0 %v3607
    %4277 = vmatprep.subr.bf16.mxu0 %v3612
    %4278 = vmatpush1.bf16.msra.mxu0 %v3611
    %4279 = vmatprep.subr.bf16.mxu0 %v3616
    %4280 = vmatpush1.bf16.msra.mxu0 %v3615
    %4281 = vmatprep.subr.bf16.mxu0 %v3620
    %4282 = vmatpush1.bf16.msra.mxu0 %v3619
    %4283 = vmatprep.subr.bf16.mxu0 %v3624
    %4284 = vmatpush1.bf16.msra.mxu0 %v3623
    %4285 = vmatprep.subr.bf16.mxu0 %v3628
    %4286 = vmatpush1.bf16.msra.mxu0 %v3627
    %4287 = vmatprep.subr.bf16.mxu0 %v3632
    %4288 = vmatpush1.bf16.msra.mxu0 %v3631
    %4289 = vmatprep.subr.bf16.mxu0 %v3636
    %4290 = vmatpush1.bf16.msra.mxu0 %v3635
    %4291 = vmatprep.subr.bf16.mxu0 %v3640
    %4292 = vmatpush1.bf16.msra.mxu0 %v3639
    %4293 = vmatprep.subr.bf16.mxu0 %v3644
    %4294 = vmatpush1.bf16.msra.mxu0 %v3643
    %4295 = vmatprep.subr.bf16.mxu0 %v3648
    %4296 = vmatpush1.bf16.msra.mxu0 %v3647
    %4297 = vmatprep.subr.bf16.mxu0 %v3652
    %4298 = vmatpush1.bf16.msra.mxu0 %v3651
    %4299 = vmatprep.subr.bf16.mxu0 %v3656
    %4300 = vmatpush1.bf16.msra.mxu0 %v3655
    %4301 = vmatprep.mubr.bf16.mxu0 %v2810
    %4302 = vmatmul.mubr.bf16.gmra.mrb[0].mxu0 %v2809
    %v4303 = vpop.f32.mrb[0].mxu0
    %v4304 = vadd.f32 %v2759, %v4303
    %v4305 = vpop.f32.mrb[0].mxu0
    %v4306 = vadd.f32 %v2763, %v4305
    %v4307 = vpop.f32.mrb[0].mxu0
    %v4308 = vpop.f32.mrb[0].mxu0
    %4309 = vdwg.mxu0
    %4310 = vmatprep.subr.bf16.mxu0 %v3660
    %4311 = vmatpush1.bf16.msra.mxu0 %v3659
    %4312 = vmatprep.subr.bf16.mxu0 %v3664
    %4313 = vmatpush1.bf16.msra.mxu0 %v3663
    %4314 = vmatprep.subr.bf16.mxu0 %v3668
    %4315 = vmatpush1.bf16.msra.mxu0 %v3667
    %4316 = vmatprep.subr.bf16.mxu0 %v3672
    %4317 = vmatpush1.bf16.msra.mxu0 %v3671
    %4318 = vmatprep.subr.bf16.mxu0 %v3676
    %4319 = vmatpush1.bf16.msra.mxu0 %v3675
    %4320 = vmatprep.subr.bf16.mxu0 %v3680
    %4321 = vmatpush1.bf16.msra.mxu0 %v3679
    %4322 = vmatprep.subr.bf16.mxu0 %v3684
    %4323 = vmatpush1.bf16.msra.mxu0 %v3683
    %4324 = vmatprep.subr.bf16.mxu0 %v3688
    %4325 = vmatpush1.bf16.msra.mxu0 %v3687
    %4326 = vmatprep.subr.bf16.mxu0 %v3692
    %4327 = vmatpush1.bf16.msra.mxu0 %v3691
    %4328 = vmatprep.subr.bf16.mxu0 %v3696
    %4329 = vmatpush1.bf16.msra.mxu0 %v3695
    %4330 = vmatprep.subr.bf16.mxu0 %v3700
    %4331 = vmatpush1.bf16.msra.mxu0 %v3699
    %4332 = vmatprep.subr.bf16.mxu0 %v3704
    %4333 = vmatpush1.bf16.msra.mxu0 %v3703
    %4334 = vmatprep.subr.bf16.mxu0 %v3708
    %4335 = vmatpush1.bf16.msra.mxu0 %v3707
    %4336 = vmatprep.subr.bf16.mxu0 %v3712
    %4337 = vmatpush1.bf16.msra.mxu0 %v3711
    %4338 = vmatprep.subr.bf16.mxu0 %v3716
    %4339 = vmatpush1.bf16.msra.mxu0 %v3715
    %4340 = vmatprep.subr.bf16.mxu0 %v3720
    %4341 = vmatpush1.bf16.msra.mxu0 %v3719
    %4342 = vmatprep.mubr.bf16.mxu0 %v2812
    %4343 = vmatmul.mubr.bf16.gmra.mrb[0].mxu0 %v2811
    %v4344 = vpop.f32.mrb[0].mxu0
    %v4345 = vadd.f32 %v4304, %v4344
    %v4346 = vpop.f32.mrb[0].mxu0
    %v4347 = vadd.f32 %v4306, %v4346
    %v4348 = vpop.f32.mrb[0].mxu0
    %v4349 = vpop.f32.mrb[0].mxu0
    %4350 = vdwg.mxu0
    %4351 = vmatprep.subr.bf16.mxu0 %v3724
    %4352 = vmatpush1.bf16.msra.mxu0 %v3723
    %4353 = vmatprep.subr.bf16.mxu0 %v3728
    %4354 = vmatpush1.bf16.msra.mxu0 %v3727
    %4355 = vmatprep.subr.bf16.mxu0 %v3732
    %4356 = vmatpush1.bf16.msra.mxu0 %v3731
    %4357 = vmatprep.subr.bf16.mxu0 %v3736
    %4358 = vmatpush1.bf16.msra.mxu0 %v3735
    %4359 = vmatprep.subr.bf16.mxu0 %v3740
    %4360 = vmatpush1.bf16.msra.mxu0 %v3739
    %4361 = vmatprep.subr.bf16.mxu0 %v3744
    %4362 = vmatpush1.bf16.msra.mxu0 %v3743
    %4363 = vmatprep.subr.bf16.mxu0 %v3748
    %4364 = vmatpush1.bf16.msra.mxu0 %v3747
    %4365 = vmatprep.subr.bf16.mxu0 %v3752
    %4366 = vmatpush1.bf16.msra.mxu0 %v3751
    %4367 = vmatprep.subr.bf16.mxu0 %v3756
    %4368 = vmatpush1.bf16.msra.mxu0 %v3755
    %4369 = vmatprep.subr.bf16.mxu0 %v3760
    %4370 = vmatpush1.bf16.msra.mxu0 %v3759
    %4371 = vmatprep.subr.bf16.mxu0 %v3764
    %4372 = vmatpush1.bf16.msra.mxu0 %v3763
    %4373 = vmatprep.subr.bf16.mxu0 %v3768
    %4374 = vmatpush1.bf16.msra.mxu0 %v3767
    %4375 = vmatprep.subr.bf16.mxu0 %v3772
    %4376 = vmatpush1.bf16.msra.mxu0 %v3771
    %4377 = vmatprep.subr.bf16.mxu0 %v3776
    %4378 = vmatpush1.bf16.msra.mxu0 %v3775
    %4379 = vmatprep.subr.bf16.mxu0 %v3780
    %4380 = vmatpush1.bf16.msra.mxu0 %v3779
    %4381 = vmatprep.subr.bf16.mxu0 %v3784
    %4382 = vmatpush1.bf16.msra.mxu0 %v3783
    %4383 = vmatprep.mubr.bf16.mxu0 %v2814
    %4384 = vmatmul.mubr.bf16.gmra.mrb[0].mxu0 %v2813
    %v4385 = vpop.f32.mrb[0].mxu0
    %v4386 = vadd.f32 %v4345, %v4385
    %v4387 = vpop.f32.mrb[0].mxu0
    %v4388 = vadd.f32 %v4347, %v4387
    %v4389 = vpop.f32.mrb[0].mxu0
    %v4390 = vpop.f32.mrb[0].mxu0
    %4391 = vdwg.mxu0
    %4392 = vmatprep.subr.bf16.mxu0 %v3788
    %4393 = vmatpush1.bf16.msra.mxu0 %v3787
    %4394 = vmatprep.subr.bf16.mxu0 %v3792
    %4395 = vmatpush1.bf16.msra.mxu0 %v3791
    %4396 = vmatprep.subr.bf16.mxu0 %v3796
    %4397 = vmatpush1.bf16.msra.mxu0 %v3795
    %4398 = vmatprep.subr.bf16.mxu0 %v3800
    %4399 = vmatpush1.bf16.msra.mxu0 %v3799
    %4400 = vmatprep.subr.bf16.mxu0 %v3804
    %4401 = vmatpush1.bf16.msra.mxu0 %v3803
    %4402 = vmatprep.subr.bf16.mxu0 %v3808
    %4403 = vmatpush1.bf16.msra.mxu0 %v3807
    %4404 = vmatprep.subr.bf16.mxu0 %v3812
    %4405 = vmatpush1.bf16.msra.mxu0 %v3811
    %4406 = vmatprep.subr.bf16.mxu0 %v3816
    %4407 = vmatpush1.bf16.msra.mxu0 %v3815
    %4408 = vmatprep.subr.bf16.mxu0 %v3820
    %4409 = vmatpush1.bf16.msra.mxu0 %v3819
    %4410 = vmatprep.subr.bf16.mxu0 %v3824
    %4411 = vmatpush1.bf16.msra.mxu0 %v3823
    %4412 = vmatprep.subr.bf16.mxu0 %v3828
    %4413 = vmatpush1.bf16.msra.mxu0 %v3827
    %4414 = vmatprep.subr.bf16.mxu0 %v3832
    %4415 = vmatpush1.bf16.msra.mxu0 %v3831
    %4416 = vmatprep.subr.bf16.mxu0 %v3836
    %4417 = vmatpush1.bf16.msra.mxu0 %v3835
    %4418 = vmatprep.subr.bf16.mxu0 %v3840
    %4419 = vmatpush1.bf16.msra.mxu0 %v3839
    %4420 = vmatprep.subr.bf16.mxu0 %v3844
    %4421 = vmatpush1.bf16.msra.mxu0 %v3843
    %4422 = vmatprep.subr.bf16.mxu0 %v3848
    %4423 = vmatpush1.bf16.msra.mxu0 %v3847
    %4424 = vmatprep.mubr.bf16.mxu0 %v2816
    %4425 = vmatmul.mubr.bf16.gmra.mrb[0].mxu0 %v2815
    %v4426 = vpop.f32.mrb[0].mxu0
    %v4427 = vadd.f32 %v4386, %v4426
    %v4428 = vpop.f32.mrb[0].mxu0
    %v4429 = vadd.f32 %v4388, %v4428
    %v4430 = vpop.f32.mrb[0].mxu0
    %v4431 = vpop.f32.mrb[0].mxu0
    %4432 = vdwg.mxu0
    %v4433 = vld [vmem:[%s16] sm:$0xf]
    %v4434 = vld [vmem:[%s17] sm:$0xf]
    %vm4435 = vcmask 1041408
    %v4436 = vsel %vm4435, %v4263, 0.0
    %v4437 = vrot.slane %v4436, 4
    %v4438 = vadd.f32 %v4436, %v4437
    %v4439 = vrot.slane %v4438, 2
    %v4440 = vadd.f32 %v4438, %v4439
    %v4441 = vrot.slane %v4440, 1
    %v4442 = vadd.f32 %v4440, %v4441
    %v4443 = vsel %vm4435, %v4265, 0.0
    %v4444 = vrot.slane %v4443, 4
    %v4445 = vadd.f32 %v4443, %v4444
    %v4446 = vrot.slane %v4445, 2
    %v4447 = vadd.f32 %v4445, %v4446
    %v4448 = vrot.slane %v4447, 1
    %v4449 = vadd.f32 %v4447, %v4448
    %v4450 = vsel %vm4435, %v4427, 0.0
    %v4451 = vrot.slane %v4450, 4
    %v4452 = vadd.f32 %v4450, %v4451
    %v4453 = vrot.slane %v4452, 2
    %v4454 = vadd.f32 %v4452, %v4453
    %v4455 = vrot.slane %v4454, 1
    %v4456 = vadd.f32 %v4454, %v4455
    %v4457 = vsel %vm4435, %v4429, 0.0
    %v4458 = vrot.slane %v4457, 4
    %v4459 = vadd.f32 %v4457, %v4458
    %v4460 = vrot.slane %v4459, 2
    %v4461 = vadd.f32 %v4459, %v4460
    %v4462 = vrot.slane %v4461, 1
    %v4463 = vadd.f32 %v4461, %v4462
    %v4464 = vrcp.pop 2.0
    %v4465 = vmul.f32 %v4442, %v4464
    %v4466 = vmul.f32 %v4449, %v4464
    %v4467 = vmul.f32 %v4456, %v4464
    %v4468 = vmul.f32 %v4463, %v4464
    %v4469 = vsub.f32 %v4263, %v4465
    %v4470 = vsub.f32 %v4265, %v4466
    %v4471 = vsub.f32 %v4427, %v4467
    %v4472 = vsub.f32 %v4429, %v4468
    %v4473 = vmul.f32 %v4469, %v4469
    %v4474 = vmul.f32 %v4470, %v4470
    %v4475 = vmul.f32 %v4471, %v4471
    %v4476 = vmul.f32 %v4472, %v4472
    %v4477 = vsel %vm4435, %v4473, 0.0
    %v4478 = vrot.slane %v4477, 4
    %v4479 = vadd.f32 %v4477, %v4478
    %v4480 = vrot.slane %v4479, 2
    %v4481 = vadd.f32 %v4479, %v4480
    %v4482 = vrot.slane %v4481, 1
    %v4483 = vadd.f32 %v4481, %v4482
    %v4484 = vsel %vm4435, %v4474, 0.0
    %v4485 = vrot.slane %v4484, 4
    %v4486 = vadd.f32 %v4484, %v4485
    %v4487 = vrot.slane %v4486, 2
    %v4488 = vadd.f32 %v4486, %v4487
    %v4489 = vrot.slane %v4488, 1
    %v4490 = vadd.f32 %v4488, %v4489
    %v4491 = vsel %vm4435, %v4475, 0.0
    %v4492 = vrot.slane %v4491, 4
    %v4493 = vadd.f32 %v4491, %v4492
    %v4494 = vrot.slane %v4493, 2
    %v4495 = vadd.f32 %v4493, %v4494
    %v4496 = vrot.slane %v4495, 1
    %v4497 = vadd.f32 %v4495, %v4496
    %v4498 = vsel %vm4435, %v4476, 0.0
    %v4499 = vrot.slane %v4498, 4
    %v4500 = vadd.f32 %v4498, %v4499
    %v4501 = vrot.slane %v4500, 2
    %v4502 = vadd.f32 %v4500, %v4501
    %v4503 = vrot.slane %v4502, 1
    %v4504 = vadd.f32 %v4502, %v4503
    %v4505 = vmul.f32 %v4483, %v4464
    %v4506 = vmul.f32 %v4490, %v4464
    %v4507 = vmul.f32 %v4497, %v4464
    %v4508 = vmul.f32 %v4504, %v4464
    %v4509 = vadd.f32 %v4505, 1e-05
    %v4510 = vadd.f32 %v4506, 1e-05
    %v4511 = vadd.f32 %v4507, 1e-05
    %v4512 = vadd.f32 %v4508, 1e-05
    %v4513 = vrsqrt.pop %v4509
    %v4514 = vrsqrt.pop %v4510
    %v4515 = vrsqrt.pop %v4511
    %v4516 = vrsqrt.pop %v4512
    %v4521 = vcombine.low %v4513, %v4514
    %v4522 = vcombine.low %v4515, %v4516
    %v4524 = vunpack.c.l.s4 1966171168
    %v4525 = vunpack.c.0.s8 %v4524
    %v4526 = vlaneseq
    %v4527 = vshrl.u32 %v4526, 7
    %v4528 = vsub.s32 %v4525, %v4527
    %v4529 = vrot.slane %v4521, %v4528
    %v4531 = vunpack.c.l.s4 1966171168
    %v4532 = vunpack.c.0.s8 %v4531
    %v4533 = vlaneseq
    %v4534 = vshrl.u32 %v4533, 7
    %v4535 = vsub.s32 %v4532, %v4534
    %v4536 = vrot.slane %v4522, %v4535
    %v4537 = vcombine.low %v4529, %v4536
    %v4539 = vunpack.c.l.s4 1966171168
    %v4540 = vunpack.c.0.s8 %v4539
    %v4541 = vlaneseq
    %v4542 = vshrl.u32 %v4541, 7
    %v4543 = vsub.s32 %v4540, %v4542
    %v4544 = vrot.slane %v4537, %v4543
    %v4546 = vmul.f32 %v4433, %v4544
    %v4548 = vlaneseq
    %v4549 = vshrl.u32 %v4548, 7
    %v4550 = vsub.s32 0, %v4549
    %v4551 = vrot.slane %v4546, %v4550
    %v4552 = vlaneseq
    %v4553 = vshrl.u32 %v4552, 7
    %v4554 = vsub.s32 1, %v4553
    %v4555 = vrot.slane %v4546, %v4554
    %v4556 = vlaneseq
    %v4557 = vshrl.u32 %v4556, 7
    %v4558 = vsub.s32 2, %v4557
    %v4559 = vrot.slane %v4546, %v4558
    %v4560 = vlaneseq
    %v4561 = vshrl.u32 %v4560, 7
    %v4562 = vsub.s32 3, %v4561
    %v4563 = vrot.slane %v4546, %v4562
    %v4568 = vmul.f32 %v4469, %v4551
    %v4569 = vmul.f32 %v4470, %v4555
    %v4570 = vmul.f32 %v4471, %v4559
    %v4571 = vmul.f32 %v4472, %v4563
    %v4573 = vlaneseq
    %v4574 = vshrl.u32 %v4573, 7
    %v4575 = vsub.s32 0, %v4574
    %v4576 = vrot.slane %v4434, %v4575
    %v4577 = vlaneseq
    %v4578 = vshrl.u32 %v4577, 7
    %v4579 = vsub.s32 1, %v4578
    %v4580 = vrot.slane %v4434, %v4579
    %v4581 = vlaneseq
    %v4582 = vshrl.u32 %v4581, 7
    %v4583 = vsub.s32 2, %v4582
    %v4584 = vrot.slane %v4434, %v4583
    %v4585 = vlaneseq
    %v4586 = vshrl.u32 %v4585, 7
    %v4587 = vsub.s32 3, %v4586
    %v4588 = vrot.slane %v4434, %v4587
    %v4593 = vadd.f32 %v4568, %v4576
    %v4594 = vadd.f32 %v4569, %v4580
    %v4595 = vadd.f32 %v4570, %v4584
    %v4596 = vadd.f32 %v4571, %v4588
    %v4597 = vmax.f32 %v4593, 0.0
    %v4598 = vmax.f32 %v4594, 0.0
    %v4599 = vmax.f32 %v4595, 0.0
    %v4600 = vmax.f32 %v4596, 0.0
    %v4601 = vpack.c.bf16 %v4597, %v4597
    %v4602 = vpack.c.bf16 %v4598, %v4598
    %v4603 = vpack.c.bf16 %v4599, %v4599
    %v4604 = vpack.c.bf16 %v4600, %v4600
    %v4605 = vld [vmem:[#allocation7] sm:$0xff]
    %v4606 = vld [vmem:[#allocation7 + $0x8] sm:$0xff]
    %v4607 = vld [vmem:[#allocation7 + $0x10] sm:$0xff]
    %v4608 = vld [vmem:[#allocation7 + $0x18] sm:$0xff]
    %v4609 = vld [vmem:[#allocation7 + $0x20] sm:$0xff]
    %v4610 = vld [vmem:[#allocation7 + $0x28] sm:$0xff]
    %v4611 = vld [vmem:[#allocation7 + $0x30] sm:$0xff]
    %v4612 = vld [vmem:[#allocation7 + $0x38] sm:$0xff]
    %v4613 = vld [vmem:[#allocation7 + $0x40] sm:$0xff]
    %v4614 = vld [vmem:[#allocation7 + $0x48] sm:$0xff]
    %v4615 = vld [vmem:[#allocation7 + $0x50] sm:$0xff]
    %v4616 = vld [vmem:[#allocation7 + $0x58] sm:$0xff]
    %v4617 = vld [vmem:[#allocation7 + $0x60] sm:$0xff]
    %v4618 = vld [vmem:[#allocation7 + $0x68] sm:$0xff]
    %v4619 = vld [vmem:[#allocation7 + $0x70] sm:$0xff]
    %v4620 = vld [vmem:[#allocation7 + $0x78] sm:$0xff]
    %v4621 = vld [vmem:[#allocation7 + $0x80] sm:$0xff]
    %v4622 = vld [vmem:[#allocation7 + $0x88] sm:$0xff]
    %v4623 = vld [vmem:[#allocation7 + $0x90] sm:$0xff]
    %v4624 = vld [vmem:[#allocation7 + $0x98] sm:$0xff]
    %v4625 = vld [vmem:[#allocation7 + $0xa0] sm:$0xff]
    %v4626 = vld [vmem:[#allocation7 + $0xa8] sm:$0xff]
    %v4627 = vld [vmem:[#allocation7 + $0xb0] sm:$0xff]
    %v4628 = vld [vmem:[#allocation7 + $0xb8] sm:$0xff]
    %v4629 = vld [vmem:[#allocation7 + $0xc0] sm:$0xff]
    %v4630 = vld [vmem:[#allocation7 + $0xc8] sm:$0xff]
    %v4631 = vld [vmem:[#allocation7 + $0xd0] sm:$0xff]
    %v4632 = vld [vmem:[#allocation7 + $0xd8] sm:$0xff]
    %v4633 = vld [vmem:[#allocation7 + $0xe0] sm:$0xff]
    %v4634 = vld [vmem:[#allocation7 + $0xe8] sm:$0xff]
    %v4635 = vld [vmem:[#allocation7 + $0xf0] sm:$0xff]
    %v4636 = vld [vmem:[#allocation7 + $0xf8] sm:$0xff]
    %v4637 = vld [vmem:[#allocation7 + $0x100] sm:$0xff]
    %v4638 = vld [vmem:[#allocation7 + $0x108] sm:$0xff]
    %v4639 = vld [vmem:[#allocation7 + $0x110] sm:$0xff]
    %v4640 = vld [vmem:[#allocation7 + $0x118] sm:$0xff]
    %v4641 = vld [vmem:[#allocation7 + $0x120] sm:$0xff]
    %v4642 = vld [vmem:[#allocation7 + $0x128] sm:$0xff]
    %v4643 = vld [vmem:[#allocation7 + $0x130] sm:$0xff]
    %v4644 = vld [vmem:[#allocation7 + $0x138] sm:$0xff]
    %v4645 = vld [vmem:[#allocation7 + $0x140] sm:$0xff]
    %v4646 = vld [vmem:[#allocation7 + $0x148] sm:$0xff]
    %v4647 = vld [vmem:[#allocation7 + $0x150] sm:$0xff]
    %v4648 = vld [vmem:[#allocation7 + $0x158] sm:$0xff]
    %v4649 = vld [vmem:[#allocation7 + $0x160] sm:$0xff]
    %v4650 = vld [vmem:[#allocation7 + $0x168] sm:$0xff]
    %v4651 = vld [vmem:[#allocation7 + $0x170] sm:$0xff]
    %v4652 = vld [vmem:[#allocation7 + $0x178] sm:$0xff]
    %v4653 = vld [vmem:[#allocation7 + $0x180] sm:$0xff]
    %v4654 = vld [vmem:[#allocation7 + $0x188] sm:$0xff]
    %v4655 = vld [vmem:[#allocation7 + $0x190] sm:$0xff]
    %v4656 = vld [vmem:[#allocation7 + $0x198] sm:$0xff]
    %v4657 = vld [vmem:[#allocation7 + $0x1a0] sm:$0xff]
    %v4658 = vld [vmem:[#allocation7 + $0x1a8] sm:$0xff]
    %v4659 = vld [vmem:[#allocation7 + $0x1b0] sm:$0xff]
    %v4660 = vld [vmem:[#allocation7 + $0x1b8] sm:$0xff]
    %v4661 = vld [vmem:[#allocation7 + $0x1c0] sm:$0xff]
    %v4662 = vld [vmem:[#allocation7 + $0x1c8] sm:$0xff]
    %v4663 = vld [vmem:[#allocation7 + $0x1d0] sm:$0xff]
    %v4664 = vld [vmem:[#allocation7 + $0x1d8] sm:$0xff]
    %v4665 = vld [vmem:[#allocation7 + $0x1e0] sm:$0xff]
    %v4666 = vld [vmem:[#allocation7 + $0x1e8] sm:$0xff]
    %v4667 = vld [vmem:[#allocation7 + $0x1f0] sm:$0xff]
    %v4668 = vld [vmem:[#allocation7 + $0x1f8] sm:$0xff]
    %v4669 = vld [vmem:[%s19] sm:$0x3]
    %v4671 = vlaneseq
    %v4672 = vshrl.u32 %v4671, 7
    %v4673 = vsub.s32 0, %v4672
    %v4674 = vrot.slane %v4669, %v4673
    %v4675 = vlaneseq
    %v4676 = vshrl.u32 %v4675, 7
    %v4677 = vsub.s32 1, %v4676
    %v4678 = vrot.slane %v4669, %v4677
    %v4745 = vunpack.c.l.b16 %v4605
    %v4746 = vunpack.c.h.b16 %v4605
    %v4747 = vunpack.c.l.b16 %v4606
    %v4748 = vunpack.c.h.b16 %v4606
    %v4749 = vunpack.c.l.b16 %v4607
    %v4750 = vunpack.c.h.b16 %v4607
    %v4751 = vunpack.c.l.b16 %v4608
    %v4752 = vunpack.c.h.b16 %v4608
    %v4753 = vunpack.c.l.b16 %v4609
    %v4754 = vunpack.c.h.b16 %v4609
    %v4755 = vunpack.c.l.b16 %v4610
    %v4756 = vunpack.c.h.b16 %v4610
    %v4757 = vunpack.c.l.b16 %v4611
    %v4758 = vunpack.c.h.b16 %v4611
    %v4759 = vunpack.c.l.b16 %v4612
    %v4760 = vunpack.c.h.b16 %v4612
    %v4761 = vunpack.c.l.b16 %v4613
    %v4762 = vunpack.c.h.b16 %v4613
    %v4763 = vunpack.c.l.b16 %v4614
    %v4764 = vunpack.c.h.b16 %v4614
    %v4765 = vunpack.c.l.b16 %v4615
    %v4766 = vunpack.c.h.b16 %v4615
    %v4767 = vunpack.c.l.b16 %v4616
    %v4768 = vunpack.c.h.b16 %v4616
    %v4769 = vunpack.c.l.b16 %v4617
    %v4770 = vunpack.c.h.b16 %v4617
    %v4771 = vunpack.c.l.b16 %v4618
    %v4772 = vunpack.c.h.b16 %v4618
    %v4773 = vunpack.c.l.b16 %v4619
    %v4774 = vunpack.c.h.b16 %v4619
    %v4775 = vunpack.c.l.b16 %v4620
    %v4776 = vunpack.c.h.b16 %v4620
    %v4777 = vunpack.c.l.b16 %v4621
    %v4778 = vunpack.c.h.b16 %v4621
    %v4779 = vunpack.c.l.b16 %v4622
    %v4780 = vunpack.c.h.b16 %v4622
    %v4781 = vunpack.c.l.b16 %v4623
    %v4782 = vunpack.c.h.b16 %v4623
    %v4783 = vunpack.c.l.b16 %v4624
    %v4784 = vunpack.c.h.b16 %v4624
    %v4785 = vunpack.c.l.b16 %v4625
    %v4786 = vunpack.c.h.b16 %v4625
    %v4787 = vunpack.c.l.b16 %v4626
    %v4788 = vunpack.c.h.b16 %v4626
    %v4789 = vunpack.c.l.b16 %v4627
    %v4790 = vunpack.c.h.b16 %v4627
    %v4791 = vunpack.c.l.b16 %v4628
    %v4792 = vunpack.c.h.b16 %v4628
    %v4793 = vunpack.c.l.b16 %v4629
    %v4794 = vunpack.c.h.b16 %v4629
    %v4795 = vunpack.c.l.b16 %v4630
    %v4796 = vunpack.c.h.b16 %v4630
    %v4797 = vunpack.c.l.b16 %v4631
    %v4798 = vunpack.c.h.b16 %v4631
    %v4799 = vunpack.c.l.b16 %v4632
    %v4800 = vunpack.c.h.b16 %v4632
    %v4801 = vunpack.c.l.b16 %v4633
    %v4802 = vunpack.c.h.b16 %v4633
    %v4803 = vunpack.c.l.b16 %v4634
    %v4804 = vunpack.c.h.b16 %v4634
    %v4805 = vunpack.c.l.b16 %v4635
    %v4806 = vunpack.c.h.b16 %v4635
    %v4807 = vunpack.c.l.b16 %v4636
    %v4808 = vunpack.c.h.b16 %v4636
    %v4809 = vunpack.c.l.b16 %v4637
    %v4810 = vunpack.c.h.b16 %v4637
    %v4811 = vunpack.c.l.b16 %v4638
    %v4812 = vunpack.c.h.b16 %v4638
    %v4813 = vunpack.c.l.b16 %v4639
    %v4814 = vunpack.c.h.b16 %v4639
    %v4815 = vunpack.c.l.b16 %v4640
    %v4816 = vunpack.c.h.b16 %v4640
    %v4817 = vunpack.c.l.b16 %v4641
    %v4818 = vunpack.c.h.b16 %v4641
    %v4819 = vunpack.c.l.b16 %v4642
    %v4820 = vunpack.c.h.b16 %v4642
    %v4821 = vunpack.c.l.b16 %v4643
    %v4822 = vunpack.c.h.b16 %v4643
    %v4823 = vunpack.c.l.b16 %v4644
    %v4824 = vunpack.c.h.b16 %v4644
    %v4825 = vunpack.c.l.b16 %v4645
    %v4826 = vunpack.c.h.b16 %v4645
    %v4827 = vunpack.c.l.b16 %v4646
    %v4828 = vunpack.c.h.b16 %v4646
    %v4829 = vunpack.c.l.b16 %v4647
    %v4830 = vunpack.c.h.b16 %v4647
    %v4831 = vunpack.c.l.b16 %v4648
    %v4832 = vunpack.c.h.b16 %v4648
    %v4833 = vunpack.c.l.b16 %v4649
    %v4834 = vunpack.c.h.b16 %v4649
    %v4835 = vunpack.c.l.b16 %v4650
    %v4836 = vunpack.c.h.b16 %v4650
    %v4837 = vunpack.c.l.b16 %v4651
    %v4838 = vunpack.c.h.b16 %v4651
    %v4839 = vunpack.c.l.b16 %v4652
    %v4840 = vunpack.c.h.b16 %v4652
    %v4841 = vunpack.c.l.b16 %v4653
    %v4842 = vunpack.c.h.b16 %v4653
    %v4843 = vunpack.c.l.b16 %v4654
    %v4844 = vunpack.c.h.b16 %v4654
    %v4845 = vunpack.c.l.b16 %v4655
    %v4846 = vunpack.c.h.b16 %v4655
    %v4847 = vunpack.c.l.b16 %v4656
    %v4848 = vunpack.c.h.b16 %v4656
    %v4849 = vunpack.c.l.b16 %v4657
    %v4850 = vunpack.c.h.b16 %v4657
    %v4851 = vunpack.c.l.b16 %v4658
    %v4852 = vunpack.c.h.b16 %v4658
    %v4853 = vunpack.c.l.b16 %v4659
    %v4854 = vunpack.c.h.b16 %v4659
    %v4855 = vunpack.c.l.b16 %v4660
    %v4856 = vunpack.c.h.b16 %v4660
    %v4857 = vunpack.c.l.b16 %v4661
    %v4858 = vunpack.c.h.b16 %v4661
    %v4859 = vunpack.c.l.b16 %v4662
    %v4860 = vunpack.c.h.b16 %v4662
    %v4861 = vunpack.c.l.b16 %v4663
    %v4862 = vunpack.c.h.b16 %v4663
    %v4863 = vunpack.c.l.b16 %v4664
    %v4864 = vunpack.c.h.b16 %v4664
    %v4865 = vunpack.c.l.b16 %v4665
    %v4866 = vunpack.c.h.b16 %v4665
    %v4867 = vunpack.c.l.b16 %v4666
    %v4868 = vunpack.c.h.b16 %v4666
    %v4869 = vunpack.c.l.b16 %v4667
    %v4870 = vunpack.c.h.b16 %v4667
    %v4871 = vunpack.c.l.b16 %v4668
    %v4872 = vunpack.c.h.b16 %v4668
    %v4873 = vpack.c.b16 %v4747, %v4745
    %v4874 = vpack.c.b16 %v4748, %v4746
    %v4875 = vpack.c.b16 %v4751, %v4749
    %v4876 = vpack.c.b16 %v4752, %v4750
    %v4877 = vpack.c.b16 %v4755, %v4753
    %v4878 = vpack.c.b16 %v4756, %v4754
    %v4879 = vpack.c.b16 %v4759, %v4757
    %v4880 = vpack.c.b16 %v4760, %v4758
    %v4881 = vpack.c.b16 %v4763, %v4761
    %v4882 = vpack.c.b16 %v4764, %v4762
    %v4883 = vpack.c.b16 %v4767, %v4765
    %v4884 = vpack.c.b16 %v4768, %v4766
    %v4885 = vpack.c.b16 %v4771, %v4769
    %v4886 = vpack.c.b16 %v4772, %v4770
    %v4887 = vpack.c.b16 %v4775, %v4773
    %v4888 = vpack.c.b16 %v4776, %v4774
    %v4889 = vpack.c.b16 %v4779, %v4777
    %v4890 = vpack.c.b16 %v4780, %v4778
    %v4891 = vpack.c.b16 %v4783, %v4781
    %v4892 = vpack.c.b16 %v4784, %v4782
    %v4893 = vpack.c.b16 %v4787, %v4785
    %v4894 = vpack.c.b16 %v4788, %v4786
    %v4895 = vpack.c.b16 %v4791, %v4789
    %v4896 = vpack.c.b16 %v4792, %v4790
    %v4897 = vpack.c.b16 %v4795, %v4793
    %v4898 = vpack.c.b16 %v4796, %v4794
    %v4899 = vpack.c.b16 %v4799, %v4797
    %v4900 = vpack.c.b16 %v4800, %v4798
    %v4901 = vpack.c.b16 %v4803, %v4801
    %v4902 = vpack.c.b16 %v4804, %v4802
    %v4903 = vpack.c.b16 %v4807, %v4805
    %v4904 = vpack.c.b16 %v4808, %v4806
    %v4905 = vpack.c.b16 %v4811, %v4809
    %v4906 = vpack.c.b16 %v4812, %v4810
    %v4907 = vpack.c.b16 %v4815, %v4813
    %v4908 = vpack.c.b16 %v4816, %v4814
    %v4909 = vpack.c.b16 %v4819, %v4817
    %v4910 = vpack.c.b16 %v4820, %v4818
    %v4911 = vpack.c.b16 %v4823, %v4821
    %v4912 = vpack.c.b16 %v4824, %v4822
    %v4913 = vpack.c.b16 %v4827, %v4825
    %v4914 = vpack.c.b16 %v4828, %v4826
    %v4915 = vpack.c.b16 %v4831, %v4829
    %v4916 = vpack.c.b16 %v4832, %v4830
    %v4917 = vpack.c.b16 %v4835, %v4833
    %v4918 = vpack.c.b16 %v4836, %v4834
    %v4919 = vpack.c.b16 %v4839, %v4837
    %v4920 = vpack.c.b16 %v4840, %v4838
    %v4921 = vpack.c.b16 %v4843, %v4841
    %v4922 = vpack.c.b16 %v4844, %v4842
    %v4923 = vpack.c.b16 %v4847, %v4845
    %v4924 = vpack.c.b16 %v4848, %v4846
    %v4925 = vpack.c.b16 %v4851, %v4849
    %v4926 = vpack.c.b16 %v4852, %v4850
    %v4927 = vpack.c.b16 %v4855, %v4853
    %v4928 = vpack.c.b16 %v4856, %v4854
    %v4929 = vpack.c.b16 %v4859, %v4857
    %v4930 = vpack.c.b16 %v4860, %v4858
    %v4931 = vpack.c.b16 %v4863, %v4861
    %v4932 = vpack.c.b16 %v4864, %v4862
    %v4933 = vpack.c.b16 %v4867, %v4865
    %v4934 = vpack.c.b16 %v4868, %v4866
    %v4935 = vpack.c.b16 %v4871, %v4869
    %v4936 = vpack.c.b16 %v4872, %v4870
    %5001 = vmatprep.subr.bf16.mxu0 %v4874
    %5002 = vmatpush1.bf16.msra.mxu0 %v4873
    %5003 = vmatprep.subr.bf16.mxu0 %v4876
    %5004 = vmatpush1.bf16.msra.mxu0 %v4875
    %5005 = vmatprep.subr.bf16.mxu0 %v4878
    %5006 = vmatpush1.bf16.msra.mxu0 %v4877
    %5007 = vmatprep.subr.bf16.mxu0 %v4880
    %5008 = vmatpush1.bf16.msra.mxu0 %v4879
    %5009 = vmatprep.subr.bf16.mxu0 %v4882
    %5010 = vmatpush1.bf16.msra.mxu0 %v4881
    %5011 = vmatprep.subr.bf16.mxu0 %v4884
    %5012 = vmatpush1.bf16.msra.mxu0 %v4883
    %5013 = vmatprep.subr.bf16.mxu0 %v4886
    %5014 = vmatpush1.bf16.msra.mxu0 %v4885
    %5015 = vmatprep.subr.bf16.mxu0 %v4888
    %5016 = vmatpush1.bf16.msra.mxu0 %v4887
    %5017 = vmatprep.subr.bf16.mxu0 %v4890
    %5018 = vmatpush1.bf16.msra.mxu0 %v4889
    %5019 = vmatprep.subr.bf16.mxu0 %v4892
    %5020 = vmatpush1.bf16.msra.mxu0 %v4891
    %5021 = vmatprep.subr.bf16.mxu0 %v4894
    %5022 = vmatpush1.bf16.msra.mxu0 %v4893
    %5023 = vmatprep.subr.bf16.mxu0 %v4896
    %5024 = vmatpush1.bf16.msra.mxu0 %v4895
    %5025 = vmatprep.subr.bf16.mxu0 %v4898
    %5026 = vmatpush1.bf16.msra.mxu0 %v4897
    %5027 = vmatprep.subr.bf16.mxu0 %v4900
    %5028 = vmatpush1.bf16.msra.mxu0 %v4899
    %5029 = vmatprep.subr.bf16.mxu0 %v4902
    %5030 = vmatpush1.bf16.msra.mxu0 %v4901
    %5031 = vmatprep.subr.bf16.mxu0 %v4904
    %5032 = vmatpush1.bf16.msra.mxu0 %v4903
    %5033 = vmatprep.mubr.bf16.mxu0 %v4602
    %5034 = vmatmul.mubr.bf16.gmra.mrb[0].mxu0 %v4601
    %v5035 = vpop.f32.mrb[0].mxu0
    %v5036 = vadd.f32 %v4674, %v5035
    %v5037 = vpop.f32.mrb[0].mxu0
    %v5038 = vadd.f32 %v4678, %v5037
    %v5039 = vpop.f32.mrb[0].mxu0
    %v5040 = vpop.f32.mrb[0].mxu0
    %5041 = vdwg.mxu0
    %5042 = vmatprep.subr.bf16.mxu0 %v4906
    %5043 = vmatpush1.bf16.msra.mxu0 %v4905
    %5044 = vmatprep.subr.bf16.mxu0 %v4908
    %5045 = vmatpush1.bf16.msra.mxu0 %v4907
    %5046 = vmatprep.subr.bf16.mxu0 %v4910
    %5047 = vmatpush1.bf16.msra.mxu0 %v4909
    %5048 = vmatprep.subr.bf16.mxu0 %v4912
    %5049 = vmatpush1.bf16.msra.mxu0 %v4911
    %5050 = vmatprep.subr.bf16.mxu0 %v4914
    %5051 = vmatpush1.bf16.msra.mxu0 %v4913
    %5052 = vmatprep.subr.bf16.mxu0 %v4916
    %5053 = vmatpush1.bf16.msra.mxu0 %v4915
    %5054 = vmatprep.subr.bf16.mxu0 %v4918
    %5055 = vmatpush1.bf16.msra.mxu0 %v4917
    %5056 = vmatprep.subr.bf16.mxu0 %v4920
    %5057 = vmatpush1.bf16.msra.mxu0 %v4919
    %5058 = vmatprep.subr.bf16.mxu0 %v4922
    %5059 = vmatpush1.bf16.msra.mxu0 %v4921
    %5060 = vmatprep.subr.bf16.mxu0 %v4924
    %5061 = vmatpush1.bf16.msra.mxu0 %v4923
    %5062 = vmatprep.subr.bf16.mxu0 %v4926
    %5063 = vmatpush1.bf16.msra.mxu0 %v4925
    %5064 = vmatprep.subr.bf16.mxu0 %v4928
    %5065 = vmatpush1.bf16.msra.mxu0 %v4927
    %5066 = vmatprep.subr.bf16.mxu0 %v4930
    %5067 = vmatpush1.bf16.msra.mxu0 %v4929
    %5068 = vmatprep.subr.bf16.mxu0 %v4932
    %5069 = vmatpush1.bf16.msra.mxu0 %v4931
    %5070 = vmatprep.subr.bf16.mxu0 %v4934
    %5071 = vmatpush1.bf16.msra.mxu0 %v4933
    %5072 = vmatprep.subr.bf16.mxu0 %v4936
    %5073 = vmatpush1.bf16.msra.mxu0 %v4935
    %5074 = vmatprep.mubr.bf16.mxu0 %v4604
    %5075 = vmatmul.mubr.bf16.gmra.mrb[0].mxu0 %v4603
    %v5076 = vpop.f32.mrb[0].mxu0
    %v5077 = vadd.f32 %v5036, %v5076
    %v5078 = vpop.f32.mrb[0].mxu0
    %v5079 = vadd.f32 %v5038, %v5078
    %v5080 = vpop.f32.mrb[0].mxu0
    %v5081 = vpop.f32.mrb[0].mxu0
    %5082 = vdwg.mxu0
    %v5083 = vld [vmem:[%s20] sm:$0x3]
    %v5084 = vld [vmem:[%s21] sm:$0x3]
    %v5085 = vsel %vm4435, %v5077, 0.0
    %v5086 = vrot.slane %v5085, 4
    %v5087 = vadd.f32 %v5085, %v5086
    %v5088 = vrot.slane %v5087, 2
    %v5089 = vadd.f32 %v5087, %v5088
    %v5090 = vrot.slane %v5089, 1
    %v5091 = vadd.f32 %v5089, %v5090
    %v5092 = vsel %vm4435, %v5079, 0.0
    %v5093 = vrot.slane %v5092, 4
    %v5094 = vadd.f32 %v5092, %v5093
    %v5095 = vrot.slane %v5094, 2
    %v5096 = vadd.f32 %v5094, %v5095
    %v5097 = vrot.slane %v5096, 1
    %v5098 = vadd.f32 %v5096, %v5097
    %v5099 = vmul.f32 %v5091, %v4464
    %v5100 = vmul.f32 %v5098, %v4464
    %v5101 = vsub.f32 %v5077, %v5099
    %v5102 = vsub.f32 %v5079, %v5100
    %v5103 = vmul.f32 %v5101, %v5101
    %v5104 = vmul.f32 %v5102, %v5102
    %v5105 = vsel %vm4435, %v5103, 0.0
    %v5106 = vrot.slane %v5105, 4
    %v5107 = vadd.f32 %v5105, %v5106
    %v5108 = vrot.slane %v5107, 2
    %v5109 = vadd.f32 %v5107, %v5108
    %v5110 = vrot.slane %v5109, 1
    %v5111 = vadd.f32 %v5109, %v5110
    %v5112 = vsel %vm4435, %v5104, 0.0
    %v5113 = vrot.slane %v5112, 4
    %v5114 = vadd.f32 %v5112, %v5113
    %v5115 = vrot.slane %v5114, 2
    %v5116 = vadd.f32 %v5114, %v5115
    %v5117 = vrot.slane %v5116, 1
    %v5118 = vadd.f32 %v5116, %v5117
    %v5119 = vmul.f32 %v5111, %v4464
    %v5120 = vmul.f32 %v5118, %v4464
    %v5121 = vadd.f32 %v5119, 1e-05
    %v5122 = vadd.f32 %v5120, 1e-05
    %v5123 = vrsqrt.pop %v5121
    %v5124 = vrsqrt.pop %v5122
    %v5127 = vcombine.low %v5123, %v5124
    %v5129 = vunpack.c.l.s4 1966171168
    %v5130 = vunpack.c.0.s8 %v5129
    %v5131 = vlaneseq
    %v5132 = vshrl.u32 %v5131, 7
    %v5133 = vsub.s32 %v5130, %v5132
    %v5134 = vrot.slane %v5127, %v5133
    %v5136 = vunpack.c.l.s4 1966171168
    %v5137 = vunpack.c.0.s8 %v5136
    %v5138 = vlaneseq
    %v5139 = vshrl.u32 %v5138, 7
    %v5140 = vsub.s32 %v5137, %v5139
    %v5141 = vrot.slane %v5134, %v5140
    %v5143 = vmul.f32 %v5083, %v5141
    %v5145 = vlaneseq
    %v5146 = vshrl.u32 %v5145, 7
    %v5147 = vsub.s32 0, %v5146
    %v5148 = vrot.slane %v5143, %v5147
    %v5149 = vlaneseq
    %v5150 = vshrl.u32 %v5149, 7
    %v5151 = vsub.s32 1, %v5150
    %v5152 = vrot.slane %v5143, %v5151
    %v5155 = vmul.f32 %v5101, %v5148
    %v5156 = vmul.f32 %v5102, %v5152
    %v5158 = vlaneseq
    %v5159 = vshrl.u32 %v5158, 7
    %v5160 = vsub.s32 0, %v5159
    %v5161 = vrot.slane %v5084, %v5160
    %v5162 = vlaneseq
    %v5163 = vshrl.u32 %v5162, 7
    %v5164 = vsub.s32 1, %v5163
    %v5165 = vrot.slane %v5084, %v5164
    %v5168 = vadd.f32 %v5155, %v5161
    %v5169 = vadd.f32 %v5156, %v5165
    %v5170 = vmax.f32 %v5168, 0.0
    %v5171 = vmax.f32 %v5169, 0.0
    %v5172 = vpack.c.bf16 %v5170, %v5170
    %v5173 = vpack.c.bf16 %v5171, %v5171
    %v5174 = vld [vmem:[%s22] sm:$0xf]
    %v5175 = vld [vmem:[%s22 + $0x4] sm:$0xf]
    %v5176 = vld [vmem:[%s22 + $0x8] sm:$0xf]
    %v5177 = vld [vmem:[%s22 + $0xc] sm:$0xf]
    %v5178 = vld [vmem:[%s22 + $0x10] sm:$0xf]
    %v5179 = vld [vmem:[%s22 + $0x14] sm:$0xf]
    %v5180 = vld [vmem:[%s22 + $0x18] sm:$0xf]
    %v5181 = vld [vmem:[%s22 + $0x1c] sm:$0xf]
    %v5182 = vld [vmem:[%s22 + $0x20] sm:$0xf]
    %v5183 = vld [vmem:[%s22 + $0x24] sm:$0xf]
    %v5184 = vld [vmem:[%s22 + $0x28] sm:$0xf]
    %v5185 = vld [vmem:[%s22 + $0x2c] sm:$0xf]
    %v5186 = vld [vmem:[%s22 + $0x30] sm:$0xf]
    %v5187 = vld [vmem:[%s22 + $0x34] sm:$0xf]
    %v5188 = vld [vmem:[%s22 + $0x38] sm:$0xf]
    %v5189 = vld [vmem:[%s22 + $0x3c] sm:$0xf]
    %v5190 = vld [vmem:[%s22 + $0x40] sm:$0xf]
    %v5191 = vld [vmem:[%s22 + $0x44] sm:$0xf]
    %v5192 = vld [vmem:[%s22 + $0x48] sm:$0xf]
    %v5193 = vld [vmem:[%s22 + $0x4c] sm:$0xf]
    %v5194 = vld [vmem:[%s22 + $0x50] sm:$0xf]
    %v5195 = vld [vmem:[%s22 + $0x54] sm:$0xf]
    %v5196 = vld [vmem:[%s22 + $0x58] sm:$0xf]
    %v5197 = vld [vmem:[%s22 + $0x5c] sm:$0xf]
    %v5198 = vld [vmem:[%s22 + $0x60] sm:$0xf]
    %v5199 = vld [vmem:[%s22 + $0x64] sm:$0xf]
    %v5200 = vld [vmem:[%s22 + $0x68] sm:$0xf]
    %v5201 = vld [vmem:[%s22 + $0x6c] sm:$0xf]
    %v5202 = vld [vmem:[%s22 + $0x70] sm:$0xf]
    %v5203 = vld [vmem:[%s22 + $0x74] sm:$0xf]
    %v5204 = vld [vmem:[%s22 + $0x78] sm:$0xf]
    %v5205 = vld [vmem:[%s22 + $0x7c] sm:$0xf]
    %v5206 = vld [vmem:[%s23] sm:$0x1]
    %v5208 = vlaneseq
    %v5209 = vshrl.u32 %v5208, 7
    %v5210 = vsub.s32 0, %v5209
    %v5211 = vrot.slane %v5206, %v5210
    %v5245 = vunpack.c.l.b16 %v5174
    %v5246 = vunpack.c.l.b16 %v5175
    %v5247 = vunpack.c.l.b16 %v5176
    %v5248 = vunpack.c.l.b16 %v5177
    %v5249 = vunpack.c.l.b16 %v5178
    %v5250 = vunpack.c.l.b16 %v5179
    %v5251 = vunpack.c.l.b16 %v5180
    %v5252 = vunpack.c.l.b16 %v5181
    %v5253 = vunpack.c.l.b16 %v5182
    %v5254 = vunpack.c.l.b16 %v5183
    %v5255 = vunpack.c.l.b16 %v5184
    %v5256 = vunpack.c.l.b16 %v5185
    %v5257 = vunpack.c.l.b16 %v5186
    %v5258 = vunpack.c.l.b16 %v5187
    %v5259 = vunpack.c.l.b16 %v5188
    %v5260 = vunpack.c.l.b16 %v5189
    %v5261 = vunpack.c.l.b16 %v5190
    %v5262 = vunpack.c.l.b16 %v5191
    %v5263 = vunpack.c.l.b16 %v5192
    %v5264 = vunpack.c.l.b16 %v5193
    %v5265 = vunpack.c.l.b16 %v5194
    %v5266 = vunpack.c.l.b16 %v5195
    %v5267 = vunpack.c.l.b16 %v5196
    %v5268 = vunpack.c.l.b16 %v5197
    %v5269 = vunpack.c.l.b16 %v5198
    %v5270 = vunpack.c.l.b16 %v5199
    %v5271 = vunpack.c.l.b16 %v5200
    %v5272 = vunpack.c.l.b16 %v5201
    %v5273 = vunpack.c.l.b16 %v5202
    %v5274 = vunpack.c.l.b16 %v5203
    %v5275 = vunpack.c.l.b16 %v5204
    %v5276 = vunpack.c.l.b16 %v5205
    %v5277 = vpack.c.b16 %v5246, %v5245
    %v5278 = vpack.c.b16 %v5248, %v5247
    %v5279 = vpack.c.b16 %v5250, %v5249
    %v5280 = vpack.c.b16 %v5252, %v5251
    %v5281 = vpack.c.b16 %v5254, %v5253
    %v5282 = vpack.c.b16 %v5256, %v5255
    %v5283 = vpack.c.b16 %v5258, %v5257
    %v5284 = vpack.c.b16 %v5260, %v5259
    %v5285 = vpack.c.b16 %v5262, %v5261
    %v5286 = vpack.c.b16 %v5264, %v5263
    %v5287 = vpack.c.b16 %v5266, %v5265
    %v5288 = vpack.c.b16 %v5268, %v5267
    %v5289 = vpack.c.b16 %v5270, %v5269
    %v5290 = vpack.c.b16 %v5272, %v5271
    %v5291 = vpack.c.b16 %v5274, %v5273
    %v5292 = vpack.c.b16 %v5276, %v5275
    %5309 = vmatprep.subr.bf16.mxu0 0
    %5310 = vmatpush1.bf16.msra.mxu0 %v5277
    %5311 = vmatprep.subr.bf16.mxu0 0
    %5312 = vmatpush1.bf16.msra.mxu0 %v5278
    %5313 = vmatprep.subr.bf16.mxu0 0
    %5314 = vmatpush1.bf16.msra.mxu0 %v5279
    %5315 = vmatprep.subr.bf16.mxu0 0
    %5316 = vmatpush1.bf16.msra.mxu0 %v5280
    %5317 = vmatprep.subr.bf16.mxu0 0
    %5318 = vmatpush1.bf16.msra.mxu0 %v5281
    %5319 = vmatprep.subr.bf16.mxu0 0
    %5320 = vmatpush1.bf16.msra.mxu0 %v5282
    %5321 = vmatprep.subr.bf16.mxu0 0
    %5322 = vmatpush1.bf16.msra.mxu0 %v5283
    %5323 = vmatprep.subr.bf16.mxu0 0
    %5324 = vmatpush1.bf16.msra.mxu0 %v5284
    %5325 = vmatprep.subr.bf16.mxu0 0
    %5326 = vmatpush1.bf16.msra.mxu0 %v5285
    %5327 = vmatprep.subr.bf16.mxu0 0
    %5328 = vmatpush1.bf16.msra.mxu0 %v5286
    %5329 = vmatprep.subr.bf16.mxu0 0
    %5330 = vmatpush1.bf16.msra.mxu0 %v5287
    %5331 = vmatprep.subr.bf16.mxu0 0
    %5332 = vmatpush1.bf16.msra.mxu0 %v5288
    %5333 = vmatprep.subr.bf16.mxu0 0
    %5334 = vmatpush1.bf16.msra.mxu0 %v5289
    %5335 = vmatprep.subr.bf16.mxu0 0
    %5336 = vmatpush1.bf16.msra.mxu0 %v5290
    %5337 = vmatprep.subr.bf16.mxu0 0
    %5338 = vmatpush1.bf16.msra.mxu0 %v5291
    %5339 = vmatprep.subr.bf16.mxu0 0
    %5340 = vmatpush1.bf16.msra.mxu0 %v5292
    %5341 = vmatprep.mubr.bf16.mxu0 %v5173
    %5342 = vmatmul.mubr.bf16.gmra.mrb[0].mxu0 %v5172
    %v5343 = vpop.f32.mrb[0].mxu0
    %v5344 = vadd.f32 %v5211, %v5343
    %v5345 = vpop.f32.mrb[0].mxu0
    %v5346 = vpop.f32.mrb[0].mxu0
    %v5347 = vpop.f32.mrb[0].mxu0
    %5348 = vdwg.mxu0
    %vm5349 = vcmask 123904
    %5350 = vst.msk [vmem:[#allocation9] sm:$0x3] %vm5349, %v5344
    %v5351 = vld [vmem:[%s1] sm:$0xf]
    %v5352 = vld [vmem:[%s1 + $0x4] sm:$0xf]
    %5354 = vset.pattern.permute.xlu0 0
    %5355 = vperm.xlu0 %5354, %v5344
    %v5356 = vpop.permute.xlu0 %5355
    %v5360 = vrot.slane %v5352, 7
    %v5361 = vsel %vm2800, %v5360, %v5351
    %v5363 = vmul.f32 %v5356, %v5361
    %5364 = vset.pattern.permute.xlu0 1
    %5365 = vperm.xlu0 %5364, %v5344
    %v5366 = vpop.permute.xlu0 %5365
    %v5368 = vrot.slane %v5351, 1
    %v5369 = vsel %vm2800, %v5352, %v5368
    %v5371 = vmul.f32 %v5366, %v5369
    %v5372 = vadd.f32 %v5363, %v5371
    %5373 = vset.pattern.permute.xlu0 2
    %5374 = vperm.xlu0 %5373, %v5344
    %v5375 = vpop.permute.xlu0 %5374
    %v5377 = vrot.slane %v5351, 2
    %v5378 = vrot.slane %v5352, 1
    %v5379 = vsel %vm2800, %v5378, %v5377
    %v5381 = vmul.f32 %v5375, %v5379
    %v5382 = vadd.f32 %v5372, %v5381
    %5383 = vset.pattern.permute.xlu0 3
    %5384 = vperm.xlu0 %5383, %v5344
    %v5385 = vpop.permute.xlu0 %5384
    %v5387 = vrot.slane %v5351, 3
    %v5388 = vrot.slane %v5352, 2
    %v5389 = vsel %vm2800, %v5388, %v5387
    %v5391 = vmul.f32 %v5385, %v5389
    %v5392 = vadd.f32 %v5382, %v5391
    %v5395 = vunpack.c.l.s4 1966171168
    %v5396 = vunpack.c.0.s8 %v5395
    %v5397 = vlaneseq
    %v5398 = vshrl.u32 %v5397, 7
    %v5399 = vsub.s32 %v5396, %v5398
    %v5400 = vrot.slane %v5392, %v5399
    %v5401 = vcombine.high %v5400, %v5400
    %v5403 = vunpack.c.l.s4 1966171168
    %v5404 = vunpack.c.0.s8 %v5403
    %v5405 = vlaneseq
    %v5406 = vshrl.u32 %v5405, 7
    %v5407 = vsub.s32 %v5404, %v5406
    %v5408 = vrot.slane %v5400, %v5407
    %v5410 = vunpack.c.l.s4 1966171168
    %v5411 = vunpack.c.0.s8 %v5410
    %v5412 = vlaneseq
    %v5413 = vshrl.u32 %v5412, 7
    %v5414 = vsub.s32 %v5411, %v5413
    %v5415 = vrot.slane %v5401, %v5414
    %vm5418 = vcmask 122880
    %5419 = vst.msk [vmem:[#allocation8] sm:$0x1] %vm5418, %v5408
    %5420 = vst.msk [vmem:[#allocation8 + $0x4] sm:$0x1] %vm5418, %v5415
    %5421 = vset.pattern.permute.xlu0 4
    %5422 = vperm.xlu0 %5421, %v5344
    %v5423 = vpop.permute.xlu0 %5422
    %v5425 = vmul.f32 %v5423, %v5361
    %5426 = vset.pattern.permute.xlu0 5
    %5427 = vperm.xlu0 %5426, %v5344
    %v5428 = vpop.permute.xlu0 %5427
    %v5430 = vmul.f32 %v5428, %v5369
    %v5431 = vadd.f32 %v5425, %v5430
    %5432 = vset.pattern.permute.xlu0 6
    %5433 = vperm.xlu0 %5432, %v5344
    %v5434 = vpop.permute.xlu0 %5433
    %v5436 = vmul.f32 %v5434, %v5379
    %v5437 = vadd.f32 %v5431, %v5436
    %5438 = vset.pattern.permute.xlu0 7
    %5439 = vperm.xlu0 %5438, %v5344
    %v5440 = vpop.permute.xlu0 %5439
    %v5442 = vmul.f32 %v5440, %v5389
    %v5443 = vadd.f32 %v5437, %v5442
    %v5446 = vunpack.c.l.s4 1966171168
    %v5447 = vunpack.c.0.s8 %v5446
    %v5448 = vlaneseq
    %v5449 = vshrl.u32 %v5448, 7
    %v5450 = vsub.s32 %v5447, %v5449
    %v5451 = vrot.slane %v5443, %v5450
    %v5452 = vcombine.high %v5451, %v5451
    %v5454 = vunpack.c.l.s4 1966171168
    %v5455 = vunpack.c.0.s8 %v5454
    %v5456 = vlaneseq
    %v5457 = vshrl.u32 %v5456, 7
    %v5458 = vsub.s32 %v5455, %v5457
    %v5459 = vrot.slane %v5451, %v5458
    %v5461 = vunpack.c.l.s4 1966171168
    %v5462 = vunpack.c.0.s8 %v5461
    %v5463 = vlaneseq
    %v5464 = vshrl.u32 %v5463, 7
    %v5465 = vsub.s32 %v5462, %v5464
    %v5466 = vrot.slane %v5452, %v5465
    %5469 = vst.msk [vmem:[#allocation8 + $0x1] sm:$0x1] %vm5418, %v5459
    %5470 = vst.msk [vmem:[#allocation8 + $0x5] sm:$0x1] %vm5418, %v5466
    %5471 = vset.pattern.permute.xlu0 8
    %5472 = vperm.xlu0 %5471, %v5344
    %v5473 = vpop.permute.xlu0 %5472
    %v5475 = vmul.f32 %v5473, %v5361
    %5476 = vset.pattern.permute.xlu0 9
    %5477 = vperm.xlu0 %5476, %v5344
    %v5478 = vpop.permute.xlu0 %5477
    %v5480 = vmul.f32 %v5478, %v5369
    %v5481 = vadd.f32 %v5475, %v5480
    %5482 = vset.pattern.permute.xlu0 10
    %5483 = vperm.xlu0 %5482, %v5344
    %v5484 = vpop.permute.xlu0 %5483
    %v5486 = vmul.f32 %v5484, %v5379
    %v5487 = vadd.f32 %v5481, %v5486
    %5488 = vset.pattern.permute.xlu0 11
    %5489 = vperm.xlu0 %5488, %v5344
    %v5490 = vpop.permute.xlu0 %5489
    %v5492 = vmul.f32 %v5490, %v5389
    %v5493 = vadd.f32 %v5487, %v5492
    %v5496 = vunpack.c.l.s4 1966171168
    %v5497 = vunpack.c.0.s8 %v5496
    %v5498 = vlaneseq
    %v5499 = vshrl.u32 %v5498, 7
    %v5500 = vsub.s32 %v5497, %v5499
    %v5501 = vrot.slane %v5493, %v5500
    %v5502 = vcombine.high %v5501, %v5501
    %v5504 = vunpack.c.l.s4 1966171168
    %v5505 = vunpack.c.0.s8 %v5504
    %v5506 = vlaneseq
    %v5507 = vshrl.u32 %v5506, 7
    %v5508 = vsub.s32 %v5505, %v5507
    %v5509 = vrot.slane %v5501, %v5508
    %v5511 = vunpack.c.l.s4 1966171168
    %v5512 = vunpack.c.0.s8 %v5511
    %v5513 = vlaneseq
    %v5514 = vshrl.u32 %v5513, 7
    %v5515 = vsub.s32 %v5512, %v5514
    %v5516 = vrot.slane %v5502, %v5515
    %5519 = vst.msk [vmem:[#allocation8 + $0x2] sm:$0x1] %vm5418, %v5509
    %5520 = vst.msk [vmem:[#allocation8 + $0x6] sm:$0x1] %vm5418, %v5516
    %5521 = vset.pattern.permute.xlu0 12
    %5522 = vperm.xlu0 %5521, %v5344
    %v5523 = vpop.permute.xlu0 %5522
    %v5525 = vmul.f32 %v5523, %v5361
    %5526 = vset.pattern.permute.xlu0 13
    %5527 = vperm.xlu0 %5526, %v5344
    %v5528 = vpop.permute.xlu0 %5527
    %v5530 = vmul.f32 %v5528, %v5369
    %v5531 = vadd.f32 %v5525, %v5530
    %5532 = vset.pattern.permute.xlu0 14
    %5533 = vperm.xlu0 %5532, %v5344
    %v5534 = vpop.permute.xlu0 %5533
    %v5536 = vmul.f32 %v5534, %v5379
    %v5537 = vadd.f32 %v5531, %v5536
    %5538 = vset.pattern.permute.xlu0 15
    %5539 = vperm.xlu0 %5538, %v5344
    %v5540 = vpop.permute.xlu0 %5539
    %v5542 = vmul.f32 %v5540, %v5389
    %v5543 = vadd.f32 %v5537, %v5542
    %v5546 = vunpack.c.l.s4 1966171168
    %v5547 = vunpack.c.0.s8 %v5546
    %v5548 = vlaneseq
    %v5549 = vshrl.u32 %v5548, 7
    %v5550 = vsub.s32 %v5547, %v5549
    %v5551 = vrot.slane %v5543, %v5550
    %v5552 = vcombine.high %v5551, %v5551
    %v5554 = vunpack.c.l.s4 1966171168
    %v5555 = vunpack.c.0.s8 %v5554
    %v5556 = vlaneseq
    %v5557 = vshrl.u32 %v5556, 7
    %v5558 = vsub.s32 %v5555, %v5557
    %v5559 = vrot.slane %v5551, %v5558
    %v5561 = vunpack.c.l.s4 1966171168
    %v5562 = vunpack.c.0.s8 %v5561
    %v5563 = vlaneseq
    %v5564 = vshrl.u32 %v5563, 7
    %v5565 = vsub.s32 %v5562, %v5564
    %v5566 = vrot.slane %v5552, %v5565
    %5569 = vst.msk [vmem:[#allocation8 + $0x3] sm:$0x1] %vm5418, %v5559
    %5570 = vst.msk [vmem:[#allocation8 + $0x7] sm:$0x1] %vm5418, %v5566
    // Predicated region
    $region110: #{tpu_custom_call.1} parent=1 // pred_check
      _
    $region111: #{tpu_custom_call.1} parent=1 // pred_check_branch
      %5572 = sbr.rel (0) target = $region113
    $region112: #{tpu_custom_call.1} parent=1 // pred_region
      %s5574 = ssub.s32 128, 128
      %5575 = vsyncadd [#allocation4], %s5574
      %s5576 = sshll.u32 [#allocation8], 4
      %s5577 = int_to_ptr.vmem [resolvable:$true] %s5576
      %5582 = dma.vmem_to_hbm [thread:$0]  %s5577, 128, %s24, [#allocation4], 64, 64, 4
    $region113: #{tpu_custom_call.1} parent=1 // pred_fallthru
      _
    // Predicated region
    $region114: #{tpu_custom_call.1} parent=1 // pred_check
      _
    $region115: #{tpu_custom_call.1} parent=1 // pred_check_branch
      %5584 = sbr.rel (0) target = $region117
    $region116: #{tpu_custom_call.1} parent=1 // pred_region
      %s5586 = ssub.s32 32, 32
      %5587 = vsyncadd [#allocation10], %s5586
      %s5589 = sshll.u32 [#allocation9], 4
      %s5590 = int_to_ptr.vmem [resolvable:$true] %s5589
      %5592 = dma.vmem_to_hbm [thread:$0]  %s5590, 32, %s25, [#allocation10]
    $region117: #{tpu_custom_call.1} parent=1 // pred_fallthru
      _
    // Predicated region
    $region118: #{tpu_custom_call.1} parent=1 // pred_check
      _
    $region119: #{tpu_custom_call.1} parent=1 // pred_check_branch
      %5594 = sbr.rel (0) target = $region121
    $region120: #{tpu_custom_call.1} parent=1 // pred_region
      %5595 = dma.done [#allocation4], 128
    $region121: #{tpu_custom_call.1} parent=1 // pred_fallthru
      _
    // Predicated region
    $region122: #{tpu_custom_call.1} parent=1 // pred_check
      _
    $region123: #{tpu_custom_call.1} parent=1 // pred_check_branch
      %5597 = sbr.rel (0) target = $region125
    $region124: #{tpu_custom_call.1} parent=1 // pred_region
      %5598 = dma.done [#allocation10], 32
    $region125: #{tpu_custom_call.1} parent=1 // pred_fallthru
      _
    %5599 = vsyncpa [#allocation3], 1
    %5600 = vsyncpa [#allocation6], 1
    %5601 = vsyncpa [#allocation4], 1
    %5602 = vsyncpa [#allocation10], 1

</llo_original>
